<compile_context>
chip_gen: v5e
topology: v5e:2x2
jax: 0.10.0
libtpu: 0.0.40
codegen_flags: <defaults>
</compile_context>

<pallas_src>
import functools
import math

import jax
import jax.numpy as jnp
from jax import lax
from jax.experimental import pallas as pl
from jax.experimental.pallas import tpu as pltpu


# ----------------------------- in-kernel helpers ---------------------------

def _dense(x, w_bf16, b_f32, activation=None):
    """x [N, Din] f32 -> [N, Dout] f32.  bf16 MXU matmul, f32 accumulate."""
    y = jnp.dot(x.astype(jnp.bfloat16), w_bf16,
                preferred_element_type=jnp.float32) + b_f32
    if activation == "relu":
        y = jnp.maximum(y, 0.0)
    return y


def _layer_norm(x, g, b, eps):
    mu = jnp.mean(x, axis=-1, keepdims=True)
    xc = x - mu
    var = jnp.mean(xc * xc, axis=-1, keepdims=True)
    return xc * lax.rsqrt(var + eps) * g + b


def _attention(q, k, v, bias, attn_buf, n_heads, scale):
    """q [Sq,D], k/v [Sk,D] (f32). bias: additive [1,Sk] or None."""
    d = q.shape[-1]
    dh = d // n_heads
    for h in range(n_heads):
        lo = h * dh
        qh = q[:, lo:lo + dh].astype(jnp.bfloat16)
        kh = k[:, lo:lo + dh].astype(jnp.bfloat16)
        vh = v[:, lo:lo + dh].astype(jnp.bfloat16)
        # contract the head dim of both operands directly (no explicit k.T)
        s = lax.dot_general(qh, kh, (((1,), (1,)), ((), ())),
                            preferred_element_type=jnp.float32) * scale
        if bias is not None:
            s = s + bias
        s = s - jnp.max(s, axis=-1, keepdims=True)
        p = jnp.exp(s)
        p = p * pl.reciprocal(jnp.sum(p, axis=-1, keepdims=True), approx=True)
        oh = jnp.dot(p.astype(jnp.bfloat16), vh,
                     preferred_element_type=jnp.float32)
        attn_buf[:, lo:lo + dh] = oh
    return attn_buf[...]


# ------------------------------- fused kernel ------------------------------

def _encoder_kernel(src_ref, bert_ref, mask_ref,
                    wqkv_s_ref, bqkv_s_ref, wo_s_ref, bo_s_ref,
                    wq_c_ref, bq_c_ref, wkv_c_ref, bkv_c_ref,
                    wo_c_ref, bo_c_ref,
                    w1_ref, b1_ref, w2_ref, b2_ref,
                    ln1g_ref, ln1b_ref, ln2g_ref, ln2b_ref,
                    ln3g_ref, ln3b_ref,
                    o_ref, attn_buf,
                    *, n_layers, n_heads, eps):
    x = src_ref[0]                       # [S,  D]  f32
    bert = bert_ref[0]                   # [Sb, D]  f32
    # additive mask bias: 0 where attend, -1e9 where padded  (computed
    # in-kernel so the wrapper does no extra elementwise work)
    self_bias = (1.0 - mask_ref[0].astype(jnp.float32)) * -1e9   # [1, S]
    d = x.shape[-1]
    dh = d // n_heads
    scale = 1.0 / math.sqrt(dh)

    # Hoist weight loads (shared across all layers; loaded HBM->VMEM once by
    # the constant-index BlockSpecs).
    wqkv_s, bqkv_s = wqkv_s_ref[...], bqkv_s_ref[...]
    wo_s, bo_s = wo_s_ref[...], bo_s_ref[...]
    wq_c, bq_c = wq_c_ref[...], bq_c_ref[...]
    wkv_c, bkv_c = wkv_c_ref[...], bkv_c_ref[...]
    wo_c, bo_c = wo_c_ref[...], bo_c_ref[...]
    w1, b1 = w1_ref[...], b1_ref[...]
    w2, b2 = w2_ref[...], b2_ref[...]
    ln1g, ln1b = ln1g_ref[...], ln1b_ref[...]
    ln2g, ln2b = ln2g_ref[...], ln2b_ref[...]
    ln3g, ln3b = ln3g_ref[...], ln3b_ref[...]

    # Cross-attention K/V depend only on bert_out and the shared weights:
    # identical every layer -> compute once, hoisted out of the layer loop.
    kv_c = _dense(bert, wkv_c, bkv_c)    # [Sb, 2D]
    k_c = kv_c[:, :d]
    v_c = kv_c[:, d:]

    for _ in range(n_layers):            # shared-weight layer, applied n times
        # --- self attention + residual + LN ---
        qkv = _dense(x, wqkv_s, bqkv_s)  # fused QKV: [S, 3D]
        a = _attention(qkv[:, :d], qkv[:, d:2 * d], qkv[:, 2 * d:],
                       self_bias, attn_buf, n_heads, scale)
        a = _dense(a, wo_s, bo_s)
        x = _layer_norm(a + x, ln1g, ln1b, eps)

        # --- cross attention to bert_out + residual + LN (bert unmasked) ---
        q_c = _dense(x, wq_c, bq_c)
        c = _attention(q_c, k_c, v_c, None, attn_buf, n_heads, scale)
        c = _dense(c, wo_c, bo_c)
        x = _layer_norm(c + x, ln2g, ln2b, eps)

        # --- position-wise FFN + residual + LN ---
        h = _dense(x, w1, b1, activation="relu")
        f = _dense(h, w2, b2)
        x = _layer_norm(f + x, ln3g, ln3b, eps)

    o_ref[0] = x.astype(o_ref.dtype)


# --------------------------------- wrapper ----------------------------------

def encoder_forward(src, bert_out, src_mask, params, n_layers, n_heads):
    B, S, D = src.shape
    Sb = bert_out.shape[1]
    eps = 1e-5

    # mask passed through untouched (reshape is metadata-only); bias computed
    # inside the kernel.
    mask = src_mask.reshape(B, 1, S)

    def mat(x):                      # bf16 weights for the MXU (f32 accumulate)
        return x.astype(jnp.bfloat16)

    def vec(x):                      # row-vector f32 (biases / LN params)
        return x.reshape(1, -1).astype(jnp.float32)

    weights = [
        mat(params["self"]["Wqkv"]), vec(params["self"]["bqkv"]),
        mat(params["self"]["Wo"]),   vec(params["self"]["bo"]),
        mat(params["cross"]["Wq"]),  vec(params["cross"]["bq"]),
        mat(params["cross"]["Wkv"]), vec(params["cross"]["bkv"]),
        mat(params["cross"]["Wo"]),  vec(params["cross"]["bo"]),
        mat(params["W1"]), vec(params["b1"]),
        mat(params["W2"]), vec(params["b2"]),
        vec(params["ln1_g"]), vec(params["ln1_b"]),
        vec(params["ln2_g"]), vec(params["ln2_b"]),
        vec(params["ln3_g"]), vec(params["ln3_b"]),
    ]

    def replicated(arr):             # full-array block, same for every program
        rank = arr.ndim
        return pl.BlockSpec(arr.shape, lambda b, _r=rank: (0,) * _r)

    in_specs = [
        pl.BlockSpec((1, S, D), lambda b: (b, 0, 0)),    # src
        pl.BlockSpec((1, Sb, D), lambda b: (b, 0, 0)),   # bert_out
        pl.BlockSpec((1, 1, S), lambda b: (b, 0, 0)),    # src_mask
    ] + [replicated(w) for w in weights]

    kernel = functools.partial(_encoder_kernel, n_layers=n_layers,
                               n_heads=n_heads, eps=eps)

    return pl.pallas_call(
        kernel,
        out_shape=jax.ShapeDtypeStruct((B, S, D), src.dtype),
        grid=(B,),
        in_specs=in_specs,
        out_specs=pl.BlockSpec((1, S, D), lambda b: (b, 0, 0)),
        scratch_shapes=[pltpu.VMEM((S, D), jnp.float32)],
        compiler_params=pltpu.CompilerParams(
            dimension_semantics=("parallel",)),
    )(src, bert_out, mask, *weights)


# ------------------------------- parameters ---------------------------------

def init_params(key, d_model, d_ff):
    ks = iter(jax.random.split(key, 16))

    def w(shape):
        return jax.random.normal(next(ks), shape, jnp.float32) * 0.02

    return {
        "self": {
            "Wqkv": w((d_model, 3 * d_model)),
            "bqkv": jnp.zeros((3 * d_model,), jnp.float32),
            "Wo": w((d_model, d_model)),
            "bo": jnp.zeros((d_model,), jnp.float32),
        },
        "cross": {
            "Wq": w((d_model, d_model)),
            "bq": jnp.zeros((d_model,), jnp.float32),
            "Wkv": w((d_model, 2 * d_model)),
            "bkv": jnp.zeros((2 * d_model,), jnp.float32),
            "Wo": w((d_model, d_model)),
            "bo": jnp.zeros((d_model,), jnp.float32),
        },
        "W1": w((d_model, d_ff)), "b1": jnp.zeros((d_ff,), jnp.float32),
        "W2": w((d_ff, d_model)), "b2": jnp.zeros((d_model,), jnp.float32),
        "ln1_g": jnp.ones((d_model,), jnp.float32),
        "ln1_b": jnp.zeros((d_model,), jnp.float32),
        "ln2_g": jnp.ones((d_model,), jnp.float32),
        "ln2_b": jnp.zeros((d_model,), jnp.float32),
        "ln3_g": jnp.ones((d_model,), jnp.float32),
        "ln3_b": jnp.zeros((d_model,), jnp.float32),
    }


if __name__ == "__main__":
    B, S, S_BERT, D, H, D_FF, N_LAYERS = 2, 8, 8, 32, 4, 64, 2

    key = jax.random.PRNGKey(0)
    k_src, k_bert, k_param = jax.random.split(key, 3)

    src = jax.random.normal(k_src, (B, S, D), jnp.float32)
    bert_out = jax.random.normal(k_bert, (B, S_BERT, D), jnp.float32)
    # mask: 1 = attend, 0 = padded (last two positions of batch 1 padded)
    src_mask = jnp.array([[1] * S, [1] * (S - 2) + [0, 0]], dtype=jnp.int32)

    params = init_params(k_param, D, D_FF)

    fwd = jax.jit(functools.partial(encoder_forward,
                                    n_layers=N_LAYERS, n_heads=H))
    out = fwd(src, bert_out, src_mask, params)
    jax.block_until_ready(out)

    assert out.shape == (B, S, D) and out.dtype == jnp.float32
    assert bool(jnp.all(jnp.isfinite(out)))
    print("KERNEL_OK")
</pallas_src>

<mosaic_0001>
module attributes {stable_mosaic.version = 11 : i64} {
  func.func @_encoder_kernel(%arg0: i32, %arg1: memref<1x8x32xf32, #tpu.memory_space<vmem>>, %arg2: memref<1x8x32xf32, #tpu.memory_space<vmem>>, %arg3: memref<1x1x8xi32, #tpu.memory_space<vmem>>, %arg4: memref<32x96xbf16, #tpu.memory_space<vmem>>, %arg5: memref<1x96xf32, #tpu.memory_space<vmem>>, %arg6: memref<32x32xbf16, #tpu.memory_space<vmem>>, %arg7: memref<1x32xf32, #tpu.memory_space<vmem>>, %arg8: memref<32x32xbf16, #tpu.memory_space<vmem>>, %arg9: memref<1x32xf32, #tpu.memory_space<vmem>>, %arg10: memref<32x64xbf16, #tpu.memory_space<vmem>>, %arg11: memref<1x64xf32, #tpu.memory_space<vmem>>, %arg12: memref<32x32xbf16, #tpu.memory_space<vmem>>, %arg13: memref<1x32xf32, #tpu.memory_space<vmem>>, %arg14: memref<32x64xbf16, #tpu.memory_space<vmem>>, %arg15: memref<1x64xf32, #tpu.memory_space<vmem>>, %arg16: memref<64x32xbf16, #tpu.memory_space<vmem>>, %arg17: memref<1x32xf32, #tpu.memory_space<vmem>>, %arg18: memref<1x32xf32, #tpu.memory_space<vmem>>, %arg19: memref<1x32xf32, #tpu.memory_space<vmem>>, %arg20: memref<1x32xf32, #tpu.memory_space<vmem>>, %arg21: memref<1x32xf32, #tpu.memory_space<vmem>>, %arg22: memref<1x32xf32, #tpu.memory_space<vmem>>, %arg23: memref<1x32xf32, #tpu.memory_space<vmem>>, %arg24: memref<1x8x32xf32, #tpu.memory_space<vmem>>, %arg25: memref<8x32xf32, #tpu.memory_space<vmem>>) attributes {dimension_semantics = [#tpu.dimension_semantics<parallel>], iteration_bounds = array<i64: 2>, scalar_prefetch = 0 : i64, scratch_operands = 1 : i64, tpu.core_type = #tpu.core_type<tc>, window_params = [{transform_indices = @transform_0, window_bounds = array<i64: 1, 8, 32>}, {transform_indices = @transform_1, window_bounds = array<i64: 1, 8, 32>}, {transform_indices = @transform_2, window_bounds = array<i64: 1, 1, 8>}, {pipeline_mode = #tpu.pipeline_mode<synchronous>, transform_indices = @transform_3, window_bounds = array<i64: 32, 96>}, {pipeline_mode = #tpu.pipeline_mode<synchronous>, transform_indices = @transform_4, window_bounds = array<i64: 1, 96>}, {pipeline_mode = #tpu.pipeline_mode<synchronous>, transform_indices = @transform_5, window_bounds = array<i64: 32, 32>}, {pipeline_mode = #tpu.pipeline_mode<synchronous>, transform_indices = @transform_6, window_bounds = array<i64: 1, 32>}, {pipeline_mode = #tpu.pipeline_mode<synchronous>, transform_indices = @transform_7, window_bounds = array<i64: 32, 32>}, {pipeline_mode = #tpu.pipeline_mode<synchronous>, transform_indices = @transform_8, window_bounds = array<i64: 1, 32>}, {pipeline_mode = #tpu.pipeline_mode<synchronous>, transform_indices = @transform_9, window_bounds = array<i64: 32, 64>}, {pipeline_mode = #tpu.pipeline_mode<synchronous>, transform_indices = @transform_10, window_bounds = array<i64: 1, 64>}, {pipeline_mode = #tpu.pipeline_mode<synchronous>, transform_indices = @transform_11, window_bounds = array<i64: 32, 32>}, {pipeline_mode = #tpu.pipeline_mode<synchronous>, transform_indices = @transform_12, window_bounds = array<i64: 1, 32>}, {pipeline_mode = #tpu.pipeline_mode<synchronous>, transform_indices = @transform_13, window_bounds = array<i64: 32, 64>}, {pipeline_mode = #tpu.pipeline_mode<synchronous>, transform_indices = @transform_14, window_bounds = array<i64: 1, 64>}, {pipeline_mode = #tpu.pipeline_mode<synchronous>, transform_indices = @transform_15, window_bounds = array<i64: 64, 32>}, {pipeline_mode = #tpu.pipeline_mode<synchronous>, transform_indices = @transform_16, window_bounds = array<i64: 1, 32>}, {pipeline_mode = #tpu.pipeline_mode<synchronous>, transform_indices = @transform_17, window_bounds = array<i64: 1, 32>}, {pipeline_mode = #tpu.pipeline_mode<synchronous>, transform_indices = @transform_18, window_bounds = array<i64: 1, 32>}, {pipeline_mode = #tpu.pipeline_mode<synchronous>, transform_indices = @transform_19, window_bounds = array<i64: 1, 32>}, {pipeline_mode = #tpu.pipeline_mode<synchronous>, transform_indices = @transform_20, window_bounds = array<i64: 1, 32>}, {pipeline_mode = #tpu.pipeline_mode<synchronous>, transform_indices = @transform_21, window_bounds = array<i64: 1, 32>}, {pipeline_mode = #tpu.pipeline_mode<synchronous>, transform_indices = @transform_22, window_bounds = array<i64: 1, 32>}, {transform_indices = @transform_23, window_bounds = array<i64: 1, 8, 32>}]} {
    %c0 = arith.constant 0 : index
    %c0_0 = arith.constant 0 : index
    %c0_1 = arith.constant 0 : index
    %0 = vector.load %arg1[%c0, %c0_0, %c0_1] : memref<1x8x32xf32, #tpu.memory_space<vmem>>, vector<1x8x32xf32>
    %1 = vector.shape_cast %0 : vector<1x8x32xf32> to vector<8x32xf32>
    %c0_2 = arith.constant 0 : index
    %c0_3 = arith.constant 0 : index
    %c0_4 = arith.constant 0 : index
    %2 = vector.load %arg2[%c0_2, %c0_3, %c0_4] : memref<1x8x32xf32, #tpu.memory_space<vmem>>, vector<1x8x32xf32>
    %3 = vector.shape_cast %2 : vector<1x8x32xf32> to vector<8x32xf32>
    %c0_5 = arith.constant 0 : index
    %c0_6 = arith.constant 0 : index
    %c0_7 = arith.constant 0 : index
    %4 = vector.load %arg3[%c0_5, %c0_6, %c0_7] : memref<1x1x8xi32, #tpu.memory_space<vmem>>, vector<1x1x8xi32>
    %5 = vector.shape_cast %4 : vector<1x1x8xi32> to vector<1x8xi32>
    %6 = arith.sitofp %5 : vector<1x8xi32> to vector<1x8xf32>
    %cst = arith.constant 1.000000e+00 : f32
    %7 = vector.broadcast %cst : f32 to vector<1x8xf32>
    %8 = arith.subf %7, %6 : vector<1x8xf32>
    %cst_8 = arith.constant -1.000000e+09 : f32
    %9 = vector.broadcast %cst_8 : f32 to vector<1x8xf32>
    %10 = arith.mulf %8, %9 : vector<1x8xf32>
    %c0_9 = arith.constant 0 : index
    %c0_10 = arith.constant 0 : index
    %11 = vector.load %arg4[%c0_9, %c0_10] : memref<32x96xbf16, #tpu.memory_space<vmem>>, vector<32x96xbf16>
    %c0_11 = arith.constant 0 : index
    %c0_12 = arith.constant 0 : index
    %12 = vector.load %arg5[%c0_11, %c0_12] : memref<1x96xf32, #tpu.memory_space<vmem>>, vector<1x96xf32>
    %c0_13 = arith.constant 0 : index
    %c0_14 = arith.constant 0 : index
    %13 = vector.load %arg6[%c0_13, %c0_14] : memref<32x32xbf16, #tpu.memory_space<vmem>>, vector<32x32xbf16>
    %c0_15 = arith.constant 0 : index
    %c0_16 = arith.constant 0 : index
    %14 = vector.load %arg7[%c0_15, %c0_16] : memref<1x32xf32, #tpu.memory_space<vmem>>, vector<1x32xf32>
    %c0_17 = arith.constant 0 : index
    %c0_18 = arith.constant 0 : index
    %15 = vector.load %arg8[%c0_17, %c0_18] : memref<32x32xbf16, #tpu.memory_space<vmem>>, vector<32x32xbf16>
    %c0_19 = arith.constant 0 : index
    %c0_20 = arith.constant 0 : index
    %16 = vector.load %arg9[%c0_19, %c0_20] : memref<1x32xf32, #tpu.memory_space<vmem>>, vector<1x32xf32>
    %c0_21 = arith.constant 0 : index
    %c0_22 = arith.constant 0 : index
    %17 = vector.load %arg10[%c0_21, %c0_22] : memref<32x64xbf16, #tpu.memory_space<vmem>>, vector<32x64xbf16>
    %c0_23 = arith.constant 0 : index
    %c0_24 = arith.constant 0 : index
    %18 = vector.load %arg11[%c0_23, %c0_24] : memref<1x64xf32, #tpu.memory_space<vmem>>, vector<1x64xf32>
    %c0_25 = arith.constant 0 : index
    %c0_26 = arith.constant 0 : index
    %19 = vector.load %arg12[%c0_25, %c0_26] : memref<32x32xbf16, #tpu.memory_space<vmem>>, vector<32x32xbf16>
    %c0_27 = arith.constant 0 : index
    %c0_28 = arith.constant 0 : index
    %20 = vector.load %arg13[%c0_27, %c0_28] : memref<1x32xf32, #tpu.memory_space<vmem>>, vector<1x32xf32>
    %c0_29 = arith.constant 0 : index
    %c0_30 = arith.constant 0 : index
    %21 = vector.load %arg14[%c0_29, %c0_30] : memref<32x64xbf16, #tpu.memory_space<vmem>>, vector<32x64xbf16>
    %c0_31 = arith.constant 0 : index
    %c0_32 = arith.constant 0 : index
    %22 = vector.load %arg15[%c0_31, %c0_32] : memref<1x64xf32, #tpu.memory_space<vmem>>, vector<1x64xf32>
    %c0_33 = arith.constant 0 : index
    %c0_34 = arith.constant 0 : index
    %23 = vector.load %arg16[%c0_33, %c0_34] : memref<64x32xbf16, #tpu.memory_space<vmem>>, vector<64x32xbf16>
    %c0_35 = arith.constant 0 : index
    %c0_36 = arith.constant 0 : index
    %24 = vector.load %arg17[%c0_35, %c0_36] : memref<1x32xf32, #tpu.memory_space<vmem>>, vector<1x32xf32>
    %c0_37 = arith.constant 0 : index
    %c0_38 = arith.constant 0 : index
    %25 = vector.load %arg18[%c0_37, %c0_38] : memref<1x32xf32, #tpu.memory_space<vmem>>, vector<1x32xf32>
    %c0_39 = arith.constant 0 : index
    %c0_40 = arith.constant 0 : index
    %26 = vector.load %arg19[%c0_39, %c0_40] : memref<1x32xf32, #tpu.memory_space<vmem>>, vector<1x32xf32>
    %c0_41 = arith.constant 0 : index
    %c0_42 = arith.constant 0 : index
    %27 = vector.load %arg20[%c0_41, %c0_42] : memref<1x32xf32, #tpu.memory_space<vmem>>, vector<1x32xf32>
    %c0_43 = arith.constant 0 : index
    %c0_44 = arith.constant 0 : index
    %28 = vector.load %arg21[%c0_43, %c0_44] : memref<1x32xf32, #tpu.memory_space<vmem>>, vector<1x32xf32>
    %c0_45 = arith.constant 0 : index
    %c0_46 = arith.constant 0 : index
    %29 = vector.load %arg22[%c0_45, %c0_46] : memref<1x32xf32, #tpu.memory_space<vmem>>, vector<1x32xf32>
    %c0_47 = arith.constant 0 : index
    %c0_48 = arith.constant 0 : index
    %30 = vector.load %arg23[%c0_47, %c0_48] : memref<1x32xf32, #tpu.memory_space<vmem>>, vector<1x32xf32>
    %31 = arith.truncf %3 : vector<8x32xf32> to vector<8x32xbf16>
    %cst_49 = arith.constant dense<0.000000e+00> : vector<8x64xf32>
    %32 = tpu.matmul %31, %17, %cst_49 {dimension_numbers = #tpu.dot_dimension_numbers<[1], [0], [0], [1], [0, 0, 1, 1], [], []>} : vector<8x32xbf16>, vector<32x64xbf16>, vector<8x64xf32> -> vector<8x64xf32>
    %33 = vector.broadcast %18 : vector<1x64xf32> to vector<8x64xf32>
    %34 = arith.addf %32, %33 : vector<8x64xf32>
    %35 = vector.extract_strided_slice %34 {offsets = [0, 0], sizes = [8, 32], strides = [1, 1]} : vector<8x64xf32> to vector<8x32xf32>
    %36 = vector.extract_strided_slice %34 {offsets = [0, 32], sizes = [8, 32], strides = [1, 1]} : vector<8x64xf32> to vector<8x32xf32>
    %37 = arith.truncf %1 : vector<8x32xf32> to vector<8x32xbf16>
    %cst_50 = arith.constant dense<0.000000e+00> : vector<8x96xf32>
    %38 = tpu.matmul %37, %11, %cst_50 {dimension_numbers = #tpu.dot_dimension_numbers<[1], [0], [0], [1], [0, 0, 1, 1], [], []>} : vector<8x32xbf16>, vector<32x96xbf16>, vector<8x96xf32> -> vector<8x96xf32>
    %39 = vector.broadcast %12 : vector<1x96xf32> to vector<8x96xf32>
    %40 = arith.addf %38, %39 : vector<8x96xf32>
    %41 = vector.extract_strided_slice %40 {offsets = [0, 0], sizes = [8, 32], strides = [1, 1]} : vector<8x96xf32> to vector<8x32xf32>
    %42 = vector.extract_strided_slice %40 {offsets = [0, 32], sizes = [8, 32], strides = [1, 1]} : vector<8x96xf32> to vector<8x32xf32>
    %43 = vector.extract_strided_slice %40 {offsets = [0, 64], sizes = [8, 32], strides = [1, 1]} : vector<8x96xf32> to vector<8x32xf32>
    %44 = vector.extract_strided_slice %41 {offsets = [0, 0], sizes = [8, 8], strides = [1, 1]} : vector<8x32xf32> to vector<8x8xf32>
    %45 = arith.truncf %44 : vector<8x8xf32> to vector<8x8xbf16>
    %46 = vector.extract_strided_slice %42 {offsets = [0, 0], sizes = [8, 8], strides = [1, 1]} : vector<8x32xf32> to vector<8x8xf32>
    %47 = arith.truncf %46 : vector<8x8xf32> to vector<8x8xbf16>
    %48 = vector.extract_strided_slice %43 {offsets = [0, 0], sizes = [8, 8], strides = [1, 1]} : vector<8x32xf32> to vector<8x8xf32>
    %49 = arith.truncf %48 : vector<8x8xf32> to vector<8x8xbf16>
    %cst_51 = arith.constant dense<0.000000e+00> : vector<8x8xf32>
    %50 = tpu.matmul %45, %47, %cst_51 {dimension_numbers = #tpu.dot_dimension_numbers<[1], [1], [0], [0], [0, 0, 1, 0], [], []>} : vector<8x8xbf16>, vector<8x8xbf16>, vector<8x8xf32> -> vector<8x8xf32>
    %cst_52 = arith.constant 0.353553385 : f32
    %51 = vector.broadcast %cst_52 : f32 to vector<8x8xf32>
    %52 = arith.mulf %50, %51 : vector<8x8xf32>
    %53 = vector.broadcast %10 : vector<1x8xf32> to vector<8x8xf32>
    %54 = arith.addf %52, %53 : vector<8x8xf32>
    %cst_53 = arith.constant dense<0xFF800000> : vector<8xf32>
    %55 = vector.multi_reduction <maximumf>, %54, %cst_53 [1] : vector<8x8xf32> to vector<8xf32>
    %56 = vector.shape_cast %55 : vector<8xf32> to vector<8x1xf32>
    %57 = vector.broadcast %56 : vector<8x1xf32> to vector<8x8xf32>
    %58 = arith.subf %54, %57 : vector<8x8xf32>
    %59 = math.exp %58 : vector<8x8xf32>
    %cst_54 = arith.constant dense<0.000000e+00> : vector<8xf32>
    %60 = vector.multi_reduction <add>, %59, %cst_54 [1] : vector<8x8xf32> to vector<8xf32>
    %61 = vector.shape_cast %60 : vector<8xf32> to vector<8x1xf32>
    %62 = tpu.reciprocal %61 {approx = true} : vector<8x1xf32> -> vector<8x1xf32>
    %63 = vector.broadcast %62 : vector<8x1xf32> to vector<8x8xf32>
    %64 = arith.mulf %59, %63 : vector<8x8xf32>
    %65 = arith.truncf %64 : vector<8x8xf32> to vector<8x8xbf16>
    %cst_55 = arith.constant dense<0.000000e+00> : vector<8x8xf32>
    %66 = tpu.matmul %65, %49, %cst_55 {dimension_numbers = #tpu.dot_dimension_numbers<[1], [0], [0], [1], [0, 0, 1, 1], [], []>} : vector<8x8xbf16>, vector<8x8xbf16>, vector<8x8xf32> -> vector<8x8xf32>
    %c0_56 = arith.constant 0 : index
    %c0_57 = arith.constant 0 : index
    %67 = vector.load %arg25[%c0_56, %c0_57] : memref<8x32xf32, #tpu.memory_space<vmem>>, vector<8x8xf32>
    tpu.vector_store %arg25[%c0_56, %c0_57], %66 {strides = array<i32>} : memref<8x32xf32, #tpu.memory_space<vmem>>, vector<8x8xf32>,
    %68 = vector.extract_strided_slice %41 {offsets = [0, 8], sizes = [8, 8], strides = [1, 1]} : vector<8x32xf32> to vector<8x8xf32>
    %69 = arith.truncf %68 : vector<8x8xf32> to vector<8x8xbf16>
    %70 = vector.extract_strided_slice %42 {offsets = [0, 8], sizes = [8, 8], strides = [1, 1]} : vector<8x32xf32> to vector<8x8xf32>
    %71 = arith.truncf %70 : vector<8x8xf32> to vector<8x8xbf16>
    %72 = vector.extract_strided_slice %43 {offsets = [0, 8], sizes = [8, 8], strides = [1, 1]} : vector<8x32xf32> to vector<8x8xf32>
    %73 = arith.truncf %72 : vector<8x8xf32> to vector<8x8xbf16>
    %cst_58 = arith.constant dense<0.000000e+00> : vector<8x8xf32>
    %74 = tpu.matmul %69, %71, %cst_58 {dimension_numbers = #tpu.dot_dimension_numbers<[1], [1], [0], [0], [0, 0, 1, 0], [], []>} : vector<8x8xbf16>, vector<8x8xbf16>, vector<8x8xf32> -> vector<8x8xf32>
    %cst_59 = arith.constant 0.353553385 : f32
    %75 = vector.broadcast %cst_59 : f32 to vector<8x8xf32>
    %76 = arith.mulf %74, %75 : vector<8x8xf32>
    %77 = vector.broadcast %10 : vector<1x8xf32> to vector<8x8xf32>
    %78 = arith.addf %76, %77 : vector<8x8xf32>
    %cst_60 = arith.constant dense<0xFF800000> : vector<8xf32>
    %79 = vector.multi_reduction <maximumf>, %78, %cst_60 [1] : vector<8x8xf32> to vector<8xf32>
    %80 = vector.shape_cast %79 : vector<8xf32> to vector<8x1xf32>
    %81 = vector.broadcast %80 : vector<8x1xf32> to vector<8x8xf32>
    %82 = arith.subf %78, %81 : vector<8x8xf32>
    %83 = math.exp %82 : vector<8x8xf32>
    %cst_61 = arith.constant dense<0.000000e+00> : vector<8xf32>
    %84 = vector.multi_reduction <add>, %83, %cst_61 [1] : vector<8x8xf32> to vector<8xf32>
    %85 = vector.shape_cast %84 : vector<8xf32> to vector<8x1xf32>
    %86 = tpu.reciprocal %85 {approx = true} : vector<8x1xf32> -> vector<8x1xf32>
    %87 = vector.broadcast %86 : vector<8x1xf32> to vector<8x8xf32>
    %88 = arith.mulf %83, %87 : vector<8x8xf32>
    %89 = arith.truncf %88 : vector<8x8xf32> to vector<8x8xbf16>
    %cst_62 = arith.constant dense<0.000000e+00> : vector<8x8xf32>
    %90 = tpu.matmul %89, %73, %cst_62 {dimension_numbers = #tpu.dot_dimension_numbers<[1], [0], [0], [1], [0, 0, 1, 1], [], []>} : vector<8x8xbf16>, vector<8x8xbf16>, vector<8x8xf32> -> vector<8x8xf32>
    %c0_63 = arith.constant 0 : index
    %c8 = arith.constant 8 : index
    %91 = vector.load %arg25[%c0_63, %c8] : memref<8x32xf32, #tpu.memory_space<vmem>>, vector<8x8xf32>
    tpu.vector_store %arg25[%c0_63, %c8], %90 {strides = array<i32>} : memref<8x32xf32, #tpu.memory_space<vmem>>, vector<8x8xf32>,
    %92 = vector.extract_strided_slice %41 {offsets = [0, 16], sizes = [8, 8], strides = [1, 1]} : vector<8x32xf32> to vector<8x8xf32>
    %93 = arith.truncf %92 : vector<8x8xf32> to vector<8x8xbf16>
    %94 = vector.extract_strided_slice %42 {offsets = [0, 16], sizes = [8, 8], strides = [1, 1]} : vector<8x32xf32> to vector<8x8xf32>
    %95 = arith.truncf %94 : vector<8x8xf32> to vector<8x8xbf16>
    %96 = vector.extract_strided_slice %43 {offsets = [0, 16], sizes = [8, 8], strides = [1, 1]} : vector<8x32xf32> to vector<8x8xf32>
    %97 = arith.truncf %96 : vector<8x8xf32> to vector<8x8xbf16>
    %cst_64 = arith.constant dense<0.000000e+00> : vector<8x8xf32>
    %98 = tpu.matmul %93, %95, %cst_64 {dimension_numbers = #tpu.dot_dimension_numbers<[1], [1], [0], [0], [0, 0, 1, 0], [], []>} : vector<8x8xbf16>, vector<8x8xbf16>, vector<8x8xf32> -> vector<8x8xf32>
    %cst_65 = arith.constant 0.353553385 : f32
    %99 = vector.broadcast %cst_65 : f32 to vector<8x8xf32>
    %100 = arith.mulf %98, %99 : vector<8x8xf32>
    %101 = vector.broadcast %10 : vector<1x8xf32> to vector<8x8xf32>
    %102 = arith.addf %100, %101 : vector<8x8xf32>
    %cst_66 = arith.constant dense<0xFF800000> : vector<8xf32>
    %103 = vector.multi_reduction <maximumf>, %102, %cst_66 [1] : vector<8x8xf32> to vector<8xf32>
    %104 = vector.shape_cast %103 : vector<8xf32> to vector<8x1xf32>
    %105 = vector.broadcast %104 : vector<8x1xf32> to vector<8x8xf32>
    %106 = arith.subf %102, %105 : vector<8x8xf32>
    %107 = math.exp %106 : vector<8x8xf32>
    %cst_67 = arith.constant dense<0.000000e+00> : vector<8xf32>
    %108 = vector.multi_reduction <add>, %107, %cst_67 [1] : vector<8x8xf32> to vector<8xf32>
    %109 = vector.shape_cast %108 : vector<8xf32> to vector<8x1xf32>
    %110 = tpu.reciprocal %109 {approx = true} : vector<8x1xf32> -> vector<8x1xf32>
    %111 = vector.broadcast %110 : vector<8x1xf32> to vector<8x8xf32>
    %112 = arith.mulf %107, %111 : vector<8x8xf32>
    %113 = arith.truncf %112 : vector<8x8xf32> to vector<8x8xbf16>
    %cst_68 = arith.constant dense<0.000000e+00> : vector<8x8xf32>
    %114 = tpu.matmul %113, %97, %cst_68 {dimension_numbers = #tpu.dot_dimension_numbers<[1], [0], [0], [1], [0, 0, 1, 1], [], []>} : vector<8x8xbf16>, vector<8x8xbf16>, vector<8x8xf32> -> vector<8x8xf32>
    %c0_69 = arith.constant 0 : index
    %c16 = arith.constant 16 : index
    %115 = vector.load %arg25[%c0_69, %c16] : memref<8x32xf32, #tpu.memory_space<vmem>>, vector<8x8xf32>
    tpu.vector_store %arg25[%c0_69, %c16], %114 {strides = array<i32>} : memref<8x32xf32, #tpu.memory_space<vmem>>, vector<8x8xf32>,
    %116 = vector.extract_strided_slice %41 {offsets = [0, 24], sizes = [8, 8], strides = [1, 1]} : vector<8x32xf32> to vector<8x8xf32>
    %117 = arith.truncf %116 : vector<8x8xf32> to vector<8x8xbf16>
    %118 = vector.extract_strided_slice %42 {offsets = [0, 24], sizes = [8, 8], strides = [1, 1]} : vector<8x32xf32> to vector<8x8xf32>
    %119 = arith.truncf %118 : vector<8x8xf32> to vector<8x8xbf16>
    %120 = vector.extract_strided_slice %43 {offsets = [0, 24], sizes = [8, 8], strides = [1, 1]} : vector<8x32xf32> to vector<8x8xf32>
    %121 = arith.truncf %120 : vector<8x8xf32> to vector<8x8xbf16>
    %cst_70 = arith.constant dense<0.000000e+00> : vector<8x8xf32>
    %122 = tpu.matmul %117, %119, %cst_70 {dimension_numbers = #tpu.dot_dimension_numbers<[1], [1], [0], [0], [0, 0, 1, 0], [], []>} : vector<8x8xbf16>, vector<8x8xbf16>, vector<8x8xf32> -> vector<8x8xf32>
    %cst_71 = arith.constant 0.353553385 : f32
    %123 = vector.broadcast %cst_71 : f32 to vector<8x8xf32>
    %124 = arith.mulf %122, %123 : vector<8x8xf32>
    %125 = vector.broadcast %10 : vector<1x8xf32> to vector<8x8xf32>
    %126 = arith.addf %124, %125 : vector<8x8xf32>
    %cst_72 = arith.constant dense<0xFF800000> : vector<8xf32>
    %127 = vector.multi_reduction <maximumf>, %126, %cst_72 [1] : vector<8x8xf32> to vector<8xf32>
    %128 = vector.shape_cast %127 : vector<8xf32> to vector<8x1xf32>
    %129 = vector.broadcast %128 : vector<8x1xf32> to vector<8x8xf32>
    %130 = arith.subf %126, %129 : vector<8x8xf32>
    %131 = math.exp %130 : vector<8x8xf32>
    %cst_73 = arith.constant dense<0.000000e+00> : vector<8xf32>
    %132 = vector.multi_reduction <add>, %131, %cst_73 [1] : vector<8x8xf32> to vector<8xf32>
    %133 = vector.shape_cast %132 : vector<8xf32> to vector<8x1xf32>
    %134 = tpu.reciprocal %133 {approx = true} : vector<8x1xf32> -> vector<8x1xf32>
    %135 = vector.broadcast %134 : vector<8x1xf32> to vector<8x8xf32>
    %136 = arith.mulf %131, %135 : vector<8x8xf32>
    %137 = arith.truncf %136 : vector<8x8xf32> to vector<8x8xbf16>
    %cst_74 = arith.constant dense<0.000000e+00> : vector<8x8xf32>
    %138 = tpu.matmul %137, %121, %cst_74 {dimension_numbers = #tpu.dot_dimension_numbers<[1], [0], [0], [1], [0, 0, 1, 1], [], []>} : vector<8x8xbf16>, vector<8x8xbf16>, vector<8x8xf32> -> vector<8x8xf32>
    %c0_75 = arith.constant 0 : index
    %c24 = arith.constant 24 : index
    %139 = vector.load %arg25[%c0_75, %c24] : memref<8x32xf32, #tpu.memory_space<vmem>>, vector<8x8xf32>
    tpu.vector_store %arg25[%c0_75, %c24], %138 {strides = array<i32>} : memref<8x32xf32, #tpu.memory_space<vmem>>, vector<8x8xf32>,
    %c0_76 = arith.constant 0 : index
    %c0_77 = arith.constant 0 : index
    %140 = vector.load %arg25[%c0_76, %c0_77] : memref<8x32xf32, #tpu.memory_space<vmem>>, vector<8x32xf32>
    %141 = arith.truncf %140 : vector<8x32xf32> to vector<8x32xbf16>
    %cst_78 = arith.constant dense<0.000000e+00> : vector<8x32xf32>
    %142 = tpu.matmul %141, %13, %cst_78 {dimension_numbers = #tpu.dot_dimension_numbers<[1], [0], [0], [1], [0, 0, 1, 1], [], []>} : vector<8x32xbf16>, vector<32x32xbf16>, vector<8x32xf32> -> vector<8x32xf32>
    %143 = vector.broadcast %14 : vector<1x32xf32> to vector<8x32xf32>
    %144 = arith.addf %142, %143 : vector<8x32xf32>
    %145 = arith.addf %144, %1 : vector<8x32xf32>
    %cst_79 = arith.constant dense<0.000000e+00> : vector<8xf32>
    %146 = vector.multi_reduction <add>, %145, %cst_79 [1] : vector<8x32xf32> to vector<8xf32>
    %147 = vector.shape_cast %146 : vector<8xf32> to vector<8x1xf32>
    %cst_80 = arith.constant 3.200000e+01 : f32
    %148 = vector.broadcast %cst_80 : f32 to vector<8x1xf32>
    %149 = arith.divf %147, %148 : vector<8x1xf32>
    %150 = vector.broadcast %149 : vector<8x1xf32> to vector<8x32xf32>
    %151 = arith.subf %145, %150 : vector<8x32xf32>
    %152 = arith.mulf %151, %151 : vector<8x32xf32>
    %cst_81 = arith.constant dense<0.000000e+00> : vector<8xf32>
    %153 = vector.multi_reduction <add>, %152, %cst_81 [1] : vector<8x32xf32> to vector<8xf32>
    %154 = vector.shape_cast %153 : vector<8xf32> to vector<8x1xf32>
    %cst_82 = arith.constant 3.200000e+01 : f32
    %155 = vector.broadcast %cst_82 : f32 to vector<8x1xf32>
    %156 = arith.divf %154, %155 : vector<8x1xf32>
    %cst_83 = arith.constant 9.99999974E-6 : f32
    %157 = vector.broadcast %cst_83 : f32 to vector<8x1xf32>
    %158 = arith.addf %156, %157 : vector<8x1xf32>
    %159 = math.rsqrt %158 : vector<8x1xf32>
    %160 = vector.broadcast %159 : vector<8x1xf32> to vector<8x32xf32>
    %161 = arith.mulf %151, %160 : vector<8x32xf32>
    %162 = vector.broadcast %25 : vector<1x32xf32> to vector<8x32xf32>
    %163 = arith.mulf %161, %162 : vector<8x32xf32>
    %164 = vector.broadcast %26 : vector<1x32xf32> to vector<8x32xf32>
    %165 = arith.addf %163, %164 : vector<8x32xf32>
    %166 = arith.truncf %165 : vector<8x32xf32> to vector<8x32xbf16>
    %cst_84 = arith.constant dense<0.000000e+00> : vector<8x32xf32>
    %167 = tpu.matmul %166, %15, %cst_84 {dimension_numbers = #tpu.dot_dimension_numbers<[1], [0], [0], [1], [0, 0, 1, 1], [], []>} : vector<8x32xbf16>, vector<32x32xbf16>, vector<8x32xf32> -> vector<8x32xf32>
    %168 = vector.broadcast %16 : vector<1x32xf32> to vector<8x32xf32>
    %169 = arith.addf %167, %168 : vector<8x32xf32>
    %170 = vector.extract_strided_slice %169 {offsets = [0, 0], sizes = [8, 8], strides = [1, 1]} : vector<8x32xf32> to vector<8x8xf32>
    %171 = arith.truncf %170 : vector<8x8xf32> to vector<8x8xbf16>
    %172 = vector.extract_strided_slice %35 {offsets = [0, 0], sizes = [8, 8], strides = [1, 1]} : vector<8x32xf32> to vector<8x8xf32>
    %173 = arith.truncf %172 : vector<8x8xf32> to vector<8x8xbf16>
    %174 = vector.extract_strided_slice %36 {offsets = [0, 0], sizes = [8, 8], strides = [1, 1]} : vector<8x32xf32> to vector<8x8xf32>
    %175 = arith.truncf %174 : vector<8x8xf32> to vector<8x8xbf16>
    %cst_85 = arith.constant dense<0.000000e+00> : vector<8x8xf32>
    %176 = tpu.matmul %171, %173, %cst_85 {dimension_numbers = #tpu.dot_dimension_numbers<[1], [1], [0], [0], [0, 0, 1, 0], [], []>} : vector<8x8xbf16>, vector<8x8xbf16>, vector<8x8xf32> -> vector<8x8xf32>
    %cst_86 = arith.constant 0.353553385 : f32
    %177 = vector.broadcast %cst_86 : f32 to vector<8x8xf32>
    %178 = arith.mulf %176, %177 : vector<8x8xf32>
    %cst_87 = arith.constant dense<0xFF800000> : vector<8xf32>
    %179 = vector.multi_reduction <maximumf>, %178, %cst_87 [1] : vector<8x8xf32> to vector<8xf32>
    %180 = vector.shape_cast %179 : vector<8xf32> to vector<8x1xf32>
    %181 = vector.broadcast %180 : vector<8x1xf32> to vector<8x8xf32>
    %182 = arith.subf %178, %181 : vector<8x8xf32>
    %183 = math.exp %182 : vector<8x8xf32>
    %cst_88 = arith.constant dense<0.000000e+00> : vector<8xf32>
    %184 = vector.multi_reduction <add>, %183, %cst_88 [1] : vector<8x8xf32> to vector<8xf32>
    %185 = vector.shape_cast %184 : vector<8xf32> to vector<8x1xf32>
    %186 = tpu.reciprocal %185 {approx = true} : vector<8x1xf32> -> vector<8x1xf32>
    %187 = vector.broadcast %186 : vector<8x1xf32> to vector<8x8xf32>
    %188 = arith.mulf %183, %187 : vector<8x8xf32>
    %189 = arith.truncf %188 : vector<8x8xf32> to vector<8x8xbf16>
    %cst_89 = arith.constant dense<0.000000e+00> : vector<8x8xf32>
    %190 = tpu.matmul %189, %175, %cst_89 {dimension_numbers = #tpu.dot_dimension_numbers<[1], [0], [0], [1], [0, 0, 1, 1], [], []>} : vector<8x8xbf16>, vector<8x8xbf16>, vector<8x8xf32> -> vector<8x8xf32>
    %c0_90 = arith.constant 0 : index
    %c0_91 = arith.constant 0 : index
    %191 = vector.load %arg25[%c0_90, %c0_91] : memref<8x32xf32, #tpu.memory_space<vmem>>, vector<8x8xf32>
    tpu.vector_store %arg25[%c0_90, %c0_91], %190 {strides = array<i32>} : memref<8x32xf32, #tpu.memory_space<vmem>>, vector<8x8xf32>,
    %192 = vector.extract_strided_slice %169 {offsets = [0, 8], sizes = [8, 8], strides = [1, 1]} : vector<8x32xf32> to vector<8x8xf32>
    %193 = arith.truncf %192 : vector<8x8xf32> to vector<8x8xbf16>
    %194 = vector.extract_strided_slice %35 {offsets = [0, 8], sizes = [8, 8], strides = [1, 1]} : vector<8x32xf32> to vector<8x8xf32>
    %195 = arith.truncf %194 : vector<8x8xf32> to vector<8x8xbf16>
    %196 = vector.extract_strided_slice %36 {offsets = [0, 8], sizes = [8, 8], strides = [1, 1]} : vector<8x32xf32> to vector<8x8xf32>
    %197 = arith.truncf %196 : vector<8x8xf32> to vector<8x8xbf16>
    %cst_92 = arith.constant dense<0.000000e+00> : vector<8x8xf32>
    %198 = tpu.matmul %193, %195, %cst_92 {dimension_numbers = #tpu.dot_dimension_numbers<[1], [1], [0], [0], [0, 0, 1, 0], [], []>} : vector<8x8xbf16>, vector<8x8xbf16>, vector<8x8xf32> -> vector<8x8xf32>
    %cst_93 = arith.constant 0.353553385 : f32
    %199 = vector.broadcast %cst_93 : f32 to vector<8x8xf32>
    %200 = arith.mulf %198, %199 : vector<8x8xf32>
    %cst_94 = arith.constant dense<0xFF800000> : vector<8xf32>
    %201 = vector.multi_reduction <maximumf>, %200, %cst_94 [1] : vector<8x8xf32> to vector<8xf32>
    %202 = vector.shape_cast %201 : vector<8xf32> to vector<8x1xf32>
    %203 = vector.broadcast %202 : vector<8x1xf32> to vector<8x8xf32>
    %204 = arith.subf %200, %203 : vector<8x8xf32>
    %205 = math.exp %204 : vector<8x8xf32>
    %cst_95 = arith.constant dense<0.000000e+00> : vector<8xf32>
    %206 = vector.multi_reduction <add>, %205, %cst_95 [1] : vector<8x8xf32> to vector<8xf32>
    %207 = vector.shape_cast %206 : vector<8xf32> to vector<8x1xf32>
    %208 = tpu.reciprocal %207 {approx = true} : vector<8x1xf32> -> vector<8x1xf32>
    %209 = vector.broadcast %208 : vector<8x1xf32> to vector<8x8xf32>
    %210 = arith.mulf %205, %209 : vector<8x8xf32>
    %211 = arith.truncf %210 : vector<8x8xf32> to vector<8x8xbf16>
    %cst_96 = arith.constant dense<0.000000e+00> : vector<8x8xf32>
    %212 = tpu.matmul %211, %197, %cst_96 {dimension_numbers = #tpu.dot_dimension_numbers<[1], [0], [0], [1], [0, 0, 1, 1], [], []>} : vector<8x8xbf16>, vector<8x8xbf16>, vector<8x8xf32> -> vector<8x8xf32>
    %c0_97 = arith.constant 0 : index
    %c8_98 = arith.constant 8 : index
    %213 = vector.load %arg25[%c0_97, %c8_98] : memref<8x32xf32, #tpu.memory_space<vmem>>, vector<8x8xf32>
    tpu.vector_store %arg25[%c0_97, %c8_98], %212 {strides = array<i32>} : memref<8x32xf32, #tpu.memory_space<vmem>>, vector<8x8xf32>,
    %214 = vector.extract_strided_slice %169 {offsets = [0, 16], sizes = [8, 8], strides = [1, 1]} : vector<8x32xf32> to vector<8x8xf32>
    %215 = arith.truncf %214 : vector<8x8xf32> to vector<8x8xbf16>
    %216 = vector.extract_strided_slice %35 {offsets = [0, 16], sizes = [8, 8], strides = [1, 1]} : vector<8x32xf32> to vector<8x8xf32>
    %217 = arith.truncf %216 : vector<8x8xf32> to vector<8x8xbf16>
    %218 = vector.extract_strided_slice %36 {offsets = [0, 16], sizes = [8, 8], strides = [1, 1]} : vector<8x32xf32> to vector<8x8xf32>
    %219 = arith.truncf %218 : vector<8x8xf32> to vector<8x8xbf16>
    %cst_99 = arith.constant dense<0.000000e+00> : vector<8x8xf32>
    %220 = tpu.matmul %215, %217, %cst_99 {dimension_numbers = #tpu.dot_dimension_numbers<[1], [1], [0], [0], [0, 0, 1, 0], [], []>} : vector<8x8xbf16>, vector<8x8xbf16>, vector<8x8xf32> -> vector<8x8xf32>
    %cst_100 = arith.constant 0.353553385 : f32
    %221 = vector.broadcast %cst_100 : f32 to vector<8x8xf32>
    %222 = arith.mulf %220, %221 : vector<8x8xf32>
    %cst_101 = arith.constant dense<0xFF800000> : vector<8xf32>
    %223 = vector.multi_reduction <maximumf>, %222, %cst_101 [1] : vector<8x8xf32> to vector<8xf32>
    %224 = vector.shape_cast %223 : vector<8xf32> to vector<8x1xf32>
    %225 = vector.broadcast %224 : vector<8x1xf32> to vector<8x8xf32>
    %226 = arith.subf %222, %225 : vector<8x8xf32>
    %227 = math.exp %226 : vector<8x8xf32>
    %cst_102 = arith.constant dense<0.000000e+00> : vector<8xf32>
    %228 = vector.multi_reduction <add>, %227, %cst_102 [1] : vector<8x8xf32> to vector<8xf32>
    %229 = vector.shape_cast %228 : vector<8xf32> to vector<8x1xf32>
    %230 = tpu.reciprocal %229 {approx = true} : vector<8x1xf32> -> vector<8x1xf32>
    %231 = vector.broadcast %230 : vector<8x1xf32> to vector<8x8xf32>
    %232 = arith.mulf %227, %231 : vector<8x8xf32>
    %233 = arith.truncf %232 : vector<8x8xf32> to vector<8x8xbf16>
    %cst_103 = arith.constant dense<0.000000e+00> : vector<8x8xf32>
    %234 = tpu.matmul %233, %219, %cst_103 {dimension_numbers = #tpu.dot_dimension_numbers<[1], [0], [0], [1], [0, 0, 1, 1], [], []>} : vector<8x8xbf16>, vector<8x8xbf16>, vector<8x8xf32> -> vector<8x8xf32>
    %c0_104 = arith.constant 0 : index
    %c16_105 = arith.constant 16 : index
    %235 = vector.load %arg25[%c0_104, %c16_105] : memref<8x32xf32, #tpu.memory_space<vmem>>, vector<8x8xf32>
    tpu.vector_store %arg25[%c0_104, %c16_105], %234 {strides = array<i32>} : memref<8x32xf32, #tpu.memory_space<vmem>>, vector<8x8xf32>,
    %236 = vector.extract_strided_slice %169 {offsets = [0, 24], sizes = [8, 8], strides = [1, 1]} : vector<8x32xf32> to vector<8x8xf32>
    %237 = arith.truncf %236 : vector<8x8xf32> to vector<8x8xbf16>
    %238 = vector.extract_strided_slice %35 {offsets = [0, 24], sizes = [8, 8], strides = [1, 1]} : vector<8x32xf32> to vector<8x8xf32>
    %239 = arith.truncf %238 : vector<8x8xf32> to vector<8x8xbf16>
    %240 = vector.extract_strided_slice %36 {offsets = [0, 24], sizes = [8, 8], strides = [1, 1]} : vector<8x32xf32> to vector<8x8xf32>
    %241 = arith.truncf %240 : vector<8x8xf32> to vector<8x8xbf16>
    %cst_106 = arith.constant dense<0.000000e+00> : vector<8x8xf32>
    %242 = tpu.matmul %237, %239, %cst_106 {dimension_numbers = #tpu.dot_dimension_numbers<[1], [1], [0], [0], [0, 0, 1, 0], [], []>} : vector<8x8xbf16>, vector<8x8xbf16>, vector<8x8xf32> -> vector<8x8xf32>
    %cst_107 = arith.constant 0.353553385 : f32
    %243 = vector.broadcast %cst_107 : f32 to vector<8x8xf32>
    %244 = arith.mulf %242, %243 : vector<8x8xf32>
    %cst_108 = arith.constant dense<0xFF800000> : vector<8xf32>
    %245 = vector.multi_reduction <maximumf>, %244, %cst_108 [1] : vector<8x8xf32> to vector<8xf32>
    %246 = vector.shape_cast %245 : vector<8xf32> to vector<8x1xf32>
    %247 = vector.broadcast %246 : vector<8x1xf32> to vector<8x8xf32>
    %248 = arith.subf %244, %247 : vector<8x8xf32>
    %249 = math.exp %248 : vector<8x8xf32>
    %cst_109 = arith.constant dense<0.000000e+00> : vector<8xf32>
    %250 = vector.multi_reduction <add>, %249, %cst_109 [1] : vector<8x8xf32> to vector<8xf32>
    %251 = vector.shape_cast %250 : vector<8xf32> to vector<8x1xf32>
    %252 = tpu.reciprocal %251 {approx = true} : vector<8x1xf32> -> vector<8x1xf32>
    %253 = vector.broadcast %252 : vector<8x1xf32> to vector<8x8xf32>
    %254 = arith.mulf %249, %253 : vector<8x8xf32>
    %255 = arith.truncf %254 : vector<8x8xf32> to vector<8x8xbf16>
    %cst_110 = arith.constant dense<0.000000e+00> : vector<8x8xf32>
    %256 = tpu.matmul %255, %241, %cst_110 {dimension_numbers = #tpu.dot_dimension_numbers<[1], [0], [0], [1], [0, 0, 1, 1], [], []>} : vector<8x8xbf16>, vector<8x8xbf16>, vector<8x8xf32> -> vector<8x8xf32>
    %c0_111 = arith.constant 0 : index
    %c24_112 = arith.constant 24 : index
    %257 = vector.load %arg25[%c0_111, %c24_112] : memref<8x32xf32, #tpu.memory_space<vmem>>, vector<8x8xf32>
    tpu.vector_store %arg25[%c0_111, %c24_112], %256 {strides = array<i32>} : memref<8x32xf32, #tpu.memory_space<vmem>>, vector<8x8xf32>,
    %c0_113 = arith.constant 0 : index
    %c0_114 = arith.constant 0 : index
    %258 = vector.load %arg25[%c0_113, %c0_114] : memref<8x32xf32, #tpu.memory_space<vmem>>, vector<8x32xf32>
    %259 = arith.truncf %258 : vector<8x32xf32> to vector<8x32xbf16>
    %cst_115 = arith.constant dense<0.000000e+00> : vector<8x32xf32>
    %260 = tpu.matmul %259, %19, %cst_115 {dimension_numbers = #tpu.dot_dimension_numbers<[1], [0], [0], [1], [0, 0, 1, 1], [], []>} : vector<8x32xbf16>, vector<32x32xbf16>, vector<8x32xf32> -> vector<8x32xf32>
    %261 = vector.broadcast %20 : vector<1x32xf32> to vector<8x32xf32>
    %262 = arith.addf %260, %261 : vector<8x32xf32>
    %263 = arith.addf %262, %165 : vector<8x32xf32>
    %cst_116 = arith.constant dense<0.000000e+00> : vector<8xf32>
    %264 = vector.multi_reduction <add>, %263, %cst_116 [1] : vector<8x32xf32> to vector<8xf32>
    %265 = vector.shape_cast %264 : vector<8xf32> to vector<8x1xf32>
    %cst_117 = arith.constant 3.200000e+01 : f32
    %266 = vector.broadcast %cst_117 : f32 to vector<8x1xf32>
    %267 = arith.divf %265, %266 : vector<8x1xf32>
    %268 = vector.broadcast %267 : vector<8x1xf32> to vector<8x32xf32>
    %269 = arith.subf %263, %268 : vector<8x32xf32>
    %270 = arith.mulf %269, %269 : vector<8x32xf32>
    %cst_118 = arith.constant dense<0.000000e+00> : vector<8xf32>
    %271 = vector.multi_reduction <add>, %270, %cst_118 [1] : vector<8x32xf32> to vector<8xf32>
    %272 = vector.shape_cast %271 : vector<8xf32> to vector<8x1xf32>
    %cst_119 = arith.constant 3.200000e+01 : f32
    %273 = vector.broadcast %cst_119 : f32 to vector<8x1xf32>
    %274 = arith.divf %272, %273 : vector<8x1xf32>
    %cst_120 = arith.constant 9.99999974E-6 : f32
    %275 = vector.broadcast %cst_120 : f32 to vector<8x1xf32>
    %276 = arith.addf %274, %275 : vector<8x1xf32>
    %277 = math.rsqrt %276 : vector<8x1xf32>
    %278 = vector.broadcast %277 : vector<8x1xf32> to vector<8x32xf32>
    %279 = arith.mulf %269, %278 : vector<8x32xf32>
    %280 = vector.broadcast %27 : vector<1x32xf32> to vector<8x32xf32>
    %281 = arith.mulf %279, %280 : vector<8x32xf32>
    %282 = vector.broadcast %28 : vector<1x32xf32> to vector<8x32xf32>
    %283 = arith.addf %281, %282 : vector<8x32xf32>
    %284 = arith.truncf %283 : vector<8x32xf32> to vector<8x32xbf16>
    %cst_121 = arith.constant dense<0.000000e+00> : vector<8x64xf32>
    %285 = tpu.matmul %284, %21, %cst_121 {dimension_numbers = #tpu.dot_dimension_numbers<[1], [0], [0], [1], [0, 0, 1, 1], [], []>} : vector<8x32xbf16>, vector<32x64xbf16>, vector<8x64xf32> -> vector<8x64xf32>
    %286 = vector.broadcast %22 : vector<1x64xf32> to vector<8x64xf32>
    %287 = arith.addf %285, %286 : vector<8x64xf32>
    %cst_122 = arith.constant 0.000000e+00 : f32
    %288 = vector.broadcast %cst_122 : f32 to vector<8x64xf32>
    %289 = arith.maximumf %287, %288 : vector<8x64xf32>
    %290 = arith.truncf %289 : vector<8x64xf32> to vector<8x64xbf16>
    %cst_123 = arith.constant dense<0.000000e+00> : vector<8x32xf32>
    %291 = tpu.matmul %290, %23, %cst_123 {dimension_numbers = #tpu.dot_dimension_numbers<[1], [0], [0], [1], [0, 0, 1, 1], [], []>} : vector<8x64xbf16>, vector<64x32xbf16>, vector<8x32xf32> -> vector<8x32xf32>
    %292 = vector.broadcast %24 : vector<1x32xf32> to vector<8x32xf32>
    %293 = arith.addf %291, %292 : vector<8x32xf32>
    %294 = arith.addf %293, %283 : vector<8x32xf32>
    %cst_124 = arith.constant dense<0.000000e+00> : vector<8xf32>
    %295 = vector.multi_reduction <add>, %294, %cst_124 [1] : vector<8x32xf32> to vector<8xf32>
    %296 = vector.shape_cast %295 : vector<8xf32> to vector<8x1xf32>
    %cst_125 = arith.constant 3.200000e+01 : f32
    %297 = vector.broadcast %cst_125 : f32 to vector<8x1xf32>
    %298 = arith.divf %296, %297 : vector<8x1xf32>
    %299 = vector.broadcast %298 : vector<8x1xf32> to vector<8x32xf32>
    %300 = arith.subf %294, %299 : vector<8x32xf32>
    %301 = arith.mulf %300, %300 : vector<8x32xf32>
    %cst_126 = arith.constant dense<0.000000e+00> : vector<8xf32>
    %302 = vector.multi_reduction <add>, %301, %cst_126 [1] : vector<8x32xf32> to vector<8xf32>
    %303 = vector.shape_cast %302 : vector<8xf32> to vector<8x1xf32>
    %cst_127 = arith.constant 3.200000e+01 : f32
    %304 = vector.broadcast %cst_127 : f32 to vector<8x1xf32>
    %305 = arith.divf %303, %304 : vector<8x1xf32>
    %cst_128 = arith.constant 9.99999974E-6 : f32
    %306 = vector.broadcast %cst_128 : f32 to vector<8x1xf32>
    %307 = arith.addf %305, %306 : vector<8x1xf32>
    %308 = math.rsqrt %307 : vector<8x1xf32>
    %309 = vector.broadcast %308 : vector<8x1xf32> to vector<8x32xf32>
    %310 = arith.mulf %300, %309 : vector<8x32xf32>
    %311 = vector.broadcast %29 : vector<1x32xf32> to vector<8x32xf32>
    %312 = arith.mulf %310, %311 : vector<8x32xf32>
    %313 = vector.broadcast %30 : vector<1x32xf32> to vector<8x32xf32>
    %314 = arith.addf %312, %313 : vector<8x32xf32>
    %315 = arith.truncf %314 : vector<8x32xf32> to vector<8x32xbf16>
    %cst_129 = arith.constant dense<0.000000e+00> : vector<8x96xf32>
    %316 = tpu.matmul %315, %11, %cst_129 {dimension_numbers = #tpu.dot_dimension_numbers<[1], [0], [0], [1], [0, 0, 1, 1], [], []>} : vector<8x32xbf16>, vector<32x96xbf16>, vector<8x96xf32> -> vector<8x96xf32>
    %317 = vector.broadcast %12 : vector<1x96xf32> to vector<8x96xf32>
    %318 = arith.addf %316, %317 : vector<8x96xf32>
    %319 = vector.extract_strided_slice %318 {offsets = [0, 0], sizes = [8, 32], strides = [1, 1]} : vector<8x96xf32> to vector<8x32xf32>
    %320 = vector.extract_strided_slice %318 {offsets = [0, 32], sizes = [8, 32], strides = [1, 1]} : vector<8x96xf32> to vector<8x32xf32>
    %321 = vector.extract_strided_slice %318 {offsets = [0, 64], sizes = [8, 32], strides = [1, 1]} : vector<8x96xf32> to vector<8x32xf32>
    %322 = vector.extract_strided_slice %319 {offsets = [0, 0], sizes = [8, 8], strides = [1, 1]} : vector<8x32xf32> to vector<8x8xf32>
    %323 = arith.truncf %322 : vector<8x8xf32> to vector<8x8xbf16>
    %324 = vector.extract_strided_slice %320 {offsets = [0, 0], sizes = [8, 8], strides = [1, 1]} : vector<8x32xf32> to vector<8x8xf32>
    %325 = arith.truncf %324 : vector<8x8xf32> to vector<8x8xbf16>
    %326 = vector.extract_strided_slice %321 {offsets = [0, 0], sizes = [8, 8], strides = [1, 1]} : vector<8x32xf32> to vector<8x8xf32>
    %327 = arith.truncf %326 : vector<8x8xf32> to vector<8x8xbf16>
    %cst_130 = arith.constant dense<0.000000e+00> : vector<8x8xf32>
    %328 = tpu.matmul %323, %325, %cst_130 {dimension_numbers = #tpu.dot_dimension_numbers<[1], [1], [0], [0], [0, 0, 1, 0], [], []>} : vector<8x8xbf16>, vector<8x8xbf16>, vector<8x8xf32> -> vector<8x8xf32>
    %cst_131 = arith.constant 0.353553385 : f32
    %329 = vector.broadcast %cst_131 : f32 to vector<8x8xf32>
    %330 = arith.mulf %328, %329 : vector<8x8xf32>
    %331 = vector.broadcast %10 : vector<1x8xf32> to vector<8x8xf32>
    %332 = arith.addf %330, %331 : vector<8x8xf32>
    %cst_132 = arith.constant dense<0xFF800000> : vector<8xf32>
    %333 = vector.multi_reduction <maximumf>, %332, %cst_132 [1] : vector<8x8xf32> to vector<8xf32>
    %334 = vector.shape_cast %333 : vector<8xf32> to vector<8x1xf32>
    %335 = vector.broadcast %334 : vector<8x1xf32> to vector<8x8xf32>
    %336 = arith.subf %332, %335 : vector<8x8xf32>
    %337 = math.exp %336 : vector<8x8xf32>
    %cst_133 = arith.constant dense<0.000000e+00> : vector<8xf32>
    %338 = vector.multi_reduction <add>, %337, %cst_133 [1] : vector<8x8xf32> to vector<8xf32>
    %339 = vector.shape_cast %338 : vector<8xf32> to vector<8x1xf32>
    %340 = tpu.reciprocal %339 {approx = true} : vector<8x1xf32> -> vector<8x1xf32>
    %341 = vector.broadcast %340 : vector<8x1xf32> to vector<8x8xf32>
    %342 = arith.mulf %337, %341 : vector<8x8xf32>
    %343 = arith.truncf %342 : vector<8x8xf32> to vector<8x8xbf16>
    %cst_134 = arith.constant dense<0.000000e+00> : vector<8x8xf32>
    %344 = tpu.matmul %343, %327, %cst_134 {dimension_numbers = #tpu.dot_dimension_numbers<[1], [0], [0], [1], [0, 0, 1, 1], [], []>} : vector<8x8xbf16>, vector<8x8xbf16>, vector<8x8xf32> -> vector<8x8xf32>
    %c0_135 = arith.constant 0 : index
    %c0_136 = arith.constant 0 : index
    %345 = vector.load %arg25[%c0_135, %c0_136] : memref<8x32xf32, #tpu.memory_space<vmem>>, vector<8x8xf32>
    tpu.vector_store %arg25[%c0_135, %c0_136], %344 {strides = array<i32>} : memref<8x32xf32, #tpu.memory_space<vmem>>, vector<8x8xf32>,
    %346 = vector.extract_strided_slice %319 {offsets = [0, 8], sizes = [8, 8], strides = [1, 1]} : vector<8x32xf32> to vector<8x8xf32>
    %347 = arith.truncf %346 : vector<8x8xf32> to vector<8x8xbf16>
    %348 = vector.extract_strided_slice %320 {offsets = [0, 8], sizes = [8, 8], strides = [1, 1]} : vector<8x32xf32> to vector<8x8xf32>
    %349 = arith.truncf %348 : vector<8x8xf32> to vector<8x8xbf16>
    %350 = vector.extract_strided_slice %321 {offsets = [0, 8], sizes = [8, 8], strides = [1, 1]} : vector<8x32xf32> to vector<8x8xf32>
    %351 = arith.truncf %350 : vector<8x8xf32> to vector<8x8xbf16>
    %cst_137 = arith.constant dense<0.000000e+00> : vector<8x8xf32>
    %352 = tpu.matmul %347, %349, %cst_137 {dimension_numbers = #tpu.dot_dimension_numbers<[1], [1], [0], [0], [0, 0, 1, 0], [], []>} : vector<8x8xbf16>, vector<8x8xbf16>, vector<8x8xf32> -> vector<8x8xf32>
    %cst_138 = arith.constant 0.353553385 : f32
    %353 = vector.broadcast %cst_138 : f32 to vector<8x8xf32>
    %354 = arith.mulf %352, %353 : vector<8x8xf32>
    %355 = vector.broadcast %10 : vector<1x8xf32> to vector<8x8xf32>
    %356 = arith.addf %354, %355 : vector<8x8xf32>
    %cst_139 = arith.constant dense<0xFF800000> : vector<8xf32>
    %357 = vector.multi_reduction <maximumf>, %356, %cst_139 [1] : vector<8x8xf32> to vector<8xf32>
    %358 = vector.shape_cast %357 : vector<8xf32> to vector<8x1xf32>
    %359 = vector.broadcast %358 : vector<8x1xf32> to vector<8x8xf32>
    %360 = arith.subf %356, %359 : vector<8x8xf32>
    %361 = math.exp %360 : vector<8x8xf32>
    %cst_140 = arith.constant dense<0.000000e+00> : vector<8xf32>
    %362 = vector.multi_reduction <add>, %361, %cst_140 [1] : vector<8x8xf32> to vector<8xf32>
    %363 = vector.shape_cast %362 : vector<8xf32> to vector<8x1xf32>
    %364 = tpu.reciprocal %363 {approx = true} : vector<8x1xf32> -> vector<8x1xf32>
    %365 = vector.broadcast %364 : vector<8x1xf32> to vector<8x8xf32>
    %366 = arith.mulf %361, %365 : vector<8x8xf32>
    %367 = arith.truncf %366 : vector<8x8xf32> to vector<8x8xbf16>
    %cst_141 = arith.constant dense<0.000000e+00> : vector<8x8xf32>
    %368 = tpu.matmul %367, %351, %cst_141 {dimension_numbers = #tpu.dot_dimension_numbers<[1], [0], [0], [1], [0, 0, 1, 1], [], []>} : vector<8x8xbf16>, vector<8x8xbf16>, vector<8x8xf32> -> vector<8x8xf32>
    %c0_142 = arith.constant 0 : index
    %c8_143 = arith.constant 8 : index
    %369 = vector.load %arg25[%c0_142, %c8_143] : memref<8x32xf32, #tpu.memory_space<vmem>>, vector<8x8xf32>
    tpu.vector_store %arg25[%c0_142, %c8_143], %368 {strides = array<i32>} : memref<8x32xf32, #tpu.memory_space<vmem>>, vector<8x8xf32>,
    %370 = vector.extract_strided_slice %319 {offsets = [0, 16], sizes = [8, 8], strides = [1, 1]} : vector<8x32xf32> to vector<8x8xf32>
    %371 = arith.truncf %370 : vector<8x8xf32> to vector<8x8xbf16>
    %372 = vector.extract_strided_slice %320 {offsets = [0, 16], sizes = [8, 8], strides = [1, 1]} : vector<8x32xf32> to vector<8x8xf32>
    %373 = arith.truncf %372 : vector<8x8xf32> to vector<8x8xbf16>
    %374 = vector.extract_strided_slice %321 {offsets = [0, 16], sizes = [8, 8], strides = [1, 1]} : vector<8x32xf32> to vector<8x8xf32>
    %375 = arith.truncf %374 : vector<8x8xf32> to vector<8x8xbf16>
    %cst_144 = arith.constant dense<0.000000e+00> : vector<8x8xf32>
    %376 = tpu.matmul %371, %373, %cst_144 {dimension_numbers = #tpu.dot_dimension_numbers<[1], [1], [0], [0], [0, 0, 1, 0], [], []>} : vector<8x8xbf16>, vector<8x8xbf16>, vector<8x8xf32> -> vector<8x8xf32>
    %cst_145 = arith.constant 0.353553385 : f32
    %377 = vector.broadcast %cst_145 : f32 to vector<8x8xf32>
    %378 = arith.mulf %376, %377 : vector<8x8xf32>
    %379 = vector.broadcast %10 : vector<1x8xf32> to vector<8x8xf32>
    %380 = arith.addf %378, %379 : vector<8x8xf32>
    %cst_146 = arith.constant dense<0xFF800000> : vector<8xf32>
    %381 = vector.multi_reduction <maximumf>, %380, %cst_146 [1] : vector<8x8xf32> to vector<8xf32>
    %382 = vector.shape_cast %381 : vector<8xf32> to vector<8x1xf32>
    %383 = vector.broadcast %382 : vector<8x1xf32> to vector<8x8xf32>
    %384 = arith.subf %380, %383 : vector<8x8xf32>
    %385 = math.exp %384 : vector<8x8xf32>
    %cst_147 = arith.constant dense<0.000000e+00> : vector<8xf32>
    %386 = vector.multi_reduction <add>, %385, %cst_147 [1] : vector<8x8xf32> to vector<8xf32>
    %387 = vector.shape_cast %386 : vector<8xf32> to vector<8x1xf32>
    %388 = tpu.reciprocal %387 {approx = true} : vector<8x1xf32> -> vector<8x1xf32>
    %389 = vector.broadcast %388 : vector<8x1xf32> to vector<8x8xf32>
    %390 = arith.mulf %385, %389 : vector<8x8xf32>
    %391 = arith.truncf %390 : vector<8x8xf32> to vector<8x8xbf16>
    %cst_148 = arith.constant dense<0.000000e+00> : vector<8x8xf32>
    %392 = tpu.matmul %391, %375, %cst_148 {dimension_numbers = #tpu.dot_dimension_numbers<[1], [0], [0], [1], [0, 0, 1, 1], [], []>} : vector<8x8xbf16>, vector<8x8xbf16>, vector<8x8xf32> -> vector<8x8xf32>
    %c0_149 = arith.constant 0 : index
    %c16_150 = arith.constant 16 : index
    %393 = vector.load %arg25[%c0_149, %c16_150] : memref<8x32xf32, #tpu.memory_space<vmem>>, vector<8x8xf32>
    tpu.vector_store %arg25[%c0_149, %c16_150], %392 {strides = array<i32>} : memref<8x32xf32, #tpu.memory_space<vmem>>, vector<8x8xf32>,
    %394 = vector.extract_strided_slice %319 {offsets = [0, 24], sizes = [8, 8], strides = [1, 1]} : vector<8x32xf32> to vector<8x8xf32>
    %395 = arith.truncf %394 : vector<8x8xf32> to vector<8x8xbf16>
    %396 = vector.extract_strided_slice %320 {offsets = [0, 24], sizes = [8, 8], strides = [1, 1]} : vector<8x32xf32> to vector<8x8xf32>
    %397 = arith.truncf %396 : vector<8x8xf32> to vector<8x8xbf16>
    %398 = vector.extract_strided_slice %321 {offsets = [0, 24], sizes = [8, 8], strides = [1, 1]} : vector<8x32xf32> to vector<8x8xf32>
    %399 = arith.truncf %398 : vector<8x8xf32> to vector<8x8xbf16>
    %cst_151 = arith.constant dense<0.000000e+00> : vector<8x8xf32>
    %400 = tpu.matmul %395, %397, %cst_151 {dimension_numbers = #tpu.dot_dimension_numbers<[1], [1], [0], [0], [0, 0, 1, 0], [], []>} : vector<8x8xbf16>, vector<8x8xbf16>, vector<8x8xf32> -> vector<8x8xf32>
    %cst_152 = arith.constant 0.353553385 : f32
    %401 = vector.broadcast %cst_152 : f32 to vector<8x8xf32>
    %402 = arith.mulf %400, %401 : vector<8x8xf32>
    %403 = vector.broadcast %10 : vector<1x8xf32> to vector<8x8xf32>
    %404 = arith.addf %402, %403 : vector<8x8xf32>
    %cst_153 = arith.constant dense<0xFF800000> : vector<8xf32>
    %405 = vector.multi_reduction <maximumf>, %404, %cst_153 [1] : vector<8x8xf32> to vector<8xf32>
    %406 = vector.shape_cast %405 : vector<8xf32> to vector<8x1xf32>
    %407 = vector.broadcast %406 : vector<8x1xf32> to vector<8x8xf32>
    %408 = arith.subf %404, %407 : vector<8x8xf32>
    %409 = math.exp %408 : vector<8x8xf32>
    %cst_154 = arith.constant dense<0.000000e+00> : vector<8xf32>
    %410 = vector.multi_reduction <add>, %409, %cst_154 [1] : vector<8x8xf32> to vector<8xf32>
    %411 = vector.shape_cast %410 : vector<8xf32> to vector<8x1xf32>
    %412 = tpu.reciprocal %411 {approx = true} : vector<8x1xf32> -> vector<8x1xf32>
    %413 = vector.broadcast %412 : vector<8x1xf32> to vector<8x8xf32>
    %414 = arith.mulf %409, %413 : vector<8x8xf32>
    %415 = arith.truncf %414 : vector<8x8xf32> to vector<8x8xbf16>
    %cst_155 = arith.constant dense<0.000000e+00> : vector<8x8xf32>
    %416 = tpu.matmul %415, %399, %cst_155 {dimension_numbers = #tpu.dot_dimension_numbers<[1], [0], [0], [1], [0, 0, 1, 1], [], []>} : vector<8x8xbf16>, vector<8x8xbf16>, vector<8x8xf32> -> vector<8x8xf32>
    %c0_156 = arith.constant 0 : index
    %c24_157 = arith.constant 24 : index
    %417 = vector.load %arg25[%c0_156, %c24_157] : memref<8x32xf32, #tpu.memory_space<vmem>>, vector<8x8xf32>
    tpu.vector_store %arg25[%c0_156, %c24_157], %416 {strides = array<i32>} : memref<8x32xf32, #tpu.memory_space<vmem>>, vector<8x8xf32>,
    %c0_158 = arith.constant 0 : index
    %c0_159 = arith.constant 0 : index
    %418 = vector.load %arg25[%c0_158, %c0_159] : memref<8x32xf32, #tpu.memory_space<vmem>>, vector<8x32xf32>
    %419 = arith.truncf %418 : vector<8x32xf32> to vector<8x32xbf16>
    %cst_160 = arith.constant dense<0.000000e+00> : vector<8x32xf32>
    %420 = tpu.matmul %419, %13, %cst_160 {dimension_numbers = #tpu.dot_dimension_numbers<[1], [0], [0], [1], [0, 0, 1, 1], [], []>} : vector<8x32xbf16>, vector<32x32xbf16>, vector<8x32xf32> -> vector<8x32xf32>
    %421 = vector.broadcast %14 : vector<1x32xf32> to vector<8x32xf32>
    %422 = arith.addf %420, %421 : vector<8x32xf32>
    %423 = arith.addf %422, %314 : vector<8x32xf32>
    %cst_161 = arith.constant dense<0.000000e+00> : vector<8xf32>
    %424 = vector.multi_reduction <add>, %423, %cst_161 [1] : vector<8x32xf32> to vector<8xf32>
    %425 = vector.shape_cast %424 : vector<8xf32> to vector<8x1xf32>
    %cst_162 = arith.constant 3.200000e+01 : f32
    %426 = vector.broadcast %cst_162 : f32 to vector<8x1xf32>
    %427 = arith.divf %425, %426 : vector<8x1xf32>
    %428 = vector.broadcast %427 : vector<8x1xf32> to vector<8x32xf32>
    %429 = arith.subf %423, %428 : vector<8x32xf32>
    %430 = arith.mulf %429, %429 : vector<8x32xf32>
    %cst_163 = arith.constant dense<0.000000e+00> : vector<8xf32>
    %431 = vector.multi_reduction <add>, %430, %cst_163 [1] : vector<8x32xf32> to vector<8xf32>
    %432 = vector.shape_cast %431 : vector<8xf32> to vector<8x1xf32>
    %cst_164 = arith.constant 3.200000e+01 : f32
    %433 = vector.broadcast %cst_164 : f32 to vector<8x1xf32>
    %434 = arith.divf %432, %433 : vector<8x1xf32>
    %cst_165 = arith.constant 9.99999974E-6 : f32
    %435 = vector.broadcast %cst_165 : f32 to vector<8x1xf32>
    %436 = arith.addf %434, %435 : vector<8x1xf32>
    %437 = math.rsqrt %436 : vector<8x1xf32>
    %438 = vector.broadcast %437 : vector<8x1xf32> to vector<8x32xf32>
    %439 = arith.mulf %429, %438 : vector<8x32xf32>
    %440 = vector.broadcast %25 : vector<1x32xf32> to vector<8x32xf32>
    %441 = arith.mulf %439, %440 : vector<8x32xf32>
    %442 = vector.broadcast %26 : vector<1x32xf32> to vector<8x32xf32>
    %443 = arith.addf %441, %442 : vector<8x32xf32>
    %444 = arith.truncf %443 : vector<8x32xf32> to vector<8x32xbf16>
    %cst_166 = arith.constant dense<0.000000e+00> : vector<8x32xf32>
    %445 = tpu.matmul %444, %15, %cst_166 {dimension_numbers = #tpu.dot_dimension_numbers<[1], [0], [0], [1], [0, 0, 1, 1], [], []>} : vector<8x32xbf16>, vector<32x32xbf16>, vector<8x32xf32> -> vector<8x32xf32>
    %446 = vector.broadcast %16 : vector<1x32xf32> to vector<8x32xf32>
    %447 = arith.addf %445, %446 : vector<8x32xf32>
    %448 = vector.extract_strided_slice %447 {offsets = [0, 0], sizes = [8, 8], strides = [1, 1]} : vector<8x32xf32> to vector<8x8xf32>
    %449 = arith.truncf %448 : vector<8x8xf32> to vector<8x8xbf16>
    %450 = vector.extract_strided_slice %35 {offsets = [0, 0], sizes = [8, 8], strides = [1, 1]} : vector<8x32xf32> to vector<8x8xf32>
    %451 = arith.truncf %450 : vector<8x8xf32> to vector<8x8xbf16>
    %452 = vector.extract_strided_slice %36 {offsets = [0, 0], sizes = [8, 8], strides = [1, 1]} : vector<8x32xf32> to vector<8x8xf32>
    %453 = arith.truncf %452 : vector<8x8xf32> to vector<8x8xbf16>
    %cst_167 = arith.constant dense<0.000000e+00> : vector<8x8xf32>
    %454 = tpu.matmul %449, %451, %cst_167 {dimension_numbers = #tpu.dot_dimension_numbers<[1], [1], [0], [0], [0, 0, 1, 0], [], []>} : vector<8x8xbf16>, vector<8x8xbf16>, vector<8x8xf32> -> vector<8x8xf32>
    %cst_168 = arith.constant 0.353553385 : f32
    %455 = vector.broadcast %cst_168 : f32 to vector<8x8xf32>
    %456 = arith.mulf %454, %455 : vector<8x8xf32>
    %cst_169 = arith.constant dense<0xFF800000> : vector<8xf32>
    %457 = vector.multi_reduction <maximumf>, %456, %cst_169 [1] : vector<8x8xf32> to vector<8xf32>
    %458 = vector.shape_cast %457 : vector<8xf32> to vector<8x1xf32>
    %459 = vector.broadcast %458 : vector<8x1xf32> to vector<8x8xf32>
    %460 = arith.subf %456, %459 : vector<8x8xf32>
    %461 = math.exp %460 : vector<8x8xf32>
    %cst_170 = arith.constant dense<0.000000e+00> : vector<8xf32>
    %462 = vector.multi_reduction <add>, %461, %cst_170 [1] : vector<8x8xf32> to vector<8xf32>
    %463 = vector.shape_cast %462 : vector<8xf32> to vector<8x1xf32>
    %464 = tpu.reciprocal %463 {approx = true} : vector<8x1xf32> -> vector<8x1xf32>
    %465 = vector.broadcast %464 : vector<8x1xf32> to vector<8x8xf32>
    %466 = arith.mulf %461, %465 : vector<8x8xf32>
    %467 = arith.truncf %466 : vector<8x8xf32> to vector<8x8xbf16>
    %cst_171 = arith.constant dense<0.000000e+00> : vector<8x8xf32>
    %468 = tpu.matmul %467, %453, %cst_171 {dimension_numbers = #tpu.dot_dimension_numbers<[1], [0], [0], [1], [0, 0, 1, 1], [], []>} : vector<8x8xbf16>, vector<8x8xbf16>, vector<8x8xf32> -> vector<8x8xf32>
    %c0_172 = arith.constant 0 : index
    %c0_173 = arith.constant 0 : index
    %469 = vector.load %arg25[%c0_172, %c0_173] : memref<8x32xf32, #tpu.memory_space<vmem>>, vector<8x8xf32>
    tpu.vector_store %arg25[%c0_172, %c0_173], %468 {strides = array<i32>} : memref<8x32xf32, #tpu.memory_space<vmem>>, vector<8x8xf32>,
    %470 = vector.extract_strided_slice %447 {offsets = [0, 8], sizes = [8, 8], strides = [1, 1]} : vector<8x32xf32> to vector<8x8xf32>
    %471 = arith.truncf %470 : vector<8x8xf32> to vector<8x8xbf16>
    %472 = vector.extract_strided_slice %35 {offsets = [0, 8], sizes = [8, 8], strides = [1, 1]} : vector<8x32xf32> to vector<8x8xf32>
    %473 = arith.truncf %472 : vector<8x8xf32> to vector<8x8xbf16>
    %474 = vector.extract_strided_slice %36 {offsets = [0, 8], sizes = [8, 8], strides = [1, 1]} : vector<8x32xf32> to vector<8x8xf32>
    %475 = arith.truncf %474 : vector<8x8xf32> to vector<8x8xbf16>
    %cst_174 = arith.constant dense<0.000000e+00> : vector<8x8xf32>
    %476 = tpu.matmul %471, %473, %cst_174 {dimension_numbers = #tpu.dot_dimension_numbers<[1], [1], [0], [0], [0, 0, 1, 0], [], []>} : vector<8x8xbf16>, vector<8x8xbf16>, vector<8x8xf32> -> vector<8x8xf32>
    %cst_175 = arith.constant 0.353553385 : f32
    %477 = vector.broadcast %cst_175 : f32 to vector<8x8xf32>
    %478 = arith.mulf %476, %477 : vector<8x8xf32>
    %cst_176 = arith.constant dense<0xFF800000> : vector<8xf32>
    %479 = vector.multi_reduction <maximumf>, %478, %cst_176 [1] : vector<8x8xf32> to vector<8xf32>
    %480 = vector.shape_cast %479 : vector<8xf32> to vector<8x1xf32>
    %481 = vector.broadcast %480 : vector<8x1xf32> to vector<8x8xf32>
    %482 = arith.subf %478, %481 : vector<8x8xf32>
    %483 = math.exp %482 : vector<8x8xf32>
    %cst_177 = arith.constant dense<0.000000e+00> : vector<8xf32>
    %484 = vector.multi_reduction <add>, %483, %cst_177 [1] : vector<8x8xf32> to vector<8xf32>
    %485 = vector.shape_cast %484 : vector<8xf32> to vector<8x1xf32>
    %486 = tpu.reciprocal %485 {approx = true} : vector<8x1xf32> -> vector<8x1xf32>
    %487 = vector.broadcast %486 : vector<8x1xf32> to vector<8x8xf32>
    %488 = arith.mulf %483, %487 : vector<8x8xf32>
    %489 = arith.truncf %488 : vector<8x8xf32> to vector<8x8xbf16>
    %cst_178 = arith.constant dense<0.000000e+00> : vector<8x8xf32>
    %490 = tpu.matmul %489, %475, %cst_178 {dimension_numbers = #tpu.dot_dimension_numbers<[1], [0], [0], [1], [0, 0, 1, 1], [], []>} : vector<8x8xbf16>, vector<8x8xbf16>, vector<8x8xf32> -> vector<8x8xf32>
    %c0_179 = arith.constant 0 : index
    %c8_180 = arith.constant 8 : index
    %491 = vector.load %arg25[%c0_179, %c8_180] : memref<8x32xf32, #tpu.memory_space<vmem>>, vector<8x8xf32>
    tpu.vector_store %arg25[%c0_179, %c8_180], %490 {strides = array<i32>} : memref<8x32xf32, #tpu.memory_space<vmem>>, vector<8x8xf32>,
    %492 = vector.extract_strided_slice %447 {offsets = [0, 16], sizes = [8, 8], strides = [1, 1]} : vector<8x32xf32> to vector<8x8xf32>
    %493 = arith.truncf %492 : vector<8x8xf32> to vector<8x8xbf16>
    %494 = vector.extract_strided_slice %35 {offsets = [0, 16], sizes = [8, 8], strides = [1, 1]} : vector<8x32xf32> to vector<8x8xf32>
    %495 = arith.truncf %494 : vector<8x8xf32> to vector<8x8xbf16>
    %496 = vector.extract_strided_slice %36 {offsets = [0, 16], sizes = [8, 8], strides = [1, 1]} : vector<8x32xf32> to vector<8x8xf32>
    %497 = arith.truncf %496 : vector<8x8xf32> to vector<8x8xbf16>
    %cst_181 = arith.constant dense<0.000000e+00> : vector<8x8xf32>
    %498 = tpu.matmul %493, %495, %cst_181 {dimension_numbers = #tpu.dot_dimension_numbers<[1], [1], [0], [0], [0, 0, 1, 0], [], []>} : vector<8x8xbf16>, vector<8x8xbf16>, vector<8x8xf32> -> vector<8x8xf32>
    %cst_182 = arith.constant 0.353553385 : f32
    %499 = vector.broadcast %cst_182 : f32 to vector<8x8xf32>
    %500 = arith.mulf %498, %499 : vector<8x8xf32>
    %cst_183 = arith.constant dense<0xFF800000> : vector<8xf32>
    %501 = vector.multi_reduction <maximumf>, %500, %cst_183 [1] : vector<8x8xf32> to vector<8xf32>
    %502 = vector.shape_cast %501 : vector<8xf32> to vector<8x1xf32>
    %503 = vector.broadcast %502 : vector<8x1xf32> to vector<8x8xf32>
    %504 = arith.subf %500, %503 : vector<8x8xf32>
    %505 = math.exp %504 : vector<8x8xf32>
    %cst_184 = arith.constant dense<0.000000e+00> : vector<8xf32>
    %506 = vector.multi_reduction <add>, %505, %cst_184 [1] : vector<8x8xf32> to vector<8xf32>
    %507 = vector.shape_cast %506 : vector<8xf32> to vector<8x1xf32>
    %508 = tpu.reciprocal %507 {approx = true} : vector<8x1xf32> -> vector<8x1xf32>
    %509 = vector.broadcast %508 : vector<8x1xf32> to vector<8x8xf32>
    %510 = arith.mulf %505, %509 : vector<8x8xf32>
    %511 = arith.truncf %510 : vector<8x8xf32> to vector<8x8xbf16>
    %cst_185 = arith.constant dense<0.000000e+00> : vector<8x8xf32>
    %512 = tpu.matmul %511, %497, %cst_185 {dimension_numbers = #tpu.dot_dimension_numbers<[1], [0], [0], [1], [0, 0, 1, 1], [], []>} : vector<8x8xbf16>, vector<8x8xbf16>, vector<8x8xf32> -> vector<8x8xf32>
    %c0_186 = arith.constant 0 : index
    %c16_187 = arith.constant 16 : index
    %513 = vector.load %arg25[%c0_186, %c16_187] : memref<8x32xf32, #tpu.memory_space<vmem>>, vector<8x8xf32>
    tpu.vector_store %arg25[%c0_186, %c16_187], %512 {strides = array<i32>} : memref<8x32xf32, #tpu.memory_space<vmem>>, vector<8x8xf32>,
    %514 = vector.extract_strided_slice %447 {offsets = [0, 24], sizes = [8, 8], strides = [1, 1]} : vector<8x32xf32> to vector<8x8xf32>
    %515 = arith.truncf %514 : vector<8x8xf32> to vector<8x8xbf16>
    %516 = vector.extract_strided_slice %35 {offsets = [0, 24], sizes = [8, 8], strides = [1, 1]} : vector<8x32xf32> to vector<8x8xf32>
    %517 = arith.truncf %516 : vector<8x8xf32> to vector<8x8xbf16>
    %518 = vector.extract_strided_slice %36 {offsets = [0, 24], sizes = [8, 8], strides = [1, 1]} : vector<8x32xf32> to vector<8x8xf32>
    %519 = arith.truncf %518 : vector<8x8xf32> to vector<8x8xbf16>
    %cst_188 = arith.constant dense<0.000000e+00> : vector<8x8xf32>
    %520 = tpu.matmul %515, %517, %cst_188 {dimension_numbers = #tpu.dot_dimension_numbers<[1], [1], [0], [0], [0, 0, 1, 0], [], []>} : vector<8x8xbf16>, vector<8x8xbf16>, vector<8x8xf32> -> vector<8x8xf32>
    %cst_189 = arith.constant 0.353553385 : f32
    %521 = vector.broadcast %cst_189 : f32 to vector<8x8xf32>
    %522 = arith.mulf %520, %521 : vector<8x8xf32>
    %cst_190 = arith.constant dense<0xFF800000> : vector<8xf32>
    %523 = vector.multi_reduction <maximumf>, %522, %cst_190 [1] : vector<8x8xf32> to vector<8xf32>
    %524 = vector.shape_cast %523 : vector<8xf32> to vector<8x1xf32>
    %525 = vector.broadcast %524 : vector<8x1xf32> to vector<8x8xf32>
    %526 = arith.subf %522, %525 : vector<8x8xf32>
    %527 = math.exp %526 : vector<8x8xf32>
    %cst_191 = arith.constant dense<0.000000e+00> : vector<8xf32>
    %528 = vector.multi_reduction <add>, %527, %cst_191 [1] : vector<8x8xf32> to vector<8xf32>
    %529 = vector.shape_cast %528 : vector<8xf32> to vector<8x1xf32>
    %530 = tpu.reciprocal %529 {approx = true} : vector<8x1xf32> -> vector<8x1xf32>
    %531 = vector.broadcast %530 : vector<8x1xf32> to vector<8x8xf32>
    %532 = arith.mulf %527, %531 : vector<8x8xf32>
    %533 = arith.truncf %532 : vector<8x8xf32> to vector<8x8xbf16>
    %cst_192 = arith.constant dense<0.000000e+00> : vector<8x8xf32>
    %534 = tpu.matmul %533, %519, %cst_192 {dimension_numbers = #tpu.dot_dimension_numbers<[1], [0], [0], [1], [0, 0, 1, 1], [], []>} : vector<8x8xbf16>, vector<8x8xbf16>, vector<8x8xf32> -> vector<8x8xf32>
    %c0_193 = arith.constant 0 : index
    %c24_194 = arith.constant 24 : index
    %535 = vector.load %arg25[%c0_193, %c24_194] : memref<8x32xf32, #tpu.memory_space<vmem>>, vector<8x8xf32>
    tpu.vector_store %arg25[%c0_193, %c24_194], %534 {strides = array<i32>} : memref<8x32xf32, #tpu.memory_space<vmem>>, vector<8x8xf32>,
    %c0_195 = arith.constant 0 : index
    %c0_196 = arith.constant 0 : index
    %536 = vector.load %arg25[%c0_195, %c0_196] : memref<8x32xf32, #tpu.memory_space<vmem>>, vector<8x32xf32>
    %537 = arith.truncf %536 : vector<8x32xf32> to vector<8x32xbf16>
    %cst_197 = arith.constant dense<0.000000e+00> : vector<8x32xf32>
    %538 = tpu.matmul %537, %19, %cst_197 {dimension_numbers = #tpu.dot_dimension_numbers<[1], [0], [0], [1], [0, 0, 1, 1], [], []>} : vector<8x32xbf16>, vector<32x32xbf16>, vector<8x32xf32> -> vector<8x32xf32>
    %539 = vector.broadcast %20 : vector<1x32xf32> to vector<8x32xf32>
    %540 = arith.addf %538, %539 : vector<8x32xf32>
    %541 = arith.addf %540, %443 : vector<8x32xf32>
    %cst_198 = arith.constant dense<0.000000e+00> : vector<8xf32>
    %542 = vector.multi_reduction <add>, %541, %cst_198 [1] : vector<8x32xf32> to vector<8xf32>
    %543 = vector.shape_cast %542 : vector<8xf32> to vector<8x1xf32>
    %cst_199 = arith.constant 3.200000e+01 : f32
    %544 = vector.broadcast %cst_199 : f32 to vector<8x1xf32>
    %545 = arith.divf %543, %544 : vector<8x1xf32>
    %546 = vector.broadcast %545 : vector<8x1xf32> to vector<8x32xf32>
    %547 = arith.subf %541, %546 : vector<8x32xf32>
    %548 = arith.mulf %547, %547 : vector<8x32xf32>
    %cst_200 = arith.constant dense<0.000000e+00> : vector<8xf32>
    %549 = vector.multi_reduction <add>, %548, %cst_200 [1] : vector<8x32xf32> to vector<8xf32>
    %550 = vector.shape_cast %549 : vector<8xf32> to vector<8x1xf32>
    %cst_201 = arith.constant 3.200000e+01 : f32
    %551 = vector.broadcast %cst_201 : f32 to vector<8x1xf32>
    %552 = arith.divf %550, %551 : vector<8x1xf32>
    %cst_202 = arith.constant 9.99999974E-6 : f32
    %553 = vector.broadcast %cst_202 : f32 to vector<8x1xf32>
    %554 = arith.addf %552, %553 : vector<8x1xf32>
    %555 = math.rsqrt %554 : vector<8x1xf32>
    %556 = vector.broadcast %555 : vector<8x1xf32> to vector<8x32xf32>
    %557 = arith.mulf %547, %556 : vector<8x32xf32>
    %558 = vector.broadcast %27 : vector<1x32xf32> to vector<8x32xf32>
    %559 = arith.mulf %557, %558 : vector<8x32xf32>
    %560 = vector.broadcast %28 : vector<1x32xf32> to vector<8x32xf32>
    %561 = arith.addf %559, %560 : vector<8x32xf32>
    %562 = arith.truncf %561 : vector<8x32xf32> to vector<8x32xbf16>
    %cst_203 = arith.constant dense<0.000000e+00> : vector<8x64xf32>
    %563 = tpu.matmul %562, %21, %cst_203 {dimension_numbers = #tpu.dot_dimension_numbers<[1], [0], [0], [1], [0, 0, 1, 1], [], []>} : vector<8x32xbf16>, vector<32x64xbf16>, vector<8x64xf32> -> vector<8x64xf32>
    %564 = vector.broadcast %22 : vector<1x64xf32> to vector<8x64xf32>
    %565 = arith.addf %563, %564 : vector<8x64xf32>
    %cst_204 = arith.constant 0.000000e+00 : f32
    %566 = vector.broadcast %cst_204 : f32 to vector<8x64xf32>
    %567 = arith.maximumf %565, %566 : vector<8x64xf32>
    %568 = arith.truncf %567 : vector<8x64xf32> to vector<8x64xbf16>
    %cst_205 = arith.constant dense<0.000000e+00> : vector<8x32xf32>
    %569 = tpu.matmul %568, %23, %cst_205 {dimension_numbers = #tpu.dot_dimension_numbers<[1], [0], [0], [1], [0, 0, 1, 1], [], []>} : vector<8x64xbf16>, vector<64x32xbf16>, vector<8x32xf32> -> vector<8x32xf32>
    %570 = vector.broadcast %24 : vector<1x32xf32> to vector<8x32xf32>
    %571 = arith.addf %569, %570 : vector<8x32xf32>
    %572 = arith.addf %571, %561 : vector<8x32xf32>
    %cst_206 = arith.constant dense<0.000000e+00> : vector<8xf32>
    %573 = vector.multi_reduction <add>, %572, %cst_206 [1] : vector<8x32xf32> to vector<8xf32>
    %574 = vector.shape_cast %573 : vector<8xf32> to vector<8x1xf32>
    %cst_207 = arith.constant 3.200000e+01 : f32
    %575 = vector.broadcast %cst_207 : f32 to vector<8x1xf32>
    %576 = arith.divf %574, %575 : vector<8x1xf32>
    %577 = vector.broadcast %576 : vector<8x1xf32> to vector<8x32xf32>
    %578 = arith.subf %572, %577 : vector<8x32xf32>
    %579 = arith.mulf %578, %578 : vector<8x32xf32>
    %cst_208 = arith.constant dense<0.000000e+00> : vector<8xf32>
    %580 = vector.multi_reduction <add>, %579, %cst_208 [1] : vector<8x32xf32> to vector<8xf32>
    %581 = vector.shape_cast %580 : vector<8xf32> to vector<8x1xf32>
    %cst_209 = arith.constant 3.200000e+01 : f32
    %582 = vector.broadcast %cst_209 : f32 to vector<8x1xf32>
    %583 = arith.divf %581, %582 : vector<8x1xf32>
    %cst_210 = arith.constant 9.99999974E-6 : f32
    %584 = vector.broadcast %cst_210 : f32 to vector<8x1xf32>
    %585 = arith.addf %583, %584 : vector<8x1xf32>
    %586 = math.rsqrt %585 : vector<8x1xf32>
    %587 = vector.broadcast %586 : vector<8x1xf32> to vector<8x32xf32>
    %588 = arith.mulf %578, %587 : vector<8x32xf32>
    %589 = vector.broadcast %29 : vector<1x32xf32> to vector<8x32xf32>
    %590 = arith.mulf %588, %589 : vector<8x32xf32>
    %591 = vector.broadcast %30 : vector<1x32xf32> to vector<8x32xf32>
    %592 = arith.addf %590, %591 : vector<8x32xf32>
    %c0_211 = arith.constant 0 : index
    %c0_212 = arith.constant 0 : index
    %c0_213 = arith.constant 0 : index
    %593 = vector.load %arg24[%c0_211, %c0_212, %c0_213] : memref<1x8x32xf32, #tpu.memory_space<vmem>>, vector<1x8x32xf32>
    %594 = vector.shape_cast %593 : vector<1x8x32xf32> to vector<8x32xf32>
    %595 = vector.shape_cast %592 : vector<8x32xf32> to vector<1x8x32xf32>
    tpu.vector_store %arg24[%c0_211, %c0_212, %c0_213], %595 {strides = array<i32>} : memref<1x8x32xf32, #tpu.memory_space<vmem>>, vector<1x8x32xf32>,
    return
  }
  func.func @transform_0(%arg0: i32) -> (i32, i32, i32) {
    %c0_i32 = arith.constant 0 : i32
    %c0_i32_0 = arith.constant 0 : i32
    %c0_i32_1 = arith.constant 0 : i32
    return %arg0, %c0_i32, %c0_i32_0 : i32, i32, i32
  }
  func.func @transform_1(%arg0: i32) -> (i32, i32, i32) {
    %c0_i32 = arith.constant 0 : i32
    %c0_i32_0 = arith.constant 0 : i32
    %c0_i32_1 = arith.constant 0 : i32
    return %arg0, %c0_i32, %c0_i32_0 : i32, i32, i32
  }
  func.func @transform_2(%arg0: i32) -> (i32, i32, i32) {
    %c0_i32 = arith.constant 0 : i32
    %c0_i32_0 = arith.constant 0 : i32
    %c0_i32_1 = arith.constant 0 : i32
    return %arg0, %c0_i32, %c0_i32_0 : i32, i32, i32
  }
  func.func @transform_3(%arg0: i32) -> (i32, i32) {
    %c0_i32 = arith.constant 0 : i32
    %c0_i32_0 = arith.constant 0 : i32
    %c0_i32_1 = arith.constant 0 : i32
    return %c0_i32, %c0_i32_0 : i32, i32
  }
  func.func @transform_4(%arg0: i32) -> (i32, i32) {
    %c0_i32 = arith.constant 0 : i32
    %c0_i32_0 = arith.constant 0 : i32
    %c0_i32_1 = arith.constant 0 : i32
    return %c0_i32, %c0_i32_0 : i32, i32
  }
  func.func @transform_5(%arg0: i32) -> (i32, i32) {
    %c0_i32 = arith.constant 0 : i32
    %c0_i32_0 = arith.constant 0 : i32
    %c0_i32_1 = arith.constant 0 : i32
    return %c0_i32, %c0_i32_0 : i32, i32
  }
  func.func @transform_6(%arg0: i32) -> (i32, i32) {
    %c0_i32 = arith.constant 0 : i32
    %c0_i32_0 = arith.constant 0 : i32
    %c0_i32_1 = arith.constant 0 : i32
    return %c0_i32, %c0_i32_0 : i32, i32
  }
  func.func @transform_7(%arg0: i32) -> (i32, i32) {
    %c0_i32 = arith.constant 0 : i32
    %c0_i32_0 = arith.constant 0 : i32
    %c0_i32_1 = arith.constant 0 : i32
    return %c0_i32, %c0_i32_0 : i32, i32
  }
  func.func @transform_8(%arg0: i32) -> (i32, i32) {
    %c0_i32 = arith.constant 0 : i32
    %c0_i32_0 = arith.constant 0 : i32
    %c0_i32_1 = arith.constant 0 : i32
    return %c0_i32, %c0_i32_0 : i32, i32
  }
  func.func @transform_9(%arg0: i32) -> (i32, i32) {
    %c0_i32 = arith.constant 0 : i32
    %c0_i32_0 = arith.constant 0 : i32
    %c0_i32_1 = arith.constant 0 : i32
    return %c0_i32, %c0_i32_0 : i32, i32
  }
  func.func @transform_10(%arg0: i32) -> (i32, i32) {
    %c0_i32 = arith.constant 0 : i32
    %c0_i32_0 = arith.constant 0 : i32
    %c0_i32_1 = arith.constant 0 : i32
    return %c0_i32, %c0_i32_0 : i32, i32
  }
  func.func @transform_11(%arg0: i32) -> (i32, i32) {
    %c0_i32 = arith.constant 0 : i32
    %c0_i32_0 = arith.constant 0 : i32
    %c0_i32_1 = arith.constant 0 : i32
    return %c0_i32, %c0_i32_0 : i32, i32
  }
  func.func @transform_12(%arg0: i32) -> (i32, i32) {
    %c0_i32 = arith.constant 0 : i32
    %c0_i32_0 = arith.constant 0 : i32
    %c0_i32_1 = arith.constant 0 : i32
    return %c0_i32, %c0_i32_0 : i32, i32
  }
  func.func @transform_13(%arg0: i32) -> (i32, i32) {
    %c0_i32 = arith.constant 0 : i32
    %c0_i32_0 = arith.constant 0 : i32
    %c0_i32_1 = arith.constant 0 : i32
    return %c0_i32, %c0_i32_0 : i32, i32
  }
  func.func @transform_14(%arg0: i32) -> (i32, i32) {
    %c0_i32 = arith.constant 0 : i32
    %c0_i32_0 = arith.constant 0 : i32
    %c0_i32_1 = arith.constant 0 : i32
    return %c0_i32, %c0_i32_0 : i32, i32
  }
  func.func @transform_15(%arg0: i32) -> (i32, i32) {
    %c0_i32 = arith.constant 0 : i32
    %c0_i32_0 = arith.constant 0 : i32
    %c0_i32_1 = arith.constant 0 : i32
    return %c0_i32, %c0_i32_0 : i32, i32
  }
  func.func @transform_16(%arg0: i32) -> (i32, i32) {
    %c0_i32 = arith.constant 0 : i32
    %c0_i32_0 = arith.constant 0 : i32
    %c0_i32_1 = arith.constant 0 : i32
    return %c0_i32, %c0_i32_0 : i32, i32
  }
  func.func @transform_17(%arg0: i32) -> (i32, i32) {
    %c0_i32 = arith.constant 0 : i32
    %c0_i32_0 = arith.constant 0 : i32
    %c0_i32_1 = arith.constant 0 : i32
    return %c0_i32, %c0_i32_0 : i32, i32
  }
  func.func @transform_18(%arg0: i32) -> (i32, i32) {
    %c0_i32 = arith.constant 0 : i32
    %c0_i32_0 = arith.constant 0 : i32
    %c0_i32_1 = arith.constant 0 : i32
    return %c0_i32, %c0_i32_0 : i32, i32
  }
  func.func @transform_19(%arg0: i32) -> (i32, i32) {
    %c0_i32 = arith.constant 0 : i32
    %c0_i32_0 = arith.constant 0 : i32
    %c0_i32_1 = arith.constant 0 : i32
    return %c0_i32, %c0_i32_0 : i32, i32
  }
  func.func @transform_20(%arg0: i32) -> (i32, i32) {
    %c0_i32 = arith.constant 0 : i32
    %c0_i32_0 = arith.constant 0 : i32
    %c0_i32_1 = arith.constant 0 : i32
    return %c0_i32, %c0_i32_0 : i32, i32
  }
  func.func @transform_21(%arg0: i32) -> (i32, i32) {
    %c0_i32 = arith.constant 0 : i32
    %c0_i32_0 = arith.constant 0 : i32
    %c0_i32_1 = arith.constant 0 : i32
    return %c0_i32, %c0_i32_0 : i32, i32
  }
  func.func @transform_22(%arg0: i32) -> (i32, i32) {
    %c0_i32 = arith.constant 0 : i32
    %c0_i32_0 = arith.constant 0 : i32
    %c0_i32_1 = arith.constant 0 : i32
    return %c0_i32, %c0_i32_0 : i32, i32
  }
  func.func @transform_23(%arg0: i32) -> (i32, i32, i32) {
    %c0_i32 = arith.constant 0 : i32
    %c0_i32_0 = arith.constant 0 : i32
    %c0_i32_1 = arith.constant 0 : i32
    return %arg0, %c0_i32, %c0_i32_0 : i32, i32, i32
  }
}

</mosaic_0001>

<llo_original>
// kernel: encoder_forward.1
$region0: #{encoder_forward.1}
  #allocation0 [shape = 'u32[]', space=smem, size = 0x4, offset = 0x4, fixed_abs, tag = 'smem constant byte address 0x4 - core index']
  #allocation1 [shape = 'u32[72,128]{1,0:T(1,128)}', space=vmem, size = 0x9000, scoped, tag = 'internal scratch']
  #allocation2 [shape = 'f32[8,32]{1,0:T(8,128)}', space=vmem, size = 0x1000, scoped, tag = 'scratch operand']
  %s0 = inlined_call_operand.vmem [shape: f32[2,8,32], index: 0, kind: input, shape index: {}]
  %s1 = inlined_call_operand.vmem [shape: f32[2,8,32], index: 1, kind: input, shape index: {}]
  %s2 = inlined_call_operand.vmem [shape: s32[2,1,8], index: 2, kind: input, shape index: {}]
  %s3 = inlined_call_operand.vmem [shape: bf16[32,96], index: 3, kind: input, shape index: {}]
  %s4 = inlined_call_operand.vmem [shape: f32[1,96], index: 4, kind: input, shape index: {}]
  %s5 = inlined_call_operand.vmem [shape: bf16[32,32], index: 5, kind: input, shape index: {}]
  %s6 = inlined_call_operand.vmem [shape: f32[1,32], index: 6, kind: input, shape index: {}]
  %s7 = inlined_call_operand.vmem [shape: bf16[32,32], index: 7, kind: input, shape index: {}]
  %s8 = inlined_call_operand.vmem [shape: f32[1,32], index: 8, kind: input, shape index: {}]
  %s9 = inlined_call_operand.vmem [shape: bf16[32,64], index: 9, kind: input, shape index: {}]
  %s10 = inlined_call_operand.vmem [shape: f32[1,64], index: 10, kind: input, shape index: {}]
  %s11 = inlined_call_operand.vmem [shape: bf16[32,32], index: 11, kind: input, shape index: {}]
  %s12 = inlined_call_operand.vmem [shape: f32[1,32], index: 12, kind: input, shape index: {}]
  %s13 = inlined_call_operand.vmem [shape: bf16[32,64], index: 13, kind: input, shape index: {}]
  %s14 = inlined_call_operand.vmem [shape: f32[1,64], index: 14, kind: input, shape index: {}]
  %s15 = inlined_call_operand.vmem [shape: bf16[64,32], index: 15, kind: input, shape index: {}]
  %s16 = inlined_call_operand.vmem [shape: f32[1,32], index: 16, kind: input, shape index: {}]
  %s17 = inlined_call_operand.vmem [shape: f32[1,32], index: 17, kind: input, shape index: {}]
  %s18 = inlined_call_operand.vmem [shape: f32[1,32], index: 18, kind: input, shape index: {}]
  %s19 = inlined_call_operand.vmem [shape: f32[1,32], index: 19, kind: input, shape index: {}]
  %s20 = inlined_call_operand.vmem [shape: f32[1,32], index: 20, kind: input, shape index: {}]
  %s21 = inlined_call_operand.vmem [shape: f32[1,32], index: 21, kind: input, shape index: {}]
  %s22 = inlined_call_operand.vmem [shape: f32[1,32], index: 22, kind: input, shape index: {}]
  %s23 = inlined_call_operand.hbm [shape: f32[2,8,32], index: 23, kind: output, shape index: {}]
  %s24 = sld [smem:[#allocation0]]
  $region125: #{encoder_forward.1} parent=0
    _
  %s26 = ssub.s32 1, %s24
  %s27 = scalar_select 0, %s26, %s24
  $region1: #{encoder_forward.1} parent=0
    #allocation3 [shape = 'u8[8192]{0}', space=vmem, size = 0x2000, scoped, tag = 'output window, operand 0']
    #allocation4 [shape = 's32[2]{0}', space=sflag, size = 0x8, scoped, tag = 'scoped memory for encoder_forward.1']
    %28 = vsyncpa [#allocation4], 0
    %s29 = scalar_lea.sflag [#allocation4], 1
    %30 = vsyncpa %s29, 0
    loop: start=0, step=1, limit=4
    $region2: #{encoder_forward.1} parent=1 // loop_pre_header
      _
    $region3: #{encoder_forward.1} parent=1 // loop_header
      %s32 = sphi 0, %s36
      %p33 = scmp.ge.s32.totalorder %s32, 4
      %s42 = sphi 0, %s44
      %s45 = sphi 0, %s42
      %s46 = sphi 0, %s45
      %s62 = sphi 0, %s46
      %s68 = sphi 0, %s70
      %s71 = sphi 0, %s68
      %s72 = sphi 0, %s71
      %s88 = sphi 0, %s72
      %s94 = sphi 0, %s96
      %s97 = sphi 0, %s94
      %s98 = sphi 0, %s97
      %s114 = sphi 0, %s98
      %s118 = sphi 0, %s118
      %s120 = sphi 0, %s118
      %s121 = sphi 0, %s120
      %s135 = sphi 0, %s121
      %s139 = sphi 0, %s139
      %s141 = sphi 0, %s139
      %s142 = sphi 0, %s141
      %s156 = sphi 0, %s142
      %s160 = sphi 0, %s160
      %s162 = sphi 0, %s160
      %s163 = sphi 0, %s162
      %s177 = sphi 0, %s163
      %s181 = sphi 0, %s181
      %s183 = sphi 0, %s181
      %s184 = sphi 0, %s183
      %s198 = sphi 0, %s184
      %s202 = sphi 0, %s202
      %s204 = sphi 0, %s202
      %s205 = sphi 0, %s204
      %s219 = sphi 0, %s205
      %s223 = sphi 0, %s223
      %s225 = sphi 0, %s223
      %s226 = sphi 0, %s225
      %s240 = sphi 0, %s226
      %s244 = sphi 0, %s244
      %s246 = sphi 0, %s244
      %s247 = sphi 0, %s246
      %s261 = sphi 0, %s247
      %s265 = sphi 0, %s265
      %s267 = sphi 0, %s265
      %s268 = sphi 0, %s267
      %s282 = sphi 0, %s268
      %s286 = sphi 0, %s286
      %s288 = sphi 0, %s286
      %s289 = sphi 0, %s288
      %s303 = sphi 0, %s289
      %s307 = sphi 0, %s307
      %s309 = sphi 0, %s307
      %s310 = sphi 0, %s309
      %s324 = sphi 0, %s310
      %s328 = sphi 0, %s328
      %s330 = sphi 0, %s328
      %s331 = sphi 0, %s330
      %s345 = sphi 0, %s331
      %s349 = sphi 0, %s349
      %s351 = sphi 0, %s349
      %s352 = sphi 0, %s351
      %s366 = sphi 0, %s352
      %s370 = sphi 0, %s370
      %s372 = sphi 0, %s370
      %s373 = sphi 0, %s372
      %s387 = sphi 0, %s373
      %s391 = sphi 0, %s391
      %s393 = sphi 0, %s391
      %s394 = sphi 0, %s393
      %s408 = sphi 0, %s394
      %s412 = sphi 0, %s412
      %s414 = sphi 0, %s412
      %s415 = sphi 0, %s414
      %s429 = sphi 0, %s415
      %s433 = sphi 0, %s433
      %s435 = sphi 0, %s433
      %s436 = sphi 0, %s435
      %s450 = sphi 0, %s436
      %s454 = sphi 0, %s454
      %s456 = sphi 0, %s454
      %s457 = sphi 0, %s456
      %s471 = sphi 0, %s457
      %s475 = sphi 0, %s475
      %s477 = sphi 0, %s475
      %s478 = sphi 0, %s477
      %s492 = sphi 0, %s478
      %s496 = sphi 0, %s496
      %s498 = sphi 0, %s496
      %s499 = sphi 0, %s498
      %s513 = sphi 0, %s499
      %s517 = sphi 0, %s517
      %s519 = sphi 0, %s517
      %s520 = sphi 0, %s519
      %s534 = sphi 0, %s520
      %s540 = sphi 0, %s542
      %s543 = sphi 0, %s540
      %s544 = sphi 0, %s543
      %s560 = sphi 0, %s544
    $region4: #{encoder_forward.1} parent=1 // loop_header_branch
      %35 = sbr.rel (%p33) target = $region8
    $region5: #{encoder_forward.1} parent=1 // loop_body
      %s37 = ssub.s32 %s32, 1
      %s38 = ssub.s32 %s32, 2
      %s39 = sadd.s32 %s32, 1
      %s40 = ssub.s32 %s32, %s39
      %p41 = scmp.eq.s32.totalorder %s40, 0
      %s43 = sadd.s32 %s42, 1
      %s44 = scalar_select %p41, %s42, %s43
      %p47 = pneg %p41
      %p48 = scmp.eq.s32.totalorder %s32, 1
      %p49 = por %p47, %p48
      %p50 = scmp.ne.s32.totalorder %s42, %s45
      %p51 = scmp.eq.s32.totalorder %s32, 0
      %p52 = por %p50, %p51
      %p53 = scmp.ne.s32.totalorder %s42, %s45
      %p54 = scmp.eq.s32.totalorder %s37, 1
      %p55 = por %p53, %p54
      %p56 = scmp.ne.s32.totalorder %s45, %s46
      %p57 = scmp.eq.s32.totalorder %s37, 0
      %p58 = por %p56, %p57
      %p59 = scmp.ne.s32.totalorder %s45, %s46
      %p60 = scmp.eq.s32.totalorder %s38, 1
      %p61 = por %p59, %p60
      %p63 = scmp.ne.s32.totalorder %s46, %s62
      %p64 = scmp.eq.s32.totalorder %s38, 0
      %p65 = por %p63, %p64
      %s66 = ssub.s32 %s32, %s39
      %p67 = scmp.eq.s32.totalorder %s66, 0
      %s69 = sadd.s32 %s68, 1
      %s70 = scalar_select %p67, %s68, %s69
      %p73 = pneg %p67
      %p74 = scmp.eq.s32.totalorder %s32, 1
      %p75 = por %p73, %p74
      %p76 = scmp.ne.s32.totalorder %s68, %s71
      %p77 = scmp.eq.s32.totalorder %s32, 0
      %p78 = por %p76, %p77
      %p79 = scmp.ne.s32.totalorder %s68, %s71
      %p80 = scmp.eq.s32.totalorder %s37, 1
      %p81 = por %p79, %p80
      %p82 = scmp.ne.s32.totalorder %s71, %s72
      %p83 = scmp.eq.s32.totalorder %s37, 0
      %p84 = por %p82, %p83
      %p85 = scmp.ne.s32.totalorder %s71, %s72
      %p86 = scmp.eq.s32.totalorder %s38, 1
      %p87 = por %p85, %p86
      %p89 = scmp.ne.s32.totalorder %s72, %s88
      %p90 = scmp.eq.s32.totalorder %s38, 0
      %p91 = por %p89, %p90
      %s92 = ssub.s32 %s32, %s39
      %p93 = scmp.eq.s32.totalorder %s92, 0
      %s95 = sadd.s32 %s94, 1
      %s96 = scalar_select %p93, %s94, %s95
      %p99 = pneg %p93
      %p100 = scmp.eq.s32.totalorder %s32, 1
      %p101 = por %p99, %p100
      %p102 = scmp.ne.s32.totalorder %s94, %s97
      %p103 = scmp.eq.s32.totalorder %s32, 0
      %p104 = por %p102, %p103
      %p105 = scmp.ne.s32.totalorder %s94, %s97
      %p106 = scmp.eq.s32.totalorder %s37, 1
      %p107 = por %p105, %p106
      %p108 = scmp.ne.s32.totalorder %s97, %s98
      %p109 = scmp.eq.s32.totalorder %s37, 0
      %p110 = por %p108, %p109
      %p111 = scmp.ne.s32.totalorder %s97, %s98
      %p112 = scmp.eq.s32.totalorder %s38, 1
      %p113 = por %p111, %p112
      %p115 = scmp.ne.s32.totalorder %s98, %s114
      %p116 = scmp.eq.s32.totalorder %s38, 0
      %p117 = por %p115, %p116
      %s119 = sadd.s32 %s118, 1
      %p122 = scmp.eq.s32.totalorder %s32, 1
      %p123 = scmp.ne.s32.totalorder %s118, %s120
      %p124 = scmp.eq.s32.totalorder %s32, 0
      %p125 = por %p123, %p124
      %p126 = scmp.ne.s32.totalorder %s118, %s120
      %p127 = scmp.eq.s32.totalorder %s37, 1
      %p128 = por %p126, %p127
      %p129 = scmp.ne.s32.totalorder %s120, %s121
      %p130 = scmp.eq.s32.totalorder %s37, 0
      %p131 = por %p129, %p130
      %p132 = scmp.ne.s32.totalorder %s120, %s121
      %p133 = scmp.eq.s32.totalorder %s38, 1
      %p134 = por %p132, %p133
      %p136 = scmp.ne.s32.totalorder %s121, %s135
      %p137 = scmp.eq.s32.totalorder %s38, 0
      %p138 = por %p136, %p137
      %s140 = sadd.s32 %s139, 1
      %p143 = scmp.eq.s32.totalorder %s32, 1
      %p144 = scmp.ne.s32.totalorder %s139, %s141
      %p145 = scmp.eq.s32.totalorder %s32, 0
      %p146 = por %p144, %p145
      %p147 = scmp.ne.s32.totalorder %s139, %s141
      %p148 = scmp.eq.s32.totalorder %s37, 1
      %p149 = por %p147, %p148
      %p150 = scmp.ne.s32.totalorder %s141, %s142
      %p151 = scmp.eq.s32.totalorder %s37, 0
      %p152 = por %p150, %p151
      %p153 = scmp.ne.s32.totalorder %s141, %s142
      %p154 = scmp.eq.s32.totalorder %s38, 1
      %p155 = por %p153, %p154
      %p157 = scmp.ne.s32.totalorder %s142, %s156
      %p158 = scmp.eq.s32.totalorder %s38, 0
      %p159 = por %p157, %p158
      %s161 = sadd.s32 %s160, 1
      %p164 = scmp.eq.s32.totalorder %s32, 1
      %p165 = scmp.ne.s32.totalorder %s160, %s162
      %p166 = scmp.eq.s32.totalorder %s32, 0
      %p167 = por %p165, %p166
      %p168 = scmp.ne.s32.totalorder %s160, %s162
      %p169 = scmp.eq.s32.totalorder %s37, 1
      %p170 = por %p168, %p169
      %p171 = scmp.ne.s32.totalorder %s162, %s163
      %p172 = scmp.eq.s32.totalorder %s37, 0
      %p173 = por %p171, %p172
      %p174 = scmp.ne.s32.totalorder %s162, %s163
      %p175 = scmp.eq.s32.totalorder %s38, 1
      %p176 = por %p174, %p175
      %p178 = scmp.ne.s32.totalorder %s163, %s177
      %p179 = scmp.eq.s32.totalorder %s38, 0
      %p180 = por %p178, %p179
      %s182 = sadd.s32 %s181, 1
      %p185 = scmp.eq.s32.totalorder %s32, 1
      %p186 = scmp.ne.s32.totalorder %s181, %s183
      %p187 = scmp.eq.s32.totalorder %s32, 0
      %p188 = por %p186, %p187
      %p189 = scmp.ne.s32.totalorder %s181, %s183
      %p190 = scmp.eq.s32.totalorder %s37, 1
      %p191 = por %p189, %p190
      %p192 = scmp.ne.s32.totalorder %s183, %s184
      %p193 = scmp.eq.s32.totalorder %s37, 0
      %p194 = por %p192, %p193
      %p195 = scmp.ne.s32.totalorder %s183, %s184
      %p196 = scmp.eq.s32.totalorder %s38, 1
      %p197 = por %p195, %p196
      %p199 = scmp.ne.s32.totalorder %s184, %s198
      %p200 = scmp.eq.s32.totalorder %s38, 0
      %p201 = por %p199, %p200
      %s203 = sadd.s32 %s202, 1
      %p206 = scmp.eq.s32.totalorder %s32, 1
      %p207 = scmp.ne.s32.totalorder %s202, %s204
      %p208 = scmp.eq.s32.totalorder %s32, 0
      %p209 = por %p207, %p208
      %p210 = scmp.ne.s32.totalorder %s202, %s204
      %p211 = scmp.eq.s32.totalorder %s37, 1
      %p212 = por %p210, %p211
      %p213 = scmp.ne.s32.totalorder %s204, %s205
      %p214 = scmp.eq.s32.totalorder %s37, 0
      %p215 = por %p213, %p214
      %p216 = scmp.ne.s32.totalorder %s204, %s205
      %p217 = scmp.eq.s32.totalorder %s38, 1
      %p218 = por %p216, %p217
      %p220 = scmp.ne.s32.totalorder %s205, %s219
      %p221 = scmp.eq.s32.totalorder %s38, 0
      %p222 = por %p220, %p221
      %s224 = sadd.s32 %s223, 1
      %p227 = scmp.eq.s32.totalorder %s32, 1
      %p228 = scmp.ne.s32.totalorder %s223, %s225
      %p229 = scmp.eq.s32.totalorder %s32, 0
      %p230 = por %p228, %p229
      %p231 = scmp.ne.s32.totalorder %s223, %s225
      %p232 = scmp.eq.s32.totalorder %s37, 1
      %p233 = por %p231, %p232
      %p234 = scmp.ne.s32.totalorder %s225, %s226
      %p235 = scmp.eq.s32.totalorder %s37, 0
      %p236 = por %p234, %p235
      %p237 = scmp.ne.s32.totalorder %s225, %s226
      %p238 = scmp.eq.s32.totalorder %s38, 1
      %p239 = por %p237, %p238
      %p241 = scmp.ne.s32.totalorder %s226, %s240
      %p242 = scmp.eq.s32.totalorder %s38, 0
      %p243 = por %p241, %p242
      %s245 = sadd.s32 %s244, 1
      %p248 = scmp.eq.s32.totalorder %s32, 1
      %p249 = scmp.ne.s32.totalorder %s244, %s246
      %p250 = scmp.eq.s32.totalorder %s32, 0
      %p251 = por %p249, %p250
      %p252 = scmp.ne.s32.totalorder %s244, %s246
      %p253 = scmp.eq.s32.totalorder %s37, 1
      %p254 = por %p252, %p253
      %p255 = scmp.ne.s32.totalorder %s246, %s247
      %p256 = scmp.eq.s32.totalorder %s37, 0
      %p257 = por %p255, %p256
      %p258 = scmp.ne.s32.totalorder %s246, %s247
      %p259 = scmp.eq.s32.totalorder %s38, 1
      %p260 = por %p258, %p259
      %p262 = scmp.ne.s32.totalorder %s247, %s261
      %p263 = scmp.eq.s32.totalorder %s38, 0
      %p264 = por %p262, %p263
      %s266 = sadd.s32 %s265, 1
      %p269 = scmp.eq.s32.totalorder %s32, 1
      %p270 = scmp.ne.s32.totalorder %s265, %s267
      %p271 = scmp.eq.s32.totalorder %s32, 0
      %p272 = por %p270, %p271
      %p273 = scmp.ne.s32.totalorder %s265, %s267
      %p274 = scmp.eq.s32.totalorder %s37, 1
      %p275 = por %p273, %p274
      %p276 = scmp.ne.s32.totalorder %s267, %s268
      %p277 = scmp.eq.s32.totalorder %s37, 0
      %p278 = por %p276, %p277
      %p279 = scmp.ne.s32.totalorder %s267, %s268
      %p280 = scmp.eq.s32.totalorder %s38, 1
      %p281 = por %p279, %p280
      %p283 = scmp.ne.s32.totalorder %s268, %s282
      %p284 = scmp.eq.s32.totalorder %s38, 0
      %p285 = por %p283, %p284
      %s287 = sadd.s32 %s286, 1
      %p290 = scmp.eq.s32.totalorder %s32, 1
      %p291 = scmp.ne.s32.totalorder %s286, %s288
      %p292 = scmp.eq.s32.totalorder %s32, 0
      %p293 = por %p291, %p292
      %p294 = scmp.ne.s32.totalorder %s286, %s288
      %p295 = scmp.eq.s32.totalorder %s37, 1
      %p296 = por %p294, %p295
      %p297 = scmp.ne.s32.totalorder %s288, %s289
      %p298 = scmp.eq.s32.totalorder %s37, 0
      %p299 = por %p297, %p298
      %p300 = scmp.ne.s32.totalorder %s288, %s289
      %p301 = scmp.eq.s32.totalorder %s38, 1
      %p302 = por %p300, %p301
      %p304 = scmp.ne.s32.totalorder %s289, %s303
      %p305 = scmp.eq.s32.totalorder %s38, 0
      %p306 = por %p304, %p305
      %s308 = sadd.s32 %s307, 1
      %p311 = scmp.eq.s32.totalorder %s32, 1
      %p312 = scmp.ne.s32.totalorder %s307, %s309
      %p313 = scmp.eq.s32.totalorder %s32, 0
      %p314 = por %p312, %p313
      %p315 = scmp.ne.s32.totalorder %s307, %s309
      %p316 = scmp.eq.s32.totalorder %s37, 1
      %p317 = por %p315, %p316
      %p318 = scmp.ne.s32.totalorder %s309, %s310
      %p319 = scmp.eq.s32.totalorder %s37, 0
      %p320 = por %p318, %p319
      %p321 = scmp.ne.s32.totalorder %s309, %s310
      %p322 = scmp.eq.s32.totalorder %s38, 1
      %p323 = por %p321, %p322
      %p325 = scmp.ne.s32.totalorder %s310, %s324
      %p326 = scmp.eq.s32.totalorder %s38, 0
      %p327 = por %p325, %p326
      %s329 = sadd.s32 %s328, 1
      %p332 = scmp.eq.s32.totalorder %s32, 1
      %p333 = scmp.ne.s32.totalorder %s328, %s330
      %p334 = scmp.eq.s32.totalorder %s32, 0
      %p335 = por %p333, %p334
      %p336 = scmp.ne.s32.totalorder %s328, %s330
      %p337 = scmp.eq.s32.totalorder %s37, 1
      %p338 = por %p336, %p337
      %p339 = scmp.ne.s32.totalorder %s330, %s331
      %p340 = scmp.eq.s32.totalorder %s37, 0
      %p341 = por %p339, %p340
      %p342 = scmp.ne.s32.totalorder %s330, %s331
      %p343 = scmp.eq.s32.totalorder %s38, 1
      %p344 = por %p342, %p343
      %p346 = scmp.ne.s32.totalorder %s331, %s345
      %p347 = scmp.eq.s32.totalorder %s38, 0
      %p348 = por %p346, %p347
      %s350 = sadd.s32 %s349, 1
      %p353 = scmp.eq.s32.totalorder %s32, 1
      %p354 = scmp.ne.s32.totalorder %s349, %s351
      %p355 = scmp.eq.s32.totalorder %s32, 0
      %p356 = por %p354, %p355
      %p357 = scmp.ne.s32.totalorder %s349, %s351
      %p358 = scmp.eq.s32.totalorder %s37, 1
      %p359 = por %p357, %p358
      %p360 = scmp.ne.s32.totalorder %s351, %s352
      %p361 = scmp.eq.s32.totalorder %s37, 0
      %p362 = por %p360, %p361
      %p363 = scmp.ne.s32.totalorder %s351, %s352
      %p364 = scmp.eq.s32.totalorder %s38, 1
      %p365 = por %p363, %p364
      %p367 = scmp.ne.s32.totalorder %s352, %s366
      %p368 = scmp.eq.s32.totalorder %s38, 0
      %p369 = por %p367, %p368
      %s371 = sadd.s32 %s370, 1
      %p374 = scmp.eq.s32.totalorder %s32, 1
      %p375 = scmp.ne.s32.totalorder %s370, %s372
      %p376 = scmp.eq.s32.totalorder %s32, 0
      %p377 = por %p375, %p376
      %p378 = scmp.ne.s32.totalorder %s370, %s372
      %p379 = scmp.eq.s32.totalorder %s37, 1
      %p380 = por %p378, %p379
      %p381 = scmp.ne.s32.totalorder %s372, %s373
      %p382 = scmp.eq.s32.totalorder %s37, 0
      %p383 = por %p381, %p382
      %p384 = scmp.ne.s32.totalorder %s372, %s373
      %p385 = scmp.eq.s32.totalorder %s38, 1
      %p386 = por %p384, %p385
      %p388 = scmp.ne.s32.totalorder %s373, %s387
      %p389 = scmp.eq.s32.totalorder %s38, 0
      %p390 = por %p388, %p389
      %s392 = sadd.s32 %s391, 1
      %p395 = scmp.eq.s32.totalorder %s32, 1
      %p396 = scmp.ne.s32.totalorder %s391, %s393
      %p397 = scmp.eq.s32.totalorder %s32, 0
      %p398 = por %p396, %p397
      %p399 = scmp.ne.s32.totalorder %s391, %s393
      %p400 = scmp.eq.s32.totalorder %s37, 1
      %p401 = por %p399, %p400
      %p402 = scmp.ne.s32.totalorder %s393, %s394
      %p403 = scmp.eq.s32.totalorder %s37, 0
      %p404 = por %p402, %p403
      %p405 = scmp.ne.s32.totalorder %s393, %s394
      %p406 = scmp.eq.s32.totalorder %s38, 1
      %p407 = por %p405, %p406
      %p409 = scmp.ne.s32.totalorder %s394, %s408
      %p410 = scmp.eq.s32.totalorder %s38, 0
      %p411 = por %p409, %p410
      %s413 = sadd.s32 %s412, 1
      %p416 = scmp.eq.s32.totalorder %s32, 1
      %p417 = scmp.ne.s32.totalorder %s412, %s414
      %p418 = scmp.eq.s32.totalorder %s32, 0
      %p419 = por %p417, %p418
      %p420 = scmp.ne.s32.totalorder %s412, %s414
      %p421 = scmp.eq.s32.totalorder %s37, 1
      %p422 = por %p420, %p421
      %p423 = scmp.ne.s32.totalorder %s414, %s415
      %p424 = scmp.eq.s32.totalorder %s37, 0
      %p425 = por %p423, %p424
      %p426 = scmp.ne.s32.totalorder %s414, %s415
      %p427 = scmp.eq.s32.totalorder %s38, 1
      %p428 = por %p426, %p427
      %p430 = scmp.ne.s32.totalorder %s415, %s429
      %p431 = scmp.eq.s32.totalorder %s38, 0
      %p432 = por %p430, %p431
      %s434 = sadd.s32 %s433, 1
      %p437 = scmp.eq.s32.totalorder %s32, 1
      %p438 = scmp.ne.s32.totalorder %s433, %s435
      %p439 = scmp.eq.s32.totalorder %s32, 0
      %p440 = por %p438, %p439
      %p441 = scmp.ne.s32.totalorder %s433, %s435
      %p442 = scmp.eq.s32.totalorder %s37, 1
      %p443 = por %p441, %p442
      %p444 = scmp.ne.s32.totalorder %s435, %s436
      %p445 = scmp.eq.s32.totalorder %s37, 0
      %p446 = por %p444, %p445
      %p447 = scmp.ne.s32.totalorder %s435, %s436
      %p448 = scmp.eq.s32.totalorder %s38, 1
      %p449 = por %p447, %p448
      %p451 = scmp.ne.s32.totalorder %s436, %s450
      %p452 = scmp.eq.s32.totalorder %s38, 0
      %p453 = por %p451, %p452
      %s455 = sadd.s32 %s454, 1
      %p458 = scmp.eq.s32.totalorder %s32, 1
      %p459 = scmp.ne.s32.totalorder %s454, %s456
      %p460 = scmp.eq.s32.totalorder %s32, 0
      %p461 = por %p459, %p460
      %p462 = scmp.ne.s32.totalorder %s454, %s456
      %p463 = scmp.eq.s32.totalorder %s37, 1
      %p464 = por %p462, %p463
      %p465 = scmp.ne.s32.totalorder %s456, %s457
      %p466 = scmp.eq.s32.totalorder %s37, 0
      %p467 = por %p465, %p466
      %p468 = scmp.ne.s32.totalorder %s456, %s457
      %p469 = scmp.eq.s32.totalorder %s38, 1
      %p470 = por %p468, %p469
      %p472 = scmp.ne.s32.totalorder %s457, %s471
      %p473 = scmp.eq.s32.totalorder %s38, 0
      %p474 = por %p472, %p473
      %s476 = sadd.s32 %s475, 1
      %p479 = scmp.eq.s32.totalorder %s32, 1
      %p480 = scmp.ne.s32.totalorder %s475, %s477
      %p481 = scmp.eq.s32.totalorder %s32, 0
      %p482 = por %p480, %p481
      %p483 = scmp.ne.s32.totalorder %s475, %s477
      %p484 = scmp.eq.s32.totalorder %s37, 1
      %p485 = por %p483, %p484
      %p486 = scmp.ne.s32.totalorder %s477, %s478
      %p487 = scmp.eq.s32.totalorder %s37, 0
      %p488 = por %p486, %p487
      %p489 = scmp.ne.s32.totalorder %s477, %s478
      %p490 = scmp.eq.s32.totalorder %s38, 1
      %p491 = por %p489, %p490
      %p493 = scmp.ne.s32.totalorder %s478, %s492
      %p494 = scmp.eq.s32.totalorder %s38, 0
      %p495 = por %p493, %p494
      %s497 = sadd.s32 %s496, 1
      %p500 = scmp.eq.s32.totalorder %s32, 1
      %p501 = scmp.ne.s32.totalorder %s496, %s498
      %p502 = scmp.eq.s32.totalorder %s32, 0
      %p503 = por %p501, %p502
      %p504 = scmp.ne.s32.totalorder %s496, %s498
      %p505 = scmp.eq.s32.totalorder %s37, 1
      %p506 = por %p504, %p505
      %p507 = scmp.ne.s32.totalorder %s498, %s499
      %p508 = scmp.eq.s32.totalorder %s37, 0
      %p509 = por %p507, %p508
      %p510 = scmp.ne.s32.totalorder %s498, %s499
      %p511 = scmp.eq.s32.totalorder %s38, 1
      %p512 = por %p510, %p511
      %p514 = scmp.ne.s32.totalorder %s499, %s513
      %p515 = scmp.eq.s32.totalorder %s38, 0
      %p516 = por %p514, %p515
      %s518 = sadd.s32 %s517, 1
      %p521 = scmp.eq.s32.totalorder %s32, 1
      %p522 = scmp.ne.s32.totalorder %s517, %s519
      %p523 = scmp.eq.s32.totalorder %s32, 0
      %p524 = por %p522, %p523
      %p525 = scmp.ne.s32.totalorder %s517, %s519
      %p526 = scmp.eq.s32.totalorder %s37, 1
      %p527 = por %p525, %p526
      %p528 = scmp.ne.s32.totalorder %s519, %s520
      %p529 = scmp.eq.s32.totalorder %s37, 0
      %p530 = por %p528, %p529
      %p531 = scmp.ne.s32.totalorder %s519, %s520
      %p532 = scmp.eq.s32.totalorder %s38, 1
      %p533 = por %p531, %p532
      %p535 = scmp.ne.s32.totalorder %s520, %s534
      %p536 = scmp.eq.s32.totalorder %s38, 0
      %p537 = por %p535, %p536
      %s538 = ssub.s32 %s32, %s39
      %p539 = scmp.eq.s32.totalorder %s538, 0
      %s541 = sadd.s32 %s540, 1
      %s542 = scalar_select %p539, %s540, %s541
      %p545 = pneg %p539
      %p546 = scmp.eq.s32.totalorder %s32, 1
      %p547 = por %p545, %p546
      %p548 = scmp.ne.s32.totalorder %s540, %s543
      %p549 = scmp.eq.s32.totalorder %s32, 0
      %p550 = por %p548, %p549
      %p551 = scmp.ne.s32.totalorder %s540, %s543
      %p552 = scmp.eq.s32.totalorder %s37, 1
      %p553 = por %p551, %p552
      %p554 = scmp.ne.s32.totalorder %s543, %s544
      %p555 = scmp.eq.s32.totalorder %s37, 0
      %p556 = por %p554, %p555
      %p557 = scmp.ne.s32.totalorder %s543, %s544
      %p558 = scmp.eq.s32.totalorder %s38, 1
      %p559 = por %p557, %p558
      %p561 = scmp.ne.s32.totalorder %s544, %s560
      %p562 = scmp.eq.s32.totalorder %s38, 0
      %p563 = por %p561, %p562
      %p564 = scmp.le.s32.totalorder 1, %s32
      %p565 = scmp.lt.s32.totalorder %s32, 3
      %p566 = pnand %p564, %p565
      %p567 = pneg %p566
      // Predicated region
      $region9: #{encoder_forward.1} parent=5 // pred_check
        _
      $region10: #{encoder_forward.1} parent=5 // pred_check_branch
        %569 = sbr.rel (%p566) target = $region12
      $region11: #{encoder_forward.1} parent=5 // pred_region
        %s570 = ssub.s32 %s32, 1
        // Predicated region
        $region13: #{encoder_forward.1} parent=11 // pred_check
          %p571 = pneg %p131
        $region14: #{encoder_forward.1} parent=11 // pred_check_branch
          %573 = sbr.rel (%p571) target = $region16
        $region15: #{encoder_forward.1} parent=11 // pred_region
          _
        $region16: #{encoder_forward.1} parent=11 // pred_fallthru
          _
        // Predicated region
        $region17: #{encoder_forward.1} parent=11 // pred_check
          %p574 = pneg %p152
        $region18: #{encoder_forward.1} parent=11 // pred_check_branch
          %576 = sbr.rel (%p574) target = $region20
        $region19: #{encoder_forward.1} parent=11 // pred_region
          _
        $region20: #{encoder_forward.1} parent=11 // pred_fallthru
          _
        // Predicated region
        $region21: #{encoder_forward.1} parent=11 // pred_check
          %p577 = pneg %p173
        $region22: #{encoder_forward.1} parent=11 // pred_check_branch
          %579 = sbr.rel (%p577) target = $region24
        $region23: #{encoder_forward.1} parent=11 // pred_region
          _
        $region24: #{encoder_forward.1} parent=11 // pred_fallthru
          _
        // Predicated region
        $region25: #{encoder_forward.1} parent=11 // pred_check
          %p580 = pneg %p194
        $region26: #{encoder_forward.1} parent=11 // pred_check_branch
          %582 = sbr.rel (%p580) target = $region28
        $region27: #{encoder_forward.1} parent=11 // pred_region
          _
        $region28: #{encoder_forward.1} parent=11 // pred_fallthru
          _
        // Predicated region
        $region29: #{encoder_forward.1} parent=11 // pred_check
          %p583 = pneg %p215
        $region30: #{encoder_forward.1} parent=11 // pred_check_branch
          %585 = sbr.rel (%p583) target = $region32
        $region31: #{encoder_forward.1} parent=11 // pred_region
          _
        $region32: #{encoder_forward.1} parent=11 // pred_fallthru
          _
        // Predicated region
        $region33: #{encoder_forward.1} parent=11 // pred_check
          %p586 = pneg %p236
        $region34: #{encoder_forward.1} parent=11 // pred_check_branch
          %588 = sbr.rel (%p586) target = $region36
        $region35: #{encoder_forward.1} parent=11 // pred_region
          _
        $region36: #{encoder_forward.1} parent=11 // pred_fallthru
          _
        // Predicated region
        $region37: #{encoder_forward.1} parent=11 // pred_check
          %p589 = pneg %p257
        $region38: #{encoder_forward.1} parent=11 // pred_check_branch
          %591 = sbr.rel (%p589) target = $region40
        $region39: #{encoder_forward.1} parent=11 // pred_region
          _
        $region40: #{encoder_forward.1} parent=11 // pred_fallthru
          _
        // Predicated region
        $region41: #{encoder_forward.1} parent=11 // pred_check
          %p592 = pneg %p278
        $region42: #{encoder_forward.1} parent=11 // pred_check_branch
          %594 = sbr.rel (%p592) target = $region44
        $region43: #{encoder_forward.1} parent=11 // pred_region
          _
        $region44: #{encoder_forward.1} parent=11 // pred_fallthru
          _
        // Predicated region
        $region45: #{encoder_forward.1} parent=11 // pred_check
          %p595 = pneg %p299
        $region46: #{encoder_forward.1} parent=11 // pred_check_branch
          %597 = sbr.rel (%p595) target = $region48
        $region47: #{encoder_forward.1} parent=11 // pred_region
          _
        $region48: #{encoder_forward.1} parent=11 // pred_fallthru
          _
        // Predicated region
        $region49: #{encoder_forward.1} parent=11 // pred_check
          %p598 = pneg %p320
        $region50: #{encoder_forward.1} parent=11 // pred_check_branch
          %600 = sbr.rel (%p598) target = $region52
        $region51: #{encoder_forward.1} parent=11 // pred_region
          _
        $region52: #{encoder_forward.1} parent=11 // pred_fallthru
          _
        // Predicated region
        $region53: #{encoder_forward.1} parent=11 // pred_check
          %p601 = pneg %p341
        $region54: #{encoder_forward.1} parent=11 // pred_check_branch
          %603 = sbr.rel (%p601) target = $region56
        $region55: #{encoder_forward.1} parent=11 // pred_region
          _
        $region56: #{encoder_forward.1} parent=11 // pred_fallthru
          _
        // Predicated region
        $region57: #{encoder_forward.1} parent=11 // pred_check
          %p604 = pneg %p362
        $region58: #{encoder_forward.1} parent=11 // pred_check_branch
          %606 = sbr.rel (%p604) target = $region60
        $region59: #{encoder_forward.1} parent=11 // pred_region
          _
        $region60: #{encoder_forward.1} parent=11 // pred_fallthru
          _
        // Predicated region
        $region61: #{encoder_forward.1} parent=11 // pred_check
          %p607 = pneg %p383
        $region62: #{encoder_forward.1} parent=11 // pred_check_branch
          %609 = sbr.rel (%p607) target = $region64
        $region63: #{encoder_forward.1} parent=11 // pred_region
          _
        $region64: #{encoder_forward.1} parent=11 // pred_fallthru
          _
        // Predicated region
        $region65: #{encoder_forward.1} parent=11 // pred_check
          %p610 = pneg %p404
        $region66: #{encoder_forward.1} parent=11 // pred_check_branch
          %612 = sbr.rel (%p610) target = $region68
        $region67: #{encoder_forward.1} parent=11 // pred_region
          _
        $region68: #{encoder_forward.1} parent=11 // pred_fallthru
          _
        // Predicated region
        $region69: #{encoder_forward.1} parent=11 // pred_check
          %p613 = pneg %p425
        $region70: #{encoder_forward.1} parent=11 // pred_check_branch
          %615 = sbr.rel (%p613) target = $region72
        $region71: #{encoder_forward.1} parent=11 // pred_region
          _
        $region72: #{encoder_forward.1} parent=11 // pred_fallthru
          _
        // Predicated region
        $region73: #{encoder_forward.1} parent=11 // pred_check
          %p616 = pneg %p446
        $region74: #{encoder_forward.1} parent=11 // pred_check_branch
          %618 = sbr.rel (%p616) target = $region76
        $region75: #{encoder_forward.1} parent=11 // pred_region
          _
        $region76: #{encoder_forward.1} parent=11 // pred_fallthru
          _
        // Predicated region
        $region77: #{encoder_forward.1} parent=11 // pred_check
          %p619 = pneg %p467
        $region78: #{encoder_forward.1} parent=11 // pred_check_branch
          %621 = sbr.rel (%p619) target = $region80
        $region79: #{encoder_forward.1} parent=11 // pred_region
          _
        $region80: #{encoder_forward.1} parent=11 // pred_fallthru
          _
        // Predicated region
        $region81: #{encoder_forward.1} parent=11 // pred_check
          %p622 = pneg %p488
        $region82: #{encoder_forward.1} parent=11 // pred_check_branch
          %624 = sbr.rel (%p622) target = $region84
        $region83: #{encoder_forward.1} parent=11 // pred_region
          _
        $region84: #{encoder_forward.1} parent=11 // pred_fallthru
          _
        // Predicated region
        $region85: #{encoder_forward.1} parent=11 // pred_check
          %p625 = pneg %p509
        $region86: #{encoder_forward.1} parent=11 // pred_check_branch
          %627 = sbr.rel (%p625) target = $region88
        $region87: #{encoder_forward.1} parent=11 // pred_region
          _
        $region88: #{encoder_forward.1} parent=11 // pred_fallthru
          _
        // Predicated region
        $region89: #{encoder_forward.1} parent=11 // pred_check
          %p628 = pneg %p530
        $region90: #{encoder_forward.1} parent=11 // pred_check_branch
          %630 = sbr.rel (%p628) target = $region92
        $region91: #{encoder_forward.1} parent=11 // pred_region
          _
        $region92: #{encoder_forward.1} parent=11 // pred_fallthru
          _
      $region12: #{encoder_forward.1} parent=5 // pred_fallthru
        _
      %p631 = scmp.lt.s32.totalorder %s32, 2
      // Predicated region
      $region93: #{encoder_forward.1} parent=5 // pred_check
        %p632 = pneg %p631
      $region94: #{encoder_forward.1} parent=5 // pred_check_branch
        %634 = sbr.rel (%p632) target = $region96
      $region95: #{encoder_forward.1} parent=5 // pred_region
        // Predicated region
        $region97: #{encoder_forward.1} parent=95 // pred_check
          %p635 = pneg %p52
        $region98: #{encoder_forward.1} parent=95 // pred_check_branch
          %637 = sbr.rel (%p635) target = $region100
        $region99: #{encoder_forward.1} parent=95 // pred_region
          %p638 = scmp.lt.s32.totalorder %s32, 1
          %s639 = scalar_select %p638, %s32, 1
          %s640 = smul.addr %s639, 8
          %s641 = scalar_lea.vmem %s0, %s640
        $region100: #{encoder_forward.1} parent=95 // pred_fallthru
          _
        // Predicated region
        $region101: #{encoder_forward.1} parent=95 // pred_check
          %p642 = pneg %p78
        $region102: #{encoder_forward.1} parent=95 // pred_check_branch
          %644 = sbr.rel (%p642) target = $region104
        $region103: #{encoder_forward.1} parent=95 // pred_region
          %p645 = scmp.lt.s32.totalorder %s32, 1
          %s646 = scalar_select %p645, %s32, 1
          %s647 = smul.addr %s646, 8
          %s648 = scalar_lea.vmem %s1, %s647
        $region104: #{encoder_forward.1} parent=95 // pred_fallthru
          _
        // Predicated region
        $region105: #{encoder_forward.1} parent=95 // pred_check
          %p649 = pneg %p104
        $region106: #{encoder_forward.1} parent=95 // pred_check_branch
          %651 = sbr.rel (%p649) target = $region108
        $region107: #{encoder_forward.1} parent=95 // pred_region
          %p652 = scmp.lt.s32.totalorder %s32, 1
          %s653 = scalar_select %p652, %s32, 1
          %s654 = scalar_lea.vmem %s2, %s653
        $region108: #{encoder_forward.1} parent=95 // pred_fallthru
          _
      $region96: #{encoder_forward.1} parent=5 // pred_fallthru
        _
      %p655 = scmp.le.s32.totalorder 1, %s32
      %p656 = scmp.lt.s32.totalorder %s32, 3
      %p657 = pnand %p655, %p656
      %p658 = pneg %p657
      // Predicated region
      $region109: #{encoder_forward.1} parent=5 // pred_check
        _
      $region110: #{encoder_forward.1} parent=5 // pred_check_branch
        %660 = sbr.rel (%p657) target = $region112
      $region111: #{encoder_forward.1} parent=5 // pred_region
        %s661 = ssub.s32 %s32, 1
        %p662 = scmp.lt.s32.totalorder %s37, 1
        %s663 = scalar_select %p662, %s37, 1
        %s664 = smul.addr %s663, 8
        %s665 = scalar_lea.vmem %s0, %s664
        %p666 = pneg %p58
        %p667 = pneg %p55
        %p668 = scmp.lt.s32.totalorder %s37, 1
        %s669 = scalar_select %p668, %s37, 1
        %s670 = smul.addr %s669, 8
        %s671 = scalar_lea.vmem %s1, %s670
        %p672 = pneg %p84
        %p673 = pneg %p81
        %p674 = scmp.lt.s32.totalorder %s37, 1
        %s675 = scalar_select %p674, %s37, 1
        %s676 = scalar_lea.vmem %s2, %s675
        %p677 = pneg %p110
        %p678 = pneg %p107
        %p679 = pneg %p131
        %p680 = pneg %p128
        %p681 = pneg %p152
        %p682 = pneg %p149
        %p683 = pneg %p173
        %p684 = pneg %p170
        %p685 = pneg %p194
        %p686 = pneg %p191
        %p687 = pneg %p215
        %p688 = pneg %p212
        %p689 = pneg %p236
        %p690 = pneg %p233
        %p691 = pneg %p257
        %p692 = pneg %p254
        %p693 = pneg %p278
        %p694 = pneg %p275
        %p695 = pneg %p299
        %p696 = pneg %p296
        %p697 = pneg %p320
        %p698 = pneg %p317
        %p699 = pneg %p341
        %p700 = pneg %p338
        %p701 = pneg %p362
        %p702 = pneg %p359
        %p703 = pneg %p383
        %p704 = pneg %p380
        %p705 = pneg %p404
        %p706 = pneg %p401
        %p707 = pneg %p425
        %p708 = pneg %p422
        %p709 = pneg %p446
        %p710 = pneg %p443
        %p711 = pneg %p467
        %p712 = pneg %p464
        %p713 = pneg %p488
        %p714 = pneg %p485
        %p715 = pneg %p509
        %p716 = pneg %p506
        %p717 = pneg %p530
        %p718 = pneg %p527
        %p719 = pneg %p556
        %p720 = pneg %p553
        %s721 = sand.u32 %s543, 1
        %s722 = scalar_lea.sflag [#allocation4], %s721
        %s723 = sand.u32 %s543, 1
        %s724 = smul.addr %s723, 8
        %s725 = scalar_lea.vmem [#allocation3], %s724
        %p726 = scmp.lt.s32.totalorder %s37, 1
        %s727 = scalar_select %p726, %s37, 1
        %s728 = smul.addr %s727, 8
        %s729 = scalar_lea.vmem %s0, %s728
        %p730 = scmp.lt.s32.totalorder %s37, 1
        %s731 = scalar_select %p730, %s37, 1
        %s732 = smul.addr %s731, 8
        %s733 = scalar_lea.vmem %s1, %s732
        %p734 = scmp.lt.s32.totalorder %s37, 1
        %s735 = scalar_select %p734, %s37, 1
        %s736 = scalar_lea.vmem %s2, %s735
        %v738 = vld [vmem:[%s729] sm:$0xff]
        %v739 = vld [vmem:[%s733] sm:$0xff]
        %v740 = vld [vmem:[%s736] sm:$0x1]
        %v741 = vcvt.s32.f32 %v740
        %v742 = vsub.f32 1.0, %v741
        %v743 = vmul.f32 %v742, -1e+09
        %v744 = vld [vmem:[%s3] sm:$0xf]
        %v745 = vld [vmem:[%s3 + $0x4] sm:$0xf]
        %v746 = vld [vmem:[%s3 + $0x8] sm:$0xf]
        %v747 = vld [vmem:[%s3 + $0xc] sm:$0xf]
        %v748 = vld [vmem:[%s4] sm:$0x1]
        %v749 = vld [vmem:[%s5] sm:$0xf]
        %v750 = vld [vmem:[%s5 + $0x4] sm:$0xf]
        %v751 = vld [vmem:[%s5 + $0x8] sm:$0xf]
        %v752 = vld [vmem:[%s5 + $0xc] sm:$0xf]
        %v753 = vld [vmem:[%s6] sm:$0x1]
        %v754 = vld [vmem:[%s7] sm:$0xf]
        %v755 = vld [vmem:[%s7 + $0x4] sm:$0xf]
        %v756 = vld [vmem:[%s7 + $0x8] sm:$0xf]
        %v757 = vld [vmem:[%s7 + $0xc] sm:$0xf]
        %v758 = vld [vmem:[%s8] sm:$0x1]
        %v759 = vld [vmem:[%s9] sm:$0xf]
        %v760 = vld [vmem:[%s9 + $0x4] sm:$0xf]
        %v761 = vld [vmem:[%s9 + $0x8] sm:$0xf]
        %v762 = vld [vmem:[%s9 + $0xc] sm:$0xf]
        %v763 = vld [vmem:[%s10] sm:$0x1]
        %v764 = vld [vmem:[%s11] sm:$0xf]
        %v765 = vld [vmem:[%s11 + $0x4] sm:$0xf]
        %v766 = vld [vmem:[%s11 + $0x8] sm:$0xf]
        %v767 = vld [vmem:[%s11 + $0xc] sm:$0xf]
        %v768 = vld [vmem:[%s12] sm:$0x1]
        %v769 = vld [vmem:[%s13] sm:$0xf]
        %v770 = vld [vmem:[%s13 + $0x4] sm:$0xf]
        %v771 = vld [vmem:[%s13 + $0x8] sm:$0xf]
        %v772 = vld [vmem:[%s13 + $0xc] sm:$0xf]
        %v773 = vld [vmem:[%s14] sm:$0x1]
        %v774 = vld [vmem:[%s15] sm:$0xf]
        %v775 = vld [vmem:[%s15 + $0x4] sm:$0xf]
        %v776 = vld [vmem:[%s15 + $0x8] sm:$0xf]
        %v777 = vld [vmem:[%s15 + $0xc] sm:$0xf]
        %v778 = vld [vmem:[%s15 + $0x10] sm:$0xf]
        %v779 = vld [vmem:[%s15 + $0x14] sm:$0xf]
        %v780 = vld [vmem:[%s15 + $0x18] sm:$0xf]
        %v781 = vld [vmem:[%s15 + $0x1c] sm:$0xf]
        %v782 = vld [vmem:[%s16] sm:$0x1]
        %v783 = vld [vmem:[%s17] sm:$0x1]
        %v784 = vld [vmem:[%s18] sm:$0x1]
        %v785 = vld [vmem:[%s19] sm:$0x1]
        %v786 = vld [vmem:[%s20] sm:$0x1]
        %v787 = vld [vmem:[%s21] sm:$0x1]
        %v788 = vld [vmem:[%s22] sm:$0x1]
        %v789 = vpack.c.bf16 %v739, %v739
        %v791 = vperm.slane %v763, 0
        %v797 = vunpack.c.l.b16 %v759
        %v798 = vunpack.c.l.b16 %v760
        %v799 = vunpack.c.l.b16 %v761
        %v800 = vunpack.c.l.b16 %v762
        %v801 = vpack.c.b16 %v798, %v797
        %v802 = vpack.c.b16 %v800, %v799
        %vm805 = vcmask 261120
        %v807 = vsel %vm805, %v789, 0
        %809 = vmatpush.bf16.msra.mxu0 0
        %810 = vmatpush.bf16.msra.mxu0 0
        %811 = vmatpush.bf16.msra.mxu0 0
        %812 = vmatpush.bf16.msra.mxu0 0
        %813 = vmatpush.bf16.msra.mxu0 0
        %814 = vmatpush.bf16.msra.mxu0 0
        %815 = vmatpush.bf16.msra.mxu0 %v802
        %816 = vmatpush.bf16.msra.mxu0 %v801
        %817 = vmatmul.bf16.gmra.mxu0 %v807
        %v818 = vpop.f32.mrf.mxu0
        %v819 = vadd.f32 %v791, %v818
        %v820 = vpop.f32.mrf.mxu0
        %821 = vdwg.mxu0
        %v822 = vpack.c.bf16 %v738, %v738
        %v824 = vperm.slane %v748, 0
        %v830 = vunpack.c.l.b16 %v744
        %v831 = vunpack.c.l.b16 %v745
        %v832 = vunpack.c.l.b16 %v746
        %v833 = vunpack.c.l.b16 %v747
        %v834 = vpack.c.b16 %v831, %v830
        %v835 = vpack.c.b16 %v833, %v832
        %v839 = vsel %vm805, %v822, 0
        %841 = vmatpush.bf16.msra.mxu0 0
        %842 = vmatpush.bf16.msra.mxu0 0
        %843 = vmatpush.bf16.msra.mxu0 0
        %844 = vmatpush.bf16.msra.mxu0 0
        %845 = vmatpush.bf16.msra.mxu0 0
        %846 = vmatpush.bf16.msra.mxu0 0
        %847 = vmatpush.bf16.msra.mxu0 %v835
        %848 = vmatpush.bf16.msra.mxu0 %v834
        %849 = vmatmul.bf16.gmra.mxu0 %v839
        %v850 = vpop.f32.mrf.mxu0
        %v851 = vadd.f32 %v824, %v850
        %v852 = vpop.f32.mrf.mxu0
        %853 = vdwg.mxu0
        %v854 = vpack.c.bf16 %v851, %v851
        %856 = vrot.lane.b32.xlu0 %v854, 96
        %v857 = vpop.permute.xlu0 %856
        %vm858 = vcmask 64512
        %v860 = vsel %vm858, %v854, 0
        %v863 = vsel %vm858, %v857, 0
        %865 = vmatpush.bf16.xpose.msra.mxu0 0
        %866 = vmatpush.bf16.xpose.msra.mxu0 0
        %867 = vmatpush.bf16.xpose.msra.mxu0 0
        %868 = vmatpush.bf16.xpose.msra.mxu0 0
        %869 = vmatpush.bf16.xpose.msra.mxu0 0
        %870 = vmatpush.bf16.xpose.msra.mxu0 0
        %871 = vmatpush.bf16.xpose.msra.mxu0 0
        %872 = vmatpush.bf16.xpose.msra.mxu0 %v863
        %873 = vmatmul.bf16.gmra.mxu0 %v860
        %v874 = vpop.f32.mrf.mxu0
        %v875 = vadd.f32 0.0, %v874
        %v876 = vpop.f32.mrf.mxu0
        %877 = vdwg.mxu0
        %v878 = vmul.f32 %v875, 0.35355338
        %v880 = vperm.slane %v743, 0
        %v882 = vadd.f32 %v878, %v880
        %v883 = vsel %vm858, %v882, -inf
        %884 = vmax.xlane.f32.xlu0 %v883
        %v885 = vpop.xlane.xlu0 %884
        %v886 = vsub.f32 %v882, %v885
        %v887 = vmul.f32 %v886, 1.442695
        %v888 = vpow.pop %v887
        %v889 = vsel %vm858, %v888, 0.0
        %890 = vadd.xlane.f32.xlu0 %v889
        %v891 = vpop.xlane.xlu0 %890
        %v892 = vrcp.pop %v891
        %v893 = vmul.f32 %v888, %v892
        %v894 = vpack.c.bf16 %v893, %v893
        %895 = vrot.lane.b32.xlu0 %v854, 64
        %v896 = vpop.permute.xlu0 %895
        %v898 = vsel %vm858, %v894, 0
        %vm900 = vcmask 1043456
        %v902 = vsel %vm900, %v896, 0
        %904 = vmatpush.bf16.msra.mxu0 0
        %905 = vmatpush.bf16.msra.mxu0 0
        %906 = vmatpush.bf16.msra.mxu0 0
        %907 = vmatpush.bf16.msra.mxu0 0
        %908 = vmatpush.bf16.msra.mxu0 0
        %909 = vmatpush.bf16.msra.mxu0 0
        %910 = vmatpush.bf16.msra.mxu0 0
        %911 = vmatpush.bf16.msra.mxu0 %v902
        %912 = vmatmul.bf16.gmra.mxu0 %v898
        %v913 = vpop.f32.mrf.mxu0
        %v914 = vadd.f32 0.0, %v913
        %v915 = vpop.f32.mrf.mxu0
        %916 = vdwg.mxu0
        %917 = vst.msk [vmem:[#allocation2] sm:$0xff] %vm858, %v914
        %918 = vrot.lane.b32.xlu0 %v854, 120
        %v919 = vpop.permute.xlu0 %918
        %920 = vrot.lane.b32.xlu0 %v854, 88
        %v921 = vpop.permute.xlu0 %920
        %v923 = vsel %vm858, %v919, 0
        %v926 = vsel %vm858, %v921, 0
        %928 = vmatpush.bf16.xpose.msra.mxu0 0
        %929 = vmatpush.bf16.xpose.msra.mxu0 0
        %930 = vmatpush.bf16.xpose.msra.mxu0 0
        %931 = vmatpush.bf16.xpose.msra.mxu0 0
        %932 = vmatpush.bf16.xpose.msra.mxu0 0
        %933 = vmatpush.bf16.xpose.msra.mxu0 0
        %934 = vmatpush.bf16.xpose.msra.mxu0 0
        %935 = vmatpush.bf16.xpose.msra.mxu0 %v926
        %936 = vmatmul.bf16.gmra.mxu0 %v923
        %v937 = vpop.f32.mrf.mxu0
        %v938 = vadd.f32 0.0, %v937
        %v939 = vpop.f32.mrf.mxu0
        %940 = vdwg.mxu0
        %v941 = vmul.f32 %v938, 0.35355338
        %v942 = vadd.f32 %v941, %v880
        %v943 = vsel %vm858, %v942, -inf
        %944 = vmax.xlane.f32.xlu0 %v943
        %v945 = vpop.xlane.xlu0 %944
        %v946 = vsub.f32 %v942, %v945
        %v947 = vmul.f32 %v946, 1.442695
        %v948 = vpow.pop %v947
        %v949 = vsel %vm858, %v948, 0.0
        %950 = vadd.xlane.f32.xlu0 %v949
        %v951 = vpop.xlane.xlu0 %950
        %v952 = vrcp.pop %v951
        %v953 = vmul.f32 %v948, %v952
        %v954 = vpack.c.bf16 %v953, %v953
        %955 = vrot.lane.b32.xlu0 %v854, 56
        %v956 = vpop.permute.xlu0 %955
        %v958 = vsel %vm858, %v954, 0
        %v961 = vsel %vm900, %v956, 0
        %963 = vmatpush.bf16.msra.mxu0 0
        %964 = vmatpush.bf16.msra.mxu0 0
        %965 = vmatpush.bf16.msra.mxu0 0
        %966 = vmatpush.bf16.msra.mxu0 0
        %967 = vmatpush.bf16.msra.mxu0 0
        %968 = vmatpush.bf16.msra.mxu0 0
        %969 = vmatpush.bf16.msra.mxu0 0
        %970 = vmatpush.bf16.msra.mxu0 %v961
        %971 = vmatmul.bf16.gmra.mxu0 %v958
        %v972 = vpop.f32.mrf.mxu0
        %v973 = vadd.f32 0.0, %v972
        %v974 = vpop.f32.mrf.mxu0
        %975 = vdwg.mxu0
        %977 = vrot.lane.b32.xlu0 %v973, 8
        %v978 = vpop.permute.xlu0 %977
        %vm980 = vcmask 130112
        %981 = vst.msk [vmem:[#allocation2] sm:$0xff] %vm980, %v978
        %982 = vrot.lane.b32.xlu0 %v854, 112
        %v983 = vpop.permute.xlu0 %982
        %984 = vrot.lane.b32.xlu0 %v854, 80
        %v985 = vpop.permute.xlu0 %984
        %v987 = vsel %vm858, %v983, 0
        %v990 = vsel %vm858, %v985, 0
        %992 = vmatpush.bf16.xpose.msra.mxu0 0
        %993 = vmatpush.bf16.xpose.msra.mxu0 0
        %994 = vmatpush.bf16.xpose.msra.mxu0 0
        %995 = vmatpush.bf16.xpose.msra.mxu0 0
        %996 = vmatpush.bf16.xpose.msra.mxu0 0
        %997 = vmatpush.bf16.xpose.msra.mxu0 0
        %998 = vmatpush.bf16.xpose.msra.mxu0 0
        %999 = vmatpush.bf16.xpose.msra.mxu0 %v990
        %1000 = vmatmul.bf16.gmra.mxu0 %v987
        %v1001 = vpop.f32.mrf.mxu0
        %v1002 = vadd.f32 0.0, %v1001
        %v1003 = vpop.f32.mrf.mxu0
        %1004 = vdwg.mxu0
        %v1005 = vmul.f32 %v1002, 0.35355338
        %v1006 = vadd.f32 %v1005, %v880
        %v1007 = vsel %vm858, %v1006, -inf
        %1008 = vmax.xlane.f32.xlu0 %v1007
        %v1009 = vpop.xlane.xlu0 %1008
        %v1010 = vsub.f32 %v1006, %v1009
        %v1011 = vmul.f32 %v1010, 1.442695
        %v1012 = vpow.pop %v1011
        %v1013 = vsel %vm858, %v1012, 0.0
        %1014 = vadd.xlane.f32.xlu0 %v1013
        %v1015 = vpop.xlane.xlu0 %1014
        %v1016 = vrcp.pop %v1015
        %v1017 = vmul.f32 %v1012, %v1016
        %v1018 = vpack.c.bf16 %v1017, %v1017
        %1019 = vrot.lane.b32.xlu0 %v854, 48
        %v1020 = vpop.permute.xlu0 %1019
        %v1022 = vsel %vm858, %v1018, 0
        %v1025 = vsel %vm900, %v1020, 0
        %1027 = vmatpush.bf16.msra.mxu0 0
        %1028 = vmatpush.bf16.msra.mxu0 0
        %1029 = vmatpush.bf16.msra.mxu0 0
        %1030 = vmatpush.bf16.msra.mxu0 0
        %1031 = vmatpush.bf16.msra.mxu0 0
        %1032 = vmatpush.bf16.msra.mxu0 0
        %1033 = vmatpush.bf16.msra.mxu0 0
        %1034 = vmatpush.bf16.msra.mxu0 %v1025
        %1035 = vmatmul.bf16.gmra.mxu0 %v1022
        %v1036 = vpop.f32.mrf.mxu0
        %v1037 = vadd.f32 0.0, %v1036
        %v1038 = vpop.f32.mrf.mxu0
        %1039 = vdwg.mxu0
        %1041 = vrot.lane.b32.xlu0 %v1037, 16
        %v1042 = vpop.permute.xlu0 %1041
        %vm1044 = vcmask 195712
        %1045 = vst.msk [vmem:[#allocation2] sm:$0xff] %vm1044, %v1042
        %1046 = vrot.lane.b32.xlu0 %v854, 104
        %v1047 = vpop.permute.xlu0 %1046
        %1048 = vrot.lane.b32.xlu0 %v854, 72
        %v1049 = vpop.permute.xlu0 %1048
        %v1051 = vsel %vm858, %v1047, 0
        %v1054 = vsel %vm858, %v1049, 0
        %1056 = vmatpush.bf16.xpose.msra.mxu0 0
        %1057 = vmatpush.bf16.xpose.msra.mxu0 0
        %1058 = vmatpush.bf16.xpose.msra.mxu0 0
        %1059 = vmatpush.bf16.xpose.msra.mxu0 0
        %1060 = vmatpush.bf16.xpose.msra.mxu0 0
        %1061 = vmatpush.bf16.xpose.msra.mxu0 0
        %1062 = vmatpush.bf16.xpose.msra.mxu0 0
        %1063 = vmatpush.bf16.xpose.msra.mxu0 %v1054
        %1064 = vmatmul.bf16.gmra.mxu0 %v1051
        %v1065 = vpop.f32.mrf.mxu0
        %v1066 = vadd.f32 0.0, %v1065
        %v1067 = vpop.f32.mrf.mxu0
        %1068 = vdwg.mxu0
        %v1069 = vmul.f32 %v1066, 0.35355338
        %v1070 = vadd.f32 %v1069, %v880
        %v1071 = vsel %vm858, %v1070, -inf
        %1072 = vmax.xlane.f32.xlu0 %v1071
        %v1073 = vpop.xlane.xlu0 %1072
        %v1074 = vsub.f32 %v1070, %v1073
        %v1075 = vmul.f32 %v1074, 1.442695
        %v1076 = vpow.pop %v1075
        %v1077 = vsel %vm858, %v1076, 0.0
        %1078 = vadd.xlane.f32.xlu0 %v1077
        %v1079 = vpop.xlane.xlu0 %1078
        %v1080 = vrcp.pop %v1079
        %v1081 = vmul.f32 %v1076, %v1080
        %v1082 = vpack.c.bf16 %v1081, %v1081
        %1083 = vrot.lane.b32.xlu0 %v854, 40
        %v1084 = vpop.permute.xlu0 %1083
        %v1086 = vsel %vm858, %v1082, 0
        %v1089 = vsel %vm900, %v1084, 0
        %1091 = vmatpush.bf16.msra.mxu0 0
        %1092 = vmatpush.bf16.msra.mxu0 0
        %1093 = vmatpush.bf16.msra.mxu0 0
        %1094 = vmatpush.bf16.msra.mxu0 0
        %1095 = vmatpush.bf16.msra.mxu0 0
        %1096 = vmatpush.bf16.msra.mxu0 0
        %1097 = vmatpush.bf16.msra.mxu0 0
        %1098 = vmatpush.bf16.msra.mxu0 %v1089
        %1099 = vmatmul.bf16.gmra.mxu0 %v1086
        %v1100 = vpop.f32.mrf.mxu0
        %v1101 = vadd.f32 0.0, %v1100
        %v1102 = vpop.f32.mrf.mxu0
        %1103 = vdwg.mxu0
        %1105 = vrot.lane.b32.xlu0 %v1101, 24
        %v1106 = vpop.permute.xlu0 %1105
        %vm1108 = vcmask 261312
        %1109 = vst.msk [vmem:[#allocation2] sm:$0xff] %vm1108, %v1106
        %v1110 = vld [vmem:[#allocation2] sm:$0xff]
        %v1111 = vpack.c.bf16 %v1110, %v1110
        %v1113 = vperm.slane %v753, 0
        %v1119 = vunpack.c.l.b16 %v749
        %v1120 = vunpack.c.l.b16 %v750
        %v1121 = vunpack.c.l.b16 %v751
        %v1122 = vunpack.c.l.b16 %v752
        %v1123 = vpack.c.b16 %v1120, %v1119
        %v1124 = vpack.c.b16 %v1122, %v1121
        %v1128 = vsel %vm805, %v1111, 0
        %1130 = vmatpush.bf16.msra.mxu0 0
        %1131 = vmatpush.bf16.msra.mxu0 0
        %1132 = vmatpush.bf16.msra.mxu0 0
        %1133 = vmatpush.bf16.msra.mxu0 0
        %1134 = vmatpush.bf16.msra.mxu0 0
        %1135 = vmatpush.bf16.msra.mxu0 0
        %1136 = vmatpush.bf16.msra.mxu0 %v1124
        %1137 = vmatpush.bf16.msra.mxu0 %v1123
        %1138 = vmatmul.bf16.gmra.mxu0 %v1128
        %v1139 = vpop.f32.mrf.mxu0
        %v1140 = vadd.f32 %v1113, %v1139
        %v1141 = vpop.f32.mrf.mxu0
        %1142 = vdwg.mxu0
        %v1143 = vadd.f32 %v1140, %v738
        %v1144 = vsel %vm805, %v1143, 0.0
        %1145 = vadd.xlane.f32.xlu0 %v1144
        %v1146 = vpop.xlane.xlu0 %1145
        %v1147 = vrcp.pop 32.0
        %v1148 = vmul.f32 32.0, %v1147
        %v1149 = vsub.f32 1.0, %v1148
        %v1150 = vmul.f32 %v1147, %v1149
        %v1151 = vadd.f32 %v1147, %v1150
        %vm1152 = vweird.f32 %v1147
        %v1153 = vsel %vm1152, %v1147, %v1151
        %v1154 = vmul.f32 %v1146, %v1153
        %v1155 = vsub.f32 %v1143, %v1154
        %v1156 = vmul.f32 %v1155, %v1155
        %v1157 = vsel %vm805, %v1156, 0.0
        %1158 = vadd.xlane.f32.xlu0 %v1157
        %v1159 = vpop.xlane.xlu0 %1158
        %v1160 = vmul.f32 %v1159, %v1153
        %v1161 = vadd.f32 %v1160, 1e-05
        %v1162 = vrsqrt.pop %v1161
        %v1163 = vmul.f32 %v1162, %v1161
        %v1164 = vmul.f32 %v1163, %v1162
        %v1165 = vmul.f32 0.5, %v1164
        %v1166 = vsub.f32 1.5, %v1165
        %v1167 = vmul.f32 %v1162, %v1166
        %vm1168 = vweird.f32 %v1161
        %vm1169 = vweird.f32 %v1162
        %vm1170 = vmor %vm1168, %vm1169
        %v1171 = vsel %vm1170, %v1162, %v1167
        %v1172 = vmul.f32 %v1155, %v1171
        %v1174 = vperm.slane %v783, 0
        %v1176 = vmul.f32 %v1172, %v1174
        %v1178 = vperm.slane %v784, 0
        %v1180 = vadd.f32 %v1176, %v1178
        %v1181 = vpack.c.bf16 %v1180, %v1180
        %v1183 = vperm.slane %v758, 0
        %v1189 = vunpack.c.l.b16 %v754
        %v1190 = vunpack.c.l.b16 %v755
        %v1191 = vunpack.c.l.b16 %v756
        %v1192 = vunpack.c.l.b16 %v757
        %v1193 = vpack.c.b16 %v1190, %v1189
        %v1194 = vpack.c.b16 %v1192, %v1191
        %v1198 = vsel %vm805, %v1181, 0
        %1200 = vmatpush.bf16.msra.mxu0 0
        %1201 = vmatpush.bf16.msra.mxu0 0
        %1202 = vmatpush.bf16.msra.mxu0 0
        %1203 = vmatpush.bf16.msra.mxu0 0
        %1204 = vmatpush.bf16.msra.mxu0 0
        %1205 = vmatpush.bf16.msra.mxu0 0
        %1206 = vmatpush.bf16.msra.mxu0 %v1194
        %1207 = vmatpush.bf16.msra.mxu0 %v1193
        %1208 = vmatmul.bf16.gmra.mxu0 %v1198
        %v1209 = vpop.f32.mrf.mxu0
        %v1210 = vadd.f32 %v1183, %v1209
        %v1211 = vpop.f32.mrf.mxu0
        %1212 = vdwg.mxu0
        %v1213 = vpack.c.bf16 %v1210, %v1210
        %v1214 = vpack.c.bf16 %v819, %v819
        %v1216 = vsel %vm858, %v1213, 0
        %v1219 = vsel %vm858, %v1214, 0
        %1221 = vmatpush.bf16.xpose.msra.mxu0 0
        %1222 = vmatpush.bf16.xpose.msra.mxu0 0
        %1223 = vmatpush.bf16.xpose.msra.mxu0 0
        %1224 = vmatpush.bf16.xpose.msra.mxu0 0
        %1225 = vmatpush.bf16.xpose.msra.mxu0 0
        %1226 = vmatpush.bf16.xpose.msra.mxu0 0
        %1227 = vmatpush.bf16.xpose.msra.mxu0 0
        %1228 = vmatpush.bf16.xpose.msra.mxu0 %v1219
        %1229 = vmatmul.bf16.gmra.mxu0 %v1216
        %v1230 = vpop.f32.mrf.mxu0
        %v1231 = vadd.f32 0.0, %v1230
        %v1232 = vpop.f32.mrf.mxu0
        %1233 = vdwg.mxu0
        %v1234 = vmul.f32 %v1231, 0.35355338
        %v1235 = vsel %vm858, %v1234, -inf
        %1236 = vmax.xlane.f32.xlu0 %v1235
        %v1237 = vpop.xlane.xlu0 %1236
        %v1238 = vsub.f32 %v1234, %v1237
        %v1239 = vmul.f32 %v1238, 1.442695
        %v1240 = vpow.pop %v1239
        %v1241 = vsel %vm858, %v1240, 0.0
        %1242 = vadd.xlane.f32.xlu0 %v1241
        %v1243 = vpop.xlane.xlu0 %1242
        %v1244 = vrcp.pop %v1243
        %v1245 = vmul.f32 %v1240, %v1244
        %v1246 = vpack.c.bf16 %v1245, %v1245
        %1248 = vrot.lane.b32.xlu0 %v1214, 96
        %v1249 = vpop.permute.xlu0 %1248
        %v1251 = vsel %vm858, %v1246, 0
        %v1254 = vsel %vm900, %v1249, 0
        %1256 = vmatpush.bf16.msra.mxu0 0
        %1257 = vmatpush.bf16.msra.mxu0 0
        %1258 = vmatpush.bf16.msra.mxu0 0
        %1259 = vmatpush.bf16.msra.mxu0 0
        %1260 = vmatpush.bf16.msra.mxu0 0
        %1261 = vmatpush.bf16.msra.mxu0 0
        %1262 = vmatpush.bf16.msra.mxu0 0
        %1263 = vmatpush.bf16.msra.mxu0 %v1254
        %1264 = vmatmul.bf16.gmra.mxu0 %v1251
        %v1265 = vpop.f32.mrf.mxu0
        %v1266 = vadd.f32 0.0, %v1265
        %v1267 = vpop.f32.mrf.mxu0
        %1268 = vdwg.mxu0
        %1269 = vst.msk [vmem:[#allocation2] sm:$0xff] %vm858, %v1266
        %1271 = vrot.lane.b32.xlu0 %v1213, 120
        %v1272 = vpop.permute.xlu0 %1271
        %1273 = vrot.lane.b32.xlu0 %v1214, 120
        %v1274 = vpop.permute.xlu0 %1273
        %v1276 = vsel %vm858, %v1272, 0
        %v1279 = vsel %vm858, %v1274, 0
        %1281 = vmatpush.bf16.xpose.msra.mxu0 0
        %1282 = vmatpush.bf16.xpose.msra.mxu0 0
        %1283 = vmatpush.bf16.xpose.msra.mxu0 0
        %1284 = vmatpush.bf16.xpose.msra.mxu0 0
        %1285 = vmatpush.bf16.xpose.msra.mxu0 0
        %1286 = vmatpush.bf16.xpose.msra.mxu0 0
        %1287 = vmatpush.bf16.xpose.msra.mxu0 0
        %1288 = vmatpush.bf16.xpose.msra.mxu0 %v1279
        %1289 = vmatmul.bf16.gmra.mxu0 %v1276
        %v1290 = vpop.f32.mrf.mxu0
        %v1291 = vadd.f32 0.0, %v1290
        %v1292 = vpop.f32.mrf.mxu0
        %1293 = vdwg.mxu0
        %v1294 = vmul.f32 %v1291, 0.35355338
        %v1295 = vsel %vm858, %v1294, -inf
        %1296 = vmax.xlane.f32.xlu0 %v1295
        %v1297 = vpop.xlane.xlu0 %1296
        %v1298 = vsub.f32 %v1294, %v1297
        %v1299 = vmul.f32 %v1298, 1.442695
        %v1300 = vpow.pop %v1299
        %v1301 = vsel %vm858, %v1300, 0.0
        %1302 = vadd.xlane.f32.xlu0 %v1301
        %v1303 = vpop.xlane.xlu0 %1302
        %v1304 = vrcp.pop %v1303
        %v1305 = vmul.f32 %v1300, %v1304
        %v1306 = vpack.c.bf16 %v1305, %v1305
        %1307 = vrot.lane.b32.xlu0 %v1214, 88
        %v1308 = vpop.permute.xlu0 %1307
        %v1310 = vsel %vm858, %v1306, 0
        %v1313 = vsel %vm900, %v1308, 0
        %1315 = vmatpush.bf16.msra.mxu0 0
        %1316 = vmatpush.bf16.msra.mxu0 0
        %1317 = vmatpush.bf16.msra.mxu0 0
        %1318 = vmatpush.bf16.msra.mxu0 0
        %1319 = vmatpush.bf16.msra.mxu0 0
        %1320 = vmatpush.bf16.msra.mxu0 0
        %1321 = vmatpush.bf16.msra.mxu0 0
        %1322 = vmatpush.bf16.msra.mxu0 %v1313
        %1323 = vmatmul.bf16.gmra.mxu0 %v1310
        %v1324 = vpop.f32.mrf.mxu0
        %v1325 = vadd.f32 0.0, %v1324
        %v1326 = vpop.f32.mrf.mxu0
        %1327 = vdwg.mxu0
        %1329 = vrot.lane.b32.xlu0 %v1325, 8
        %v1330 = vpop.permute.xlu0 %1329
        %1332 = vst.msk [vmem:[#allocation2] sm:$0xff] %vm980, %v1330
        %1333 = vrot.lane.b32.xlu0 %v1213, 112
        %v1334 = vpop.permute.xlu0 %1333
        %1335 = vrot.lane.b32.xlu0 %v1214, 112
        %v1336 = vpop.permute.xlu0 %1335
        %v1338 = vsel %vm858, %v1334, 0
        %v1341 = vsel %vm858, %v1336, 0
        %1343 = vmatpush.bf16.xpose.msra.mxu0 0
        %1344 = vmatpush.bf16.xpose.msra.mxu0 0
        %1345 = vmatpush.bf16.xpose.msra.mxu0 0
        %1346 = vmatpush.bf16.xpose.msra.mxu0 0
        %1347 = vmatpush.bf16.xpose.msra.mxu0 0
        %1348 = vmatpush.bf16.xpose.msra.mxu0 0
        %1349 = vmatpush.bf16.xpose.msra.mxu0 0
        %1350 = vmatpush.bf16.xpose.msra.mxu0 %v1341
        %1351 = vmatmul.bf16.gmra.mxu0 %v1338
        %v1352 = vpop.f32.mrf.mxu0
        %v1353 = vadd.f32 0.0, %v1352
        %v1354 = vpop.f32.mrf.mxu0
        %1355 = vdwg.mxu0
        %v1356 = vmul.f32 %v1353, 0.35355338
        %v1357 = vsel %vm858, %v1356, -inf
        %1358 = vmax.xlane.f32.xlu0 %v1357
        %v1359 = vpop.xlane.xlu0 %1358
        %v1360 = vsub.f32 %v1356, %v1359
        %v1361 = vmul.f32 %v1360, 1.442695
        %v1362 = vpow.pop %v1361
        %v1363 = vsel %vm858, %v1362, 0.0
        %1364 = vadd.xlane.f32.xlu0 %v1363
        %v1365 = vpop.xlane.xlu0 %1364
        %v1366 = vrcp.pop %v1365
        %v1367 = vmul.f32 %v1362, %v1366
        %v1368 = vpack.c.bf16 %v1367, %v1367
        %1369 = vrot.lane.b32.xlu0 %v1214, 80
        %v1370 = vpop.permute.xlu0 %1369
        %v1372 = vsel %vm858, %v1368, 0
        %v1375 = vsel %vm900, %v1370, 0
        %1377 = vmatpush.bf16.msra.mxu0 0
        %1378 = vmatpush.bf16.msra.mxu0 0
        %1379 = vmatpush.bf16.msra.mxu0 0
        %1380 = vmatpush.bf16.msra.mxu0 0
        %1381 = vmatpush.bf16.msra.mxu0 0
        %1382 = vmatpush.bf16.msra.mxu0 0
        %1383 = vmatpush.bf16.msra.mxu0 0
        %1384 = vmatpush.bf16.msra.mxu0 %v1375
        %1385 = vmatmul.bf16.gmra.mxu0 %v1372
        %v1386 = vpop.f32.mrf.mxu0
        %v1387 = vadd.f32 0.0, %v1386
        %v1388 = vpop.f32.mrf.mxu0
        %1389 = vdwg.mxu0
        %1391 = vrot.lane.b32.xlu0 %v1387, 16
        %v1392 = vpop.permute.xlu0 %1391
        %1394 = vst.msk [vmem:[#allocation2] sm:$0xff] %vm1044, %v1392
        %1395 = vrot.lane.b32.xlu0 %v1213, 104
        %v1396 = vpop.permute.xlu0 %1395
        %1397 = vrot.lane.b32.xlu0 %v1214, 104
        %v1398 = vpop.permute.xlu0 %1397
        %v1400 = vsel %vm858, %v1396, 0
        %v1403 = vsel %vm858, %v1398, 0
        %1405 = vmatpush.bf16.xpose.msra.mxu0 0
        %1406 = vmatpush.bf16.xpose.msra.mxu0 0
        %1407 = vmatpush.bf16.xpose.msra.mxu0 0
        %1408 = vmatpush.bf16.xpose.msra.mxu0 0
        %1409 = vmatpush.bf16.xpose.msra.mxu0 0
        %1410 = vmatpush.bf16.xpose.msra.mxu0 0
        %1411 = vmatpush.bf16.xpose.msra.mxu0 0
        %1412 = vmatpush.bf16.xpose.msra.mxu0 %v1403
        %1413 = vmatmul.bf16.gmra.mxu0 %v1400
        %v1414 = vpop.f32.mrf.mxu0
        %v1415 = vadd.f32 0.0, %v1414
        %v1416 = vpop.f32.mrf.mxu0
        %1417 = vdwg.mxu0
        %v1418 = vmul.f32 %v1415, 0.35355338
        %v1419 = vsel %vm858, %v1418, -inf
        %1420 = vmax.xlane.f32.xlu0 %v1419
        %v1421 = vpop.xlane.xlu0 %1420
        %v1422 = vsub.f32 %v1418, %v1421
        %v1423 = vmul.f32 %v1422, 1.442695
        %v1424 = vpow.pop %v1423
        %v1425 = vsel %vm858, %v1424, 0.0
        %1426 = vadd.xlane.f32.xlu0 %v1425
        %v1427 = vpop.xlane.xlu0 %1426
        %v1428 = vrcp.pop %v1427
        %v1429 = vmul.f32 %v1424, %v1428
        %v1430 = vpack.c.bf16 %v1429, %v1429
        %1431 = vrot.lane.b32.xlu0 %v1214, 72
        %v1432 = vpop.permute.xlu0 %1431
        %v1434 = vsel %vm858, %v1430, 0
        %v1437 = vsel %vm900, %v1432, 0
        %1439 = vmatpush.bf16.msra.mxu0 0
        %1440 = vmatpush.bf16.msra.mxu0 0
        %1441 = vmatpush.bf16.msra.mxu0 0
        %1442 = vmatpush.bf16.msra.mxu0 0
        %1443 = vmatpush.bf16.msra.mxu0 0
        %1444 = vmatpush.bf16.msra.mxu0 0
        %1445 = vmatpush.bf16.msra.mxu0 0
        %1446 = vmatpush.bf16.msra.mxu0 %v1437
        %1447 = vmatmul.bf16.gmra.mxu0 %v1434
        %v1448 = vpop.f32.mrf.mxu0
        %v1449 = vadd.f32 0.0, %v1448
        %v1450 = vpop.f32.mrf.mxu0
        %1451 = vdwg.mxu0
        %1453 = vrot.lane.b32.xlu0 %v1449, 24
        %v1454 = vpop.permute.xlu0 %1453
        %1456 = vst.msk [vmem:[#allocation2] sm:$0xff] %vm1108, %v1454
        %v1457 = vld [vmem:[#allocation2] sm:$0xff]
        %v1458 = vpack.c.bf16 %v1457, %v1457
        %v1460 = vperm.slane %v768, 0
        %v1466 = vunpack.c.l.b16 %v764
        %v1467 = vunpack.c.l.b16 %v765
        %v1468 = vunpack.c.l.b16 %v766
        %v1469 = vunpack.c.l.b16 %v767
        %v1470 = vpack.c.b16 %v1467, %v1466
        %v1471 = vpack.c.b16 %v1469, %v1468
        %v1475 = vsel %vm805, %v1458, 0
        %1477 = vmatpush.bf16.msra.mxu0 0
        %1478 = vmatpush.bf16.msra.mxu0 0
        %1479 = vmatpush.bf16.msra.mxu0 0
        %1480 = vmatpush.bf16.msra.mxu0 0
        %1481 = vmatpush.bf16.msra.mxu0 0
        %1482 = vmatpush.bf16.msra.mxu0 0
        %1483 = vmatpush.bf16.msra.mxu0 %v1471
        %1484 = vmatpush.bf16.msra.mxu0 %v1470
        %1485 = vmatmul.bf16.gmra.mxu0 %v1475
        %v1486 = vpop.f32.mrf.mxu0
        %v1487 = vadd.f32 %v1460, %v1486
        %v1488 = vpop.f32.mrf.mxu0
        %1489 = vdwg.mxu0
        %v1490 = vadd.f32 %v1487, %v1180
        %v1491 = vsel %vm805, %v1490, 0.0
        %1492 = vadd.xlane.f32.xlu0 %v1491
        %v1493 = vpop.xlane.xlu0 %1492
        %v1494 = vmul.f32 %v1493, %v1153
        %v1495 = vsub.f32 %v1490, %v1494
        %v1496 = vmul.f32 %v1495, %v1495
        %v1497 = vsel %vm805, %v1496, 0.0
        %1498 = vadd.xlane.f32.xlu0 %v1497
        %v1499 = vpop.xlane.xlu0 %1498
        %v1500 = vmul.f32 %v1499, %v1153
        %v1501 = vadd.f32 %v1500, 1e-05
        %v1502 = vrsqrt.pop %v1501
        %v1503 = vmul.f32 %v1502, %v1501
        %v1504 = vmul.f32 %v1503, %v1502
        %v1505 = vmul.f32 0.5, %v1504
        %v1506 = vsub.f32 1.5, %v1505
        %v1507 = vmul.f32 %v1502, %v1506
        %vm1508 = vweird.f32 %v1501
        %vm1509 = vweird.f32 %v1502
        %vm1510 = vmor %vm1508, %vm1509
        %v1511 = vsel %vm1510, %v1502, %v1507
        %v1512 = vmul.f32 %v1495, %v1511
        %v1514 = vperm.slane %v785, 0
        %v1516 = vmul.f32 %v1512, %v1514
        %v1518 = vperm.slane %v786, 0
        %v1520 = vadd.f32 %v1516, %v1518
        %v1521 = vpack.c.bf16 %v1520, %v1520
        %v1523 = vperm.slane %v773, 0
        %v1529 = vunpack.c.l.b16 %v769
        %v1530 = vunpack.c.l.b16 %v770
        %v1531 = vunpack.c.l.b16 %v771
        %v1532 = vunpack.c.l.b16 %v772
        %v1533 = vpack.c.b16 %v1530, %v1529
        %v1534 = vpack.c.b16 %v1532, %v1531
        %v1538 = vsel %vm805, %v1521, 0
        %1540 = vmatpush.bf16.msra.mxu0 0
        %1541 = vmatpush.bf16.msra.mxu0 0
        %1542 = vmatpush.bf16.msra.mxu0 0
        %1543 = vmatpush.bf16.msra.mxu0 0
        %1544 = vmatpush.bf16.msra.mxu0 0
        %1545 = vmatpush.bf16.msra.mxu0 0
        %1546 = vmatpush.bf16.msra.mxu0 %v1534
        %1547 = vmatpush.bf16.msra.mxu0 %v1533
        %1548 = vmatmul.bf16.gmra.mxu0 %v1538
        %v1549 = vpop.f32.mrf.mxu0
        %v1550 = vadd.f32 %v1523, %v1549
        %v1551 = vpop.f32.mrf.mxu0
        %1552 = vdwg.mxu0
        %v1553 = vmax.f32 %v1550, 0.0
        %v1554 = vpack.c.bf16 %v1553, %v1553
        %v1556 = vperm.slane %v782, 0
        %v1566 = vunpack.c.l.b16 %v774
        %v1567 = vunpack.c.l.b16 %v775
        %v1568 = vunpack.c.l.b16 %v776
        %v1569 = vunpack.c.l.b16 %v777
        %v1570 = vunpack.c.l.b16 %v778
        %v1571 = vunpack.c.l.b16 %v779
        %v1572 = vunpack.c.l.b16 %v780
        %v1573 = vunpack.c.l.b16 %v781
        %v1574 = vpack.c.b16 %v1567, %v1566
        %v1575 = vpack.c.b16 %v1569, %v1568
        %v1576 = vpack.c.b16 %v1571, %v1570
        %v1577 = vpack.c.b16 %v1573, %v1572
        %vm1582 = vcmask 523264
        %v1584 = vsel %vm1582, %v1554, 0
        %1586 = vmatpush.bf16.msra.mxu0 0
        %1587 = vmatpush.bf16.msra.mxu0 0
        %1588 = vmatpush.bf16.msra.mxu0 0
        %1589 = vmatpush.bf16.msra.mxu0 0
        %1590 = vmatpush.bf16.msra.mxu0 %v1577
        %1591 = vmatpush.bf16.msra.mxu0 %v1576
        %1592 = vmatpush.bf16.msra.mxu0 %v1575
        %1593 = vmatpush.bf16.msra.mxu0 %v1574
        %1594 = vmatmul.bf16.gmra.mxu0 %v1584
        %v1595 = vpop.f32.mrf.mxu0
        %v1596 = vadd.f32 %v1556, %v1595
        %v1597 = vpop.f32.mrf.mxu0
        %1598 = vdwg.mxu0
        %v1599 = vadd.f32 %v1596, %v1520
        %v1600 = vsel %vm805, %v1599, 0.0
        %1601 = vadd.xlane.f32.xlu0 %v1600
        %v1602 = vpop.xlane.xlu0 %1601
        %v1603 = vmul.f32 %v1602, %v1153
        %v1604 = vsub.f32 %v1599, %v1603
        %v1605 = vmul.f32 %v1604, %v1604
        %v1606 = vsel %vm805, %v1605, 0.0
        %1607 = vadd.xlane.f32.xlu0 %v1606
        %v1608 = vpop.xlane.xlu0 %1607
        %v1609 = vmul.f32 %v1608, %v1153
        %v1610 = vadd.f32 %v1609, 1e-05
        %v1611 = vrsqrt.pop %v1610
        %v1612 = vmul.f32 %v1611, %v1610
        %v1613 = vmul.f32 %v1612, %v1611
        %v1614 = vmul.f32 0.5, %v1613
        %v1615 = vsub.f32 1.5, %v1614
        %v1616 = vmul.f32 %v1611, %v1615
        %vm1617 = vweird.f32 %v1610
        %vm1618 = vweird.f32 %v1611
        %vm1619 = vmor %vm1617, %vm1618
        %v1620 = vsel %vm1619, %v1611, %v1616
        %v1621 = vmul.f32 %v1604, %v1620
        %v1623 = vperm.slane %v787, 0
        %v1625 = vmul.f32 %v1621, %v1623
        %v1627 = vperm.slane %v788, 0
        %v1629 = vadd.f32 %v1625, %v1627
        %v1630 = vpack.c.bf16 %v1629, %v1629
        %v1632 = vsel %vm805, %v1630, 0
        %1634 = vmatpush.bf16.msra.mxu0 0
        %1635 = vmatpush.bf16.msra.mxu0 0
        %1636 = vmatpush.bf16.msra.mxu0 0
        %1637 = vmatpush.bf16.msra.mxu0 0
        %1638 = vmatpush.bf16.msra.mxu0 0
        %1639 = vmatpush.bf16.msra.mxu0 0
        %1640 = vmatpush.bf16.msra.mxu0 %v835
        %1641 = vmatpush.bf16.msra.mxu0 %v834
        %1642 = vmatmul.bf16.gmra.mxu0 %v1632
        %v1643 = vpop.f32.mrf.mxu0
        %v1644 = vadd.f32 %v824, %v1643
        %v1645 = vpop.f32.mrf.mxu0
        %1646 = vdwg.mxu0
        %v1647 = vpack.c.bf16 %v1644, %v1644
        %1649 = vrot.lane.b32.xlu0 %v1647, 96
        %v1650 = vpop.permute.xlu0 %1649
        %v1652 = vsel %vm858, %v1647, 0
        %v1655 = vsel %vm858, %v1650, 0
        %1657 = vmatpush.bf16.xpose.msra.mxu0 0
        %1658 = vmatpush.bf16.xpose.msra.mxu0 0
        %1659 = vmatpush.bf16.xpose.msra.mxu0 0
        %1660 = vmatpush.bf16.xpose.msra.mxu0 0
        %1661 = vmatpush.bf16.xpose.msra.mxu0 0
        %1662 = vmatpush.bf16.xpose.msra.mxu0 0
        %1663 = vmatpush.bf16.xpose.msra.mxu0 0
        %1664 = vmatpush.bf16.xpose.msra.mxu0 %v1655
        %1665 = vmatmul.bf16.gmra.mxu0 %v1652
        %v1666 = vpop.f32.mrf.mxu0
        %v1667 = vadd.f32 0.0, %v1666
        %v1668 = vpop.f32.mrf.mxu0
        %1669 = vdwg.mxu0
        %v1670 = vmul.f32 %v1667, 0.35355338
        %v1671 = vadd.f32 %v1670, %v880
        %v1672 = vsel %vm858, %v1671, -inf
        %1673 = vmax.xlane.f32.xlu0 %v1672
        %v1674 = vpop.xlane.xlu0 %1673
        %v1675 = vsub.f32 %v1671, %v1674
        %v1676 = vmul.f32 %v1675, 1.442695
        %v1677 = vpow.pop %v1676
        %v1678 = vsel %vm858, %v1677, 0.0
        %1679 = vadd.xlane.f32.xlu0 %v1678
        %v1680 = vpop.xlane.xlu0 %1679
        %v1681 = vrcp.pop %v1680
        %v1682 = vmul.f32 %v1677, %v1681
        %v1683 = vpack.c.bf16 %v1682, %v1682
        %1684 = vrot.lane.b32.xlu0 %v1647, 64
        %v1685 = vpop.permute.xlu0 %1684
        %v1687 = vsel %vm858, %v1683, 0
        %v1690 = vsel %vm900, %v1685, 0
        %1692 = vmatpush.bf16.msra.mxu0 0
        %1693 = vmatpush.bf16.msra.mxu0 0
        %1694 = vmatpush.bf16.msra.mxu0 0
        %1695 = vmatpush.bf16.msra.mxu0 0
        %1696 = vmatpush.bf16.msra.mxu0 0
        %1697 = vmatpush.bf16.msra.mxu0 0
        %1698 = vmatpush.bf16.msra.mxu0 0
        %1699 = vmatpush.bf16.msra.mxu0 %v1690
        %1700 = vmatmul.bf16.gmra.mxu0 %v1687
        %v1701 = vpop.f32.mrf.mxu0
        %v1702 = vadd.f32 0.0, %v1701
        %v1703 = vpop.f32.mrf.mxu0
        %1704 = vdwg.mxu0
        %1705 = vst.msk [vmem:[#allocation2] sm:$0xff] %vm858, %v1702
        %1706 = vrot.lane.b32.xlu0 %v1647, 120
        %v1707 = vpop.permute.xlu0 %1706
        %1708 = vrot.lane.b32.xlu0 %v1647, 88
        %v1709 = vpop.permute.xlu0 %1708
        %v1711 = vsel %vm858, %v1707, 0
        %v1714 = vsel %vm858, %v1709, 0
        %1716 = vmatpush.bf16.xpose.msra.mxu0 0
        %1717 = vmatpush.bf16.xpose.msra.mxu0 0
        %1718 = vmatpush.bf16.xpose.msra.mxu0 0
        %1719 = vmatpush.bf16.xpose.msra.mxu0 0
        %1720 = vmatpush.bf16.xpose.msra.mxu0 0
        %1721 = vmatpush.bf16.xpose.msra.mxu0 0
        %1722 = vmatpush.bf16.xpose.msra.mxu0 0
        %1723 = vmatpush.bf16.xpose.msra.mxu0 %v1714
        %1724 = vmatmul.bf16.gmra.mxu0 %v1711
        %v1725 = vpop.f32.mrf.mxu0
        %v1726 = vadd.f32 0.0, %v1725
        %v1727 = vpop.f32.mrf.mxu0
        %1728 = vdwg.mxu0
        %v1729 = vmul.f32 %v1726, 0.35355338
        %v1730 = vadd.f32 %v1729, %v880
        %v1731 = vsel %vm858, %v1730, -inf
        %1732 = vmax.xlane.f32.xlu0 %v1731
        %v1733 = vpop.xlane.xlu0 %1732
        %v1734 = vsub.f32 %v1730, %v1733
        %v1735 = vmul.f32 %v1734, 1.442695
        %v1736 = vpow.pop %v1735
        %v1737 = vsel %vm858, %v1736, 0.0
        %1738 = vadd.xlane.f32.xlu0 %v1737
        %v1739 = vpop.xlane.xlu0 %1738
        %v1740 = vrcp.pop %v1739
        %v1741 = vmul.f32 %v1736, %v1740
        %v1742 = vpack.c.bf16 %v1741, %v1741
        %1743 = vrot.lane.b32.xlu0 %v1647, 56
        %v1744 = vpop.permute.xlu0 %1743
        %v1746 = vsel %vm858, %v1742, 0
        %v1749 = vsel %vm900, %v1744, 0
        %1751 = vmatpush.bf16.msra.mxu0 0
        %1752 = vmatpush.bf16.msra.mxu0 0
        %1753 = vmatpush.bf16.msra.mxu0 0
        %1754 = vmatpush.bf16.msra.mxu0 0
        %1755 = vmatpush.bf16.msra.mxu0 0
        %1756 = vmatpush.bf16.msra.mxu0 0
        %1757 = vmatpush.bf16.msra.mxu0 0
        %1758 = vmatpush.bf16.msra.mxu0 %v1749
        %1759 = vmatmul.bf16.gmra.mxu0 %v1746
        %v1760 = vpop.f32.mrf.mxu0
        %v1761 = vadd.f32 0.0, %v1760
        %v1762 = vpop.f32.mrf.mxu0
        %1763 = vdwg.mxu0
        %1765 = vrot.lane.b32.xlu0 %v1761, 8
        %v1766 = vpop.permute.xlu0 %1765
        %1768 = vst.msk [vmem:[#allocation2] sm:$0xff] %vm980, %v1766
        %1769 = vrot.lane.b32.xlu0 %v1647, 112
        %v1770 = vpop.permute.xlu0 %1769
        %1771 = vrot.lane.b32.xlu0 %v1647, 80
        %v1772 = vpop.permute.xlu0 %1771
        %v1774 = vsel %vm858, %v1770, 0
        %v1777 = vsel %vm858, %v1772, 0
        %1779 = vmatpush.bf16.xpose.msra.mxu0 0
        %1780 = vmatpush.bf16.xpose.msra.mxu0 0
        %1781 = vmatpush.bf16.xpose.msra.mxu0 0
        %1782 = vmatpush.bf16.xpose.msra.mxu0 0
        %1783 = vmatpush.bf16.xpose.msra.mxu0 0
        %1784 = vmatpush.bf16.xpose.msra.mxu0 0
        %1785 = vmatpush.bf16.xpose.msra.mxu0 0
        %1786 = vmatpush.bf16.xpose.msra.mxu0 %v1777
        %1787 = vmatmul.bf16.gmra.mxu0 %v1774
        %v1788 = vpop.f32.mrf.mxu0
        %v1789 = vadd.f32 0.0, %v1788
        %v1790 = vpop.f32.mrf.mxu0
        %1791 = vdwg.mxu0
        %v1792 = vmul.f32 %v1789, 0.35355338
        %v1793 = vadd.f32 %v1792, %v880
        %v1794 = vsel %vm858, %v1793, -inf
        %1795 = vmax.xlane.f32.xlu0 %v1794
        %v1796 = vpop.xlane.xlu0 %1795
        %v1797 = vsub.f32 %v1793, %v1796
        %v1798 = vmul.f32 %v1797, 1.442695
        %v1799 = vpow.pop %v1798
        %v1800 = vsel %vm858, %v1799, 0.0
        %1801 = vadd.xlane.f32.xlu0 %v1800
        %v1802 = vpop.xlane.xlu0 %1801
        %v1803 = vrcp.pop %v1802
        %v1804 = vmul.f32 %v1799, %v1803
        %v1805 = vpack.c.bf16 %v1804, %v1804
        %1806 = vrot.lane.b32.xlu0 %v1647, 48
        %v1807 = vpop.permute.xlu0 %1806
        %v1809 = vsel %vm858, %v1805, 0
        %v1812 = vsel %vm900, %v1807, 0
        %1814 = vmatpush.bf16.msra.mxu0 0
        %1815 = vmatpush.bf16.msra.mxu0 0
        %1816 = vmatpush.bf16.msra.mxu0 0
        %1817 = vmatpush.bf16.msra.mxu0 0
        %1818 = vmatpush.bf16.msra.mxu0 0
        %1819 = vmatpush.bf16.msra.mxu0 0
        %1820 = vmatpush.bf16.msra.mxu0 0
        %1821 = vmatpush.bf16.msra.mxu0 %v1812
        %1822 = vmatmul.bf16.gmra.mxu0 %v1809
        %v1823 = vpop.f32.mrf.mxu0
        %v1824 = vadd.f32 0.0, %v1823
        %v1825 = vpop.f32.mrf.mxu0
        %1826 = vdwg.mxu0
        %1828 = vrot.lane.b32.xlu0 %v1824, 16
        %v1829 = vpop.permute.xlu0 %1828
        %1831 = vst.msk [vmem:[#allocation2] sm:$0xff] %vm1044, %v1829
        %1832 = vrot.lane.b32.xlu0 %v1647, 104
        %v1833 = vpop.permute.xlu0 %1832
        %1834 = vrot.lane.b32.xlu0 %v1647, 72
        %v1835 = vpop.permute.xlu0 %1834
        %v1837 = vsel %vm858, %v1833, 0
        %v1840 = vsel %vm858, %v1835, 0
        %1842 = vmatpush.bf16.xpose.msra.mxu0 0
        %1843 = vmatpush.bf16.xpose.msra.mxu0 0
        %1844 = vmatpush.bf16.xpose.msra.mxu0 0
        %1845 = vmatpush.bf16.xpose.msra.mxu0 0
        %1846 = vmatpush.bf16.xpose.msra.mxu0 0
        %1847 = vmatpush.bf16.xpose.msra.mxu0 0
        %1848 = vmatpush.bf16.xpose.msra.mxu0 0
        %1849 = vmatpush.bf16.xpose.msra.mxu0 %v1840
        %1850 = vmatmul.bf16.gmra.mxu0 %v1837
        %v1851 = vpop.f32.mrf.mxu0
        %v1852 = vadd.f32 0.0, %v1851
        %v1853 = vpop.f32.mrf.mxu0
        %1854 = vdwg.mxu0
        %v1855 = vmul.f32 %v1852, 0.35355338
        %v1856 = vadd.f32 %v1855, %v880
        %v1857 = vsel %vm858, %v1856, -inf
        %1858 = vmax.xlane.f32.xlu0 %v1857
        %v1859 = vpop.xlane.xlu0 %1858
        %v1860 = vsub.f32 %v1856, %v1859
        %v1861 = vmul.f32 %v1860, 1.442695
        %v1862 = vpow.pop %v1861
        %v1863 = vsel %vm858, %v1862, 0.0
        %1864 = vadd.xlane.f32.xlu0 %v1863
        %v1865 = vpop.xlane.xlu0 %1864
        %v1866 = vrcp.pop %v1865
        %v1867 = vmul.f32 %v1862, %v1866
        %v1868 = vpack.c.bf16 %v1867, %v1867
        %1869 = vrot.lane.b32.xlu0 %v1647, 40
        %v1870 = vpop.permute.xlu0 %1869
        %v1872 = vsel %vm858, %v1868, 0
        %v1875 = vsel %vm900, %v1870, 0
        %1877 = vmatpush.bf16.msra.mxu0 0
        %1878 = vmatpush.bf16.msra.mxu0 0
        %1879 = vmatpush.bf16.msra.mxu0 0
        %1880 = vmatpush.bf16.msra.mxu0 0
        %1881 = vmatpush.bf16.msra.mxu0 0
        %1882 = vmatpush.bf16.msra.mxu0 0
        %1883 = vmatpush.bf16.msra.mxu0 0
        %1884 = vmatpush.bf16.msra.mxu0 %v1875
        %1885 = vmatmul.bf16.gmra.mxu0 %v1872
        %v1886 = vpop.f32.mrf.mxu0
        %v1887 = vadd.f32 0.0, %v1886
        %v1888 = vpop.f32.mrf.mxu0
        %1889 = vdwg.mxu0
        %1891 = vrot.lane.b32.xlu0 %v1887, 24
        %v1892 = vpop.permute.xlu0 %1891
        %1894 = vst.msk [vmem:[#allocation2] sm:$0xff] %vm1108, %v1892
        %v1895 = vld [vmem:[#allocation2] sm:$0xff]
        %v1896 = vpack.c.bf16 %v1895, %v1895
        %v1898 = vsel %vm805, %v1896, 0
        %1900 = vmatpush.bf16.msra.mxu0 0
        %1901 = vmatpush.bf16.msra.mxu0 0
        %1902 = vmatpush.bf16.msra.mxu0 0
        %1903 = vmatpush.bf16.msra.mxu0 0
        %1904 = vmatpush.bf16.msra.mxu0 0
        %1905 = vmatpush.bf16.msra.mxu0 0
        %1906 = vmatpush.bf16.msra.mxu0 %v1124
        %1907 = vmatpush.bf16.msra.mxu0 %v1123
        %1908 = vmatmul.bf16.gmra.mxu0 %v1898
        %v1909 = vpop.f32.mrf.mxu0
        %v1910 = vadd.f32 %v1113, %v1909
        %v1911 = vpop.f32.mrf.mxu0
        %1912 = vdwg.mxu0
        %v1913 = vadd.f32 %v1910, %v1629
        %v1914 = vsel %vm805, %v1913, 0.0
        %1915 = vadd.xlane.f32.xlu0 %v1914
        %v1916 = vpop.xlane.xlu0 %1915
        %v1917 = vmul.f32 %v1916, %v1153
        %v1918 = vsub.f32 %v1913, %v1917
        %v1919 = vmul.f32 %v1918, %v1918
        %v1920 = vsel %vm805, %v1919, 0.0
        %1921 = vadd.xlane.f32.xlu0 %v1920
        %v1922 = vpop.xlane.xlu0 %1921
        %v1923 = vmul.f32 %v1922, %v1153
        %v1924 = vadd.f32 %v1923, 1e-05
        %v1925 = vrsqrt.pop %v1924
        %v1926 = vmul.f32 %v1925, %v1924
        %v1927 = vmul.f32 %v1926, %v1925
        %v1928 = vmul.f32 0.5, %v1927
        %v1929 = vsub.f32 1.5, %v1928
        %v1930 = vmul.f32 %v1925, %v1929
        %vm1931 = vweird.f32 %v1924
        %vm1932 = vweird.f32 %v1925
        %vm1933 = vmor %vm1931, %vm1932
        %v1934 = vsel %vm1933, %v1925, %v1930
        %v1935 = vmul.f32 %v1918, %v1934
        %v1936 = vmul.f32 %v1935, %v1174
        %v1937 = vadd.f32 %v1936, %v1178
        %v1938 = vpack.c.bf16 %v1937, %v1937
        %v1940 = vsel %vm805, %v1938, 0
        %1942 = vmatpush.bf16.msra.mxu0 0
        %1943 = vmatpush.bf16.msra.mxu0 0
        %1944 = vmatpush.bf16.msra.mxu0 0
        %1945 = vmatpush.bf16.msra.mxu0 0
        %1946 = vmatpush.bf16.msra.mxu0 0
        %1947 = vmatpush.bf16.msra.mxu0 0
        %1948 = vmatpush.bf16.msra.mxu0 %v1194
        %1949 = vmatpush.bf16.msra.mxu0 %v1193
        %1950 = vmatmul.bf16.gmra.mxu0 %v1940
        %v1951 = vpop.f32.mrf.mxu0
        %v1952 = vadd.f32 %v1183, %v1951
        %v1953 = vpop.f32.mrf.mxu0
        %1954 = vdwg.mxu0
        %v1955 = vpack.c.bf16 %v1952, %v1952
        %v1957 = vsel %vm858, %v1955, 0
        %1959 = vmatpush.bf16.xpose.msra.mxu0 0
        %1960 = vmatpush.bf16.xpose.msra.mxu0 0
        %1961 = vmatpush.bf16.xpose.msra.mxu0 0
        %1962 = vmatpush.bf16.xpose.msra.mxu0 0
        %1963 = vmatpush.bf16.xpose.msra.mxu0 0
        %1964 = vmatpush.bf16.xpose.msra.mxu0 0
        %1965 = vmatpush.bf16.xpose.msra.mxu0 0
        %1966 = vmatpush.bf16.xpose.msra.mxu0 %v1219
        %1967 = vmatmul.bf16.gmra.mxu0 %v1957
        %v1968 = vpop.f32.mrf.mxu0
        %v1969 = vadd.f32 0.0, %v1968
        %v1970 = vpop.f32.mrf.mxu0
        %1971 = vdwg.mxu0
        %v1972 = vmul.f32 %v1969, 0.35355338
        %v1973 = vsel %vm858, %v1972, -inf
        %1974 = vmax.xlane.f32.xlu0 %v1973
        %v1975 = vpop.xlane.xlu0 %1974
        %v1976 = vsub.f32 %v1972, %v1975
        %v1977 = vmul.f32 %v1976, 1.442695
        %v1978 = vpow.pop %v1977
        %v1979 = vsel %vm858, %v1978, 0.0
        %1980 = vadd.xlane.f32.xlu0 %v1979
        %v1981 = vpop.xlane.xlu0 %1980
        %v1982 = vrcp.pop %v1981
        %v1983 = vmul.f32 %v1978, %v1982
        %v1984 = vpack.c.bf16 %v1983, %v1983
        %v1986 = vsel %vm858, %v1984, 0
        %1988 = vmatpush.bf16.msra.mxu0 0
        %1989 = vmatpush.bf16.msra.mxu0 0
        %1990 = vmatpush.bf16.msra.mxu0 0
        %1991 = vmatpush.bf16.msra.mxu0 0
        %1992 = vmatpush.bf16.msra.mxu0 0
        %1993 = vmatpush.bf16.msra.mxu0 0
        %1994 = vmatpush.bf16.msra.mxu0 0
        %1995 = vmatpush.bf16.msra.mxu0 %v1254
        %1996 = vmatmul.bf16.gmra.mxu0 %v1986
        %v1997 = vpop.f32.mrf.mxu0
        %v1998 = vadd.f32 0.0, %v1997
        %v1999 = vpop.f32.mrf.mxu0
        %2000 = vdwg.mxu0
        %2001 = vst.msk [vmem:[#allocation2] sm:$0xff] %vm858, %v1998
        %2003 = vrot.lane.b32.xlu0 %v1955, 120
        %v2004 = vpop.permute.xlu0 %2003
        %v2006 = vsel %vm858, %v2004, 0
        %2008 = vmatpush.bf16.xpose.msra.mxu0 0
        %2009 = vmatpush.bf16.xpose.msra.mxu0 0
        %2010 = vmatpush.bf16.xpose.msra.mxu0 0
        %2011 = vmatpush.bf16.xpose.msra.mxu0 0
        %2012 = vmatpush.bf16.xpose.msra.mxu0 0
        %2013 = vmatpush.bf16.xpose.msra.mxu0 0
        %2014 = vmatpush.bf16.xpose.msra.mxu0 0
        %2015 = vmatpush.bf16.xpose.msra.mxu0 %v1279
        %2016 = vmatmul.bf16.gmra.mxu0 %v2006
        %v2017 = vpop.f32.mrf.mxu0
        %v2018 = vadd.f32 0.0, %v2017
        %v2019 = vpop.f32.mrf.mxu0
        %2020 = vdwg.mxu0
        %v2021 = vmul.f32 %v2018, 0.35355338
        %v2022 = vsel %vm858, %v2021, -inf
        %2023 = vmax.xlane.f32.xlu0 %v2022
        %v2024 = vpop.xlane.xlu0 %2023
        %v2025 = vsub.f32 %v2021, %v2024
        %v2026 = vmul.f32 %v2025, 1.442695
        %v2027 = vpow.pop %v2026
        %v2028 = vsel %vm858, %v2027, 0.0
        %2029 = vadd.xlane.f32.xlu0 %v2028
        %v2030 = vpop.xlane.xlu0 %2029
        %v2031 = vrcp.pop %v2030
        %v2032 = vmul.f32 %v2027, %v2031
        %v2033 = vpack.c.bf16 %v2032, %v2032
        %v2035 = vsel %vm858, %v2033, 0
        %2037 = vmatpush.bf16.msra.mxu0 0
        %2038 = vmatpush.bf16.msra.mxu0 0
        %2039 = vmatpush.bf16.msra.mxu0 0
        %2040 = vmatpush.bf16.msra.mxu0 0
        %2041 = vmatpush.bf16.msra.mxu0 0
        %2042 = vmatpush.bf16.msra.mxu0 0
        %2043 = vmatpush.bf16.msra.mxu0 0
        %2044 = vmatpush.bf16.msra.mxu0 %v1313
        %2045 = vmatmul.bf16.gmra.mxu0 %v2035
        %v2046 = vpop.f32.mrf.mxu0
        %v2047 = vadd.f32 0.0, %v2046
        %v2048 = vpop.f32.mrf.mxu0
        %2049 = vdwg.mxu0
        %2051 = vrot.lane.b32.xlu0 %v2047, 8
        %v2052 = vpop.permute.xlu0 %2051
        %2054 = vst.msk [vmem:[#allocation2] sm:$0xff] %vm980, %v2052
        %2055 = vrot.lane.b32.xlu0 %v1955, 112
        %v2056 = vpop.permute.xlu0 %2055
        %v2058 = vsel %vm858, %v2056, 0
        %2060 = vmatpush.bf16.xpose.msra.mxu0 0
        %2061 = vmatpush.bf16.xpose.msra.mxu0 0
        %2062 = vmatpush.bf16.xpose.msra.mxu0 0
        %2063 = vmatpush.bf16.xpose.msra.mxu0 0
        %2064 = vmatpush.bf16.xpose.msra.mxu0 0
        %2065 = vmatpush.bf16.xpose.msra.mxu0 0
        %2066 = vmatpush.bf16.xpose.msra.mxu0 0
        %2067 = vmatpush.bf16.xpose.msra.mxu0 %v1341
        %2068 = vmatmul.bf16.gmra.mxu0 %v2058
        %v2069 = vpop.f32.mrf.mxu0
        %v2070 = vadd.f32 0.0, %v2069
        %v2071 = vpop.f32.mrf.mxu0
        %2072 = vdwg.mxu0
        %v2073 = vmul.f32 %v2070, 0.35355338
        %v2074 = vsel %vm858, %v2073, -inf
        %2075 = vmax.xlane.f32.xlu0 %v2074
        %v2076 = vpop.xlane.xlu0 %2075
        %v2077 = vsub.f32 %v2073, %v2076
        %v2078 = vmul.f32 %v2077, 1.442695
        %v2079 = vpow.pop %v2078
        %v2080 = vsel %vm858, %v2079, 0.0
        %2081 = vadd.xlane.f32.xlu0 %v2080
        %v2082 = vpop.xlane.xlu0 %2081
        %v2083 = vrcp.pop %v2082
        %v2084 = vmul.f32 %v2079, %v2083
        %v2085 = vpack.c.bf16 %v2084, %v2084
        %v2087 = vsel %vm858, %v2085, 0
        %2089 = vmatpush.bf16.msra.mxu0 0
        %2090 = vmatpush.bf16.msra.mxu0 0
        %2091 = vmatpush.bf16.msra.mxu0 0
        %2092 = vmatpush.bf16.msra.mxu0 0
        %2093 = vmatpush.bf16.msra.mxu0 0
        %2094 = vmatpush.bf16.msra.mxu0 0
        %2095 = vmatpush.bf16.msra.mxu0 0
        %2096 = vmatpush.bf16.msra.mxu0 %v1375
        %2097 = vmatmul.bf16.gmra.mxu0 %v2087
        %v2098 = vpop.f32.mrf.mxu0
        %v2099 = vadd.f32 0.0, %v2098
        %v2100 = vpop.f32.mrf.mxu0
        %2101 = vdwg.mxu0
        %2103 = vrot.lane.b32.xlu0 %v2099, 16
        %v2104 = vpop.permute.xlu0 %2103
        %2106 = vst.msk [vmem:[#allocation2] sm:$0xff] %vm1044, %v2104
        %2107 = vrot.lane.b32.xlu0 %v1955, 104
        %v2108 = vpop.permute.xlu0 %2107
        %v2110 = vsel %vm858, %v2108, 0
        %2112 = vmatpush.bf16.xpose.msra.mxu0 0
        %2113 = vmatpush.bf16.xpose.msra.mxu0 0
        %2114 = vmatpush.bf16.xpose.msra.mxu0 0
        %2115 = vmatpush.bf16.xpose.msra.mxu0 0
        %2116 = vmatpush.bf16.xpose.msra.mxu0 0
        %2117 = vmatpush.bf16.xpose.msra.mxu0 0
        %2118 = vmatpush.bf16.xpose.msra.mxu0 0
        %2119 = vmatpush.bf16.xpose.msra.mxu0 %v1403
        %2120 = vmatmul.bf16.gmra.mxu0 %v2110
        %v2121 = vpop.f32.mrf.mxu0
        %v2122 = vadd.f32 0.0, %v2121
        %v2123 = vpop.f32.mrf.mxu0
        %2124 = vdwg.mxu0
        %v2125 = vmul.f32 %v2122, 0.35355338
        %v2126 = vsel %vm858, %v2125, -inf
        %2127 = vmax.xlane.f32.xlu0 %v2126
        %v2128 = vpop.xlane.xlu0 %2127
        %v2129 = vsub.f32 %v2125, %v2128
        %v2130 = vmul.f32 %v2129, 1.442695
        %v2131 = vpow.pop %v2130
        %v2132 = vsel %vm858, %v2131, 0.0
        %2133 = vadd.xlane.f32.xlu0 %v2132
        %v2134 = vpop.xlane.xlu0 %2133
        %v2135 = vrcp.pop %v2134
        %v2136 = vmul.f32 %v2131, %v2135
        %v2137 = vpack.c.bf16 %v2136, %v2136
        %v2139 = vsel %vm858, %v2137, 0
        %2141 = vmatpush.bf16.msra.mxu0 0
        %2142 = vmatpush.bf16.msra.mxu0 0
        %2143 = vmatpush.bf16.msra.mxu0 0
        %2144 = vmatpush.bf16.msra.mxu0 0
        %2145 = vmatpush.bf16.msra.mxu0 0
        %2146 = vmatpush.bf16.msra.mxu0 0
        %2147 = vmatpush.bf16.msra.mxu0 0
        %2148 = vmatpush.bf16.msra.mxu0 %v1437
        %2149 = vmatmul.bf16.gmra.mxu0 %v2139
        %v2150 = vpop.f32.mrf.mxu0
        %v2151 = vadd.f32 0.0, %v2150
        %v2152 = vpop.f32.mrf.mxu0
        %2153 = vdwg.mxu0
        %2155 = vrot.lane.b32.xlu0 %v2151, 24
        %v2156 = vpop.permute.xlu0 %2155
        %2158 = vst.msk [vmem:[#allocation2] sm:$0xff] %vm1108, %v2156
        %v2159 = vld [vmem:[#allocation2] sm:$0xff]
        %v2160 = vpack.c.bf16 %v2159, %v2159
        %v2162 = vsel %vm805, %v2160, 0
        %2164 = vmatpush.bf16.msra.mxu0 0
        %2165 = vmatpush.bf16.msra.mxu0 0
        %2166 = vmatpush.bf16.msra.mxu0 0
        %2167 = vmatpush.bf16.msra.mxu0 0
        %2168 = vmatpush.bf16.msra.mxu0 0
        %2169 = vmatpush.bf16.msra.mxu0 0
        %2170 = vmatpush.bf16.msra.mxu0 %v1471
        %2171 = vmatpush.bf16.msra.mxu0 %v1470
        %2172 = vmatmul.bf16.gmra.mxu0 %v2162
        %v2173 = vpop.f32.mrf.mxu0
        %v2174 = vadd.f32 %v1460, %v2173
        %v2175 = vpop.f32.mrf.mxu0
        %2176 = vdwg.mxu0
        %v2177 = vadd.f32 %v2174, %v1937
        %v2178 = vsel %vm805, %v2177, 0.0
        %2179 = vadd.xlane.f32.xlu0 %v2178
        %v2180 = vpop.xlane.xlu0 %2179
        %v2181 = vmul.f32 %v2180, %v1153
        %v2182 = vsub.f32 %v2177, %v2181
        %v2183 = vmul.f32 %v2182, %v2182
        %v2184 = vsel %vm805, %v2183, 0.0
        %2185 = vadd.xlane.f32.xlu0 %v2184
        %v2186 = vpop.xlane.xlu0 %2185
        %v2187 = vmul.f32 %v2186, %v1153
        %v2188 = vadd.f32 %v2187, 1e-05
        %v2189 = vrsqrt.pop %v2188
        %v2190 = vmul.f32 %v2189, %v2188
        %v2191 = vmul.f32 %v2190, %v2189
        %v2192 = vmul.f32 0.5, %v2191
        %v2193 = vsub.f32 1.5, %v2192
        %v2194 = vmul.f32 %v2189, %v2193
        %vm2195 = vweird.f32 %v2188
        %vm2196 = vweird.f32 %v2189
        %vm2197 = vmor %vm2195, %vm2196
        %v2198 = vsel %vm2197, %v2189, %v2194
        %v2199 = vmul.f32 %v2182, %v2198
        %v2200 = vmul.f32 %v2199, %v1514
        %v2201 = vadd.f32 %v2200, %v1518
        %v2202 = vpack.c.bf16 %v2201, %v2201
        %v2204 = vsel %vm805, %v2202, 0
        %2206 = vmatpush.bf16.msra.mxu0 0
        %2207 = vmatpush.bf16.msra.mxu0 0
        %2208 = vmatpush.bf16.msra.mxu0 0
        %2209 = vmatpush.bf16.msra.mxu0 0
        %2210 = vmatpush.bf16.msra.mxu0 0
        %2211 = vmatpush.bf16.msra.mxu0 0
        %2212 = vmatpush.bf16.msra.mxu0 %v1534
        %2213 = vmatpush.bf16.msra.mxu0 %v1533
        %2214 = vmatmul.bf16.gmra.mxu0 %v2204
        %v2215 = vpop.f32.mrf.mxu0
        %v2216 = vadd.f32 %v1523, %v2215
        %v2217 = vpop.f32.mrf.mxu0
        %2218 = vdwg.mxu0
        %v2219 = vmax.f32 %v2216, 0.0
        %v2220 = vpack.c.bf16 %v2219, %v2219
        %v2222 = vsel %vm1582, %v2220, 0
        %2224 = vmatpush.bf16.msra.mxu0 0
        %2225 = vmatpush.bf16.msra.mxu0 0
        %2226 = vmatpush.bf16.msra.mxu0 0
        %2227 = vmatpush.bf16.msra.mxu0 0
        %2228 = vmatpush.bf16.msra.mxu0 %v1577
        %2229 = vmatpush.bf16.msra.mxu0 %v1576
        %2230 = vmatpush.bf16.msra.mxu0 %v1575
        %2231 = vmatpush.bf16.msra.mxu0 %v1574
        %2232 = vmatmul.bf16.gmra.mxu0 %v2222
        %v2233 = vpop.f32.mrf.mxu0
        %v2234 = vadd.f32 %v1556, %v2233
        %v2235 = vpop.f32.mrf.mxu0
        %2236 = vdwg.mxu0
        %v2237 = vadd.f32 %v2234, %v2201
        %v2238 = vsel %vm805, %v2237, 0.0
        %2239 = vadd.xlane.f32.xlu0 %v2238
        %v2240 = vpop.xlane.xlu0 %2239
        %v2241 = vmul.f32 %v2240, %v1153
        %v2242 = vsub.f32 %v2237, %v2241
        %v2243 = vmul.f32 %v2242, %v2242
        %v2244 = vsel %vm805, %v2243, 0.0
        %2245 = vadd.xlane.f32.xlu0 %v2244
        %v2246 = vpop.xlane.xlu0 %2245
        %v2247 = vmul.f32 %v2246, %v1153
        %v2248 = vadd.f32 %v2247, 1e-05
        %v2249 = vrsqrt.pop %v2248
        %v2250 = vmul.f32 %v2249, %v2248
        %v2251 = vmul.f32 %v2250, %v2249
        %v2252 = vmul.f32 0.5, %v2251
        %v2253 = vsub.f32 1.5, %v2252
        %v2254 = vmul.f32 %v2249, %v2253
        %vm2255 = vweird.f32 %v2248
        %vm2256 = vweird.f32 %v2249
        %vm2257 = vmor %vm2255, %vm2256
        %v2258 = vsel %vm2257, %v2249, %v2254
        %v2259 = vmul.f32 %v2242, %v2258
        %v2260 = vmul.f32 %v2259, %v1623
        %v2261 = vadd.f32 %v2260, %v1627
        %2262 = vst.msk [vmem:[%s725] sm:$0xff] %vm805, %v2261
        %s2263 = sand.u32 %s543, 1
        %s2264 = scalar_lea.sflag [#allocation4], %s2263
        %s2265 = sand.u32 %s543, 1
        %s2266 = smul.addr %s2265, 8
        %s2267 = scalar_lea.vmem [#allocation3], %s2266
        // Predicated region
        $region113: #{encoder_forward.1} parent=111 // pred_check
          %p2268 = pneg %p553
        $region114: #{encoder_forward.1} parent=111 // pred_check_branch
          %2270 = sbr.rel (%p2268) target = $region116
        $region115: #{encoder_forward.1} parent=111 // pred_region
          %2272 = vsyncadd %s2264, 0
          %s2273 = smul.addr %s37, 8
          %s2274 = scalar_lea.hbm %s23, %s2273
          %s2276 = sshll.u32 %s2267, 4
          %s2277 = int_to_ptr.vmem [resolvable:$true] %s2276
          %s2278 = sshll.u32 %s2274, 4
          %s2279 = int_to_ptr.hbm [resolvable:$true] %s2278
          %2281 = dma.vmem_to_hbm [thread:$0]  %s2277, 128, %s2279, %s2264
        $region116: #{encoder_forward.1} parent=111 // pred_fallthru
          _
      $region112: #{encoder_forward.1} parent=5 // pred_fallthru
        _
      %p2282 = scmp.le.s32.totalorder 2, %s32
      // Predicated region
      $region117: #{encoder_forward.1} parent=5 // pred_check
        %p2283 = pneg %p2282
      $region118: #{encoder_forward.1} parent=5 // pred_check_branch
        %2285 = sbr.rel (%p2283) target = $region120
      $region119: #{encoder_forward.1} parent=5 // pred_region
        %s2286 = ssub.s32 %s32, 2
        // Predicated region
        $region121: #{encoder_forward.1} parent=119 // pred_check
          %p2287 = pneg %p559
        $region122: #{encoder_forward.1} parent=119 // pred_check_branch
          %2289 = sbr.rel (%p2287) target = $region124
        $region123: #{encoder_forward.1} parent=119 // pred_region
          %s2290 = sand.u32 %s544, 1
          %s2291 = scalar_lea.sflag [#allocation4], %s2290
          %s2292 = sand.u32 %s544, 1
          %s2293 = smul.addr %s2292, 8
          %s2294 = scalar_lea.vmem [#allocation3], %s2293
          %2296 = dma.done %s2291, 128
        $region124: #{encoder_forward.1} parent=119 // pred_fallthru
          _
      $region120: #{encoder_forward.1} parent=5 // pred_fallthru
        _
    $region6: #{encoder_forward.1} parent=1 // loop_footer
      %s36 = sadd.s32 1, %s32
    $region7: #{encoder_forward.1} parent=1 // loop_footer_branch
      %31 = sbr.rel target = $region3
    $region8: #{encoder_forward.1} parent=1 // loop_exit
      _
    %2297 = vsyncpa [#allocation4], 1
    %s2298 = scalar_lea.sflag [#allocation4], 1
    %2299 = vsyncpa %s2298, 1

</llo_original>
